<compile_context>
chip_gen: v7x
topology: tpu7x:2x2x1
jax: 0.10.0
libtpu: 0.0.40
codegen_flags: <defaults>
</compile_context>

<pallas_src>
import functools
import math

import jax
import jax.numpy as jnp
from jax.experimental import pallas as pl
from jax.experimental.pallas import tpu as pltpu

# ----------------------------- configuration --------------------------------
BATCH = 1024       # demo batch: grid=(4,) -> >=2 pipelined steps per v7x TC,
                   # and 4 steps amortize per-step overhead on v5e/v6e.
CHAN = 1
SPATIAL = 16       # 16x16 "mini-MNIST" (lane-aligned flattened dim)
D = CHAN * SPATIAL * SPATIAL          # 256  (flattened image dim)
HALF = D // 2                         # 128  (coupling split)
HIDDEN = 128                          # hidden width of coupling MLPs
K_LAYERS = 4                          # number of affine coupling layers
TB = 256                              # batch tile (fills MXU rows on v6e/v7x)
LP_LANES = 128                        # lane-dense log-prob output width

DATA_MEAN = 0.1307                    # from data_info['data_mean']
DATA_STD = 0.3081                     # from data_info['data_std']
INV_STD = 1.0 / DATA_STD
LOGDET0 = -D * math.log(DATA_STD)                     # normalization log|det|
LOG_PZ_CONST = -0.5 * D * math.log(2.0 * math.pi)     # base-dist constant


def _hidden_tanh_in_bf16() -> bool:
    """Use bf16 for the hidden-layer tanh only where the EUP supports bf16
    (v6e / v7x).  v5e and older keep all elementwise math in f32."""
    try:
        kind = jax.devices()[0].device_kind.lower()
    except Exception:
        return False
    return ("v6" in kind) or ("v7" in kind) or ("7x" in kind)


HIDDEN_TANH_BF16 = _hidden_tanh_in_bf16()


# ------------------------------- kernel -------------------------------------
def flow_kernel(x_ref, w1_ref, b1_ref, wst_ref, bst_ref, z_ref, lp_ref,
                *, hidden_bf16):
    """One batch tile of the full flow forward pass.

    x_ref   : (TB, D)    f32   flattened images
    w1_ref  : (K, HALF, HIDDEN)      bf16  first-layer weights of coupling MLPs
    b1_ref  : (K, 1, HIDDEN)         f32
    wst_ref : (K, HIDDEN, 2*HALF)    bf16  fused scale|shift head weights
    bst_ref : (K, 1, 2*HALF)         f32
    z_ref   : (TB, D)         f32   latent output
    lp_ref  : (TB, LP_LANES)  f32   log-prob broadcast across lanes
    """
    x = x_ref[...]                                            # (TB, D) f32

    # --- preprocessing: (x - mean) / std ; log|det| = -D * log(std) ---------
    left = (x[:, :HALF] - DATA_MEAN) * INV_STD                # (TB, HALF)
    right = (x[:, HALF:] - DATA_MEAN) * INV_STD               # (TB, HALF)
    logdet = jnp.full((x.shape[0], 1), LOGDET0, jnp.float32)

    # --- K affine coupling layers (statically unrolled) ---------------------
    for k in range(K_LAYERS):
        xa, xb = (left, right) if k % 2 == 0 else (right, left)

        # hidden layer: bf16 matmul, f32 accumulate
        pre = (jnp.dot(xa.astype(jnp.bfloat16), w1_ref[k],
                       preferred_element_type=jnp.float32)
               + b1_ref[k])                                   # (TB, HIDDEN) f32
        if hidden_bf16:
            # v6e/v7x: bf16 EUP tanh; feeds the bf16 MXU matmul directly.
            h_mm = jnp.tanh(pre.astype(jnp.bfloat16))         # (TB, HIDDEN) bf16
        else:
            # v5e: no bf16 VPU/EUP -> f32 tanh, cast only for the MXU.
            h_mm = jnp.tanh(pre).astype(jnp.bfloat16)

        # fused scale+shift head: one N=2*HALF matmul
        st = (jnp.dot(h_mm, wst_ref[k],
                      preferred_element_type=jnp.float32)
              + bst_ref[k])                                   # (TB, 2*HALF) f32
        s = jnp.tanh(st[:, :HALF])                            # f32 (log-det path)
        t = st[:, HALF:]                                      # (TB, HALF)

        xb_new = xb * jnp.exp(s) + t
        logdet = logdet + jnp.sum(s, axis=-1, keepdims=True)

        if k % 2 == 0:
            right = xb_new
        else:
            left = xb_new

    # --- write latent (two lane-aligned half stores, no concat) -------------
    z_ref[:, :HALF] = left.astype(z_ref.dtype)
    z_ref[:, HALF:] = right.astype(z_ref.dtype)

    # --- base-distribution log-prob (standard normal) -----------------------
    sq = (jnp.sum(left * left, axis=-1, keepdims=True)
          + jnp.sum(right * right, axis=-1, keepdims=True))
    lp = -0.5 * sq + LOG_PZ_CONST + logdet                    # (TB, 1)
    lp_ref[...] = jnp.broadcast_to(lp, lp_ref.shape).astype(lp_ref.dtype)


# ------------------------------- wrapper -------------------------------------
def _const_weight_spec(shape):
    """Resident weight/bias block: constant index_map, single-buffered."""
    index_map = lambda i: (0,) * len(shape)
    try:
        return pl.BlockSpec(shape, index_map, pipeline_mode=pl.Buffered(1))
    except Exception:
        # Older jax without pipeline_mode support: default double-buffering
        # (costs ~0.4 MiB extra VMEM, still trivial).
        return pl.BlockSpec(shape, index_map)


@jax.jit
def mnist_flow_forward(x_nchw, params):
    """x_nchw: (B, C, H, W) float32.  Returns (z: (B, D), log_prob: (B,))."""
    b = x_nchw.shape[0]
    x_flat = x_nchw.reshape(b, -1).astype(jnp.float32)        # (B, D) row-major

    # Pad batch to a multiple of the tile so every grid step is full.
    b_pad = ((b + TB - 1) // TB) * TB
    if b_pad != b:
        x_flat = jnp.pad(x_flat, ((0, b_pad - b), (0, 0)))

    w1, b1, wst, bst = params
    kernel = functools.partial(flow_kernel, hidden_bf16=HIDDEN_TANH_BF16)

    z, lp = pl.pallas_call(
        kernel,
        out_shape=(
            jax.ShapeDtypeStruct((b_pad, D), jnp.float32),
            jax.ShapeDtypeStruct((b_pad, LP_LANES), jnp.float32),
        ),
        grid_spec=pltpu.PrefetchScalarGridSpec(
            num_scalar_prefetch=0,
            grid=(b_pad // TB,),
            in_specs=[
                pl.BlockSpec((TB, D), lambda i: (i, 0)),
                _const_weight_spec((K_LAYERS, HALF, HIDDEN)),
                _const_weight_spec((K_LAYERS, 1, HIDDEN)),
                _const_weight_spec((K_LAYERS, HIDDEN, 2 * HALF)),
                _const_weight_spec((K_LAYERS, 1, 2 * HALF)),
            ],
            out_specs=[
                pl.BlockSpec((TB, D), lambda i: (i, 0)),
                pl.BlockSpec((TB, LP_LANES), lambda i: (i, 0)),
            ],
        ),
        compiler_params=pltpu.CompilerParams(
            dimension_semantics=("parallel",),
        ),
    )(x_flat, w1, b1, wst, bst)

    return z[:b], lp[:b, 0]


# ----------------------- pure-JAX reference (for checking) -------------------
def mnist_flow_reference(x_nchw, params, hidden_bf16):
    w1, b1, wst, bst = params
    b = x_nchw.shape[0]
    x = x_nchw.reshape(b, -1).astype(jnp.float32)
    left = (x[:, :HALF] - DATA_MEAN) * INV_STD
    right = (x[:, HALF:] - DATA_MEAN) * INV_STD
    logdet = jnp.full((b,), LOGDET0, jnp.float32)
    for k in range(K_LAYERS):
        xa, xb = (left, right) if k % 2 == 0 else (right, left)
        pre = jnp.dot(xa.astype(jnp.bfloat16), w1[k],
                      preferred_element_type=jnp.float32) + b1[k]
        if hidden_bf16:
            h_mm = jnp.tanh(pre.astype(jnp.bfloat16))
        else:
            h_mm = jnp.tanh(pre).astype(jnp.bfloat16)
        st = jnp.dot(h_mm, wst[k], preferred_element_type=jnp.float32) + bst[k]
        s = jnp.tanh(st[:, :HALF])
        t = st[:, HALF:]
        xb_new = xb * jnp.exp(s) + t
        logdet = logdet + jnp.sum(s, axis=-1)
        if k % 2 == 0:
            right = xb_new
        else:
            left = xb_new
    z = jnp.concatenate([left, right], axis=-1)
    log_pz = -0.5 * jnp.sum(z * z, axis=-1) + LOG_PZ_CONST
    return z, log_pz + logdet


# ------------------------ deterministic parameter init -----------------------
def init_params(key):
    ks = jax.random.split(key, 6)
    scale1 = 0.1 / jnp.sqrt(HALF)
    scale2 = 0.1 / jnp.sqrt(HIDDEN)
    w1 = scale1 * jax.random.normal(ks[0], (K_LAYERS, HALF, HIDDEN), jnp.float32)
    b1 = 0.01 * jax.random.normal(ks[1], (K_LAYERS, 1, HIDDEN), jnp.float32)
    ws = scale2 * jax.random.normal(ks[2], (K_LAYERS, HIDDEN, HALF), jnp.float32)
    bs = 0.01 * jax.random.normal(ks[3], (K_LAYERS, 1, HALF), jnp.float32)
    wt = scale2 * jax.random.normal(ks[4], (K_LAYERS, HIDDEN, HALF), jnp.float32)
    bt = 0.01 * jax.random.normal(ks[5], (K_LAYERS, 1, HALF), jnp.float32)
    # Fuse scale/shift heads; cast matmul weights to bf16 (f32 accumulate).
    wst = jnp.concatenate([ws, wt], axis=-1).astype(jnp.bfloat16)  # (K,H,2*HALF)
    bst = jnp.concatenate([bs, bt], axis=-1)                       # (K,1,2*HALF)
    return (w1.astype(jnp.bfloat16), b1, wst, bst)


if __name__ == "__main__":
    key = jax.random.PRNGKey(0)
    k_x, k_p = jax.random.split(key)

    # Deterministic example input (MNIST-like pixels in [0, 1]), NCHW layout.
    x = jax.random.uniform(k_x, (BATCH, CHAN, SPATIAL, SPATIAL), jnp.float32)
    params = init_params(k_p)

    z, log_prob = mnist_flow_forward(x, params)
    jax.block_until_ready((z, log_prob))

    z_ref, lp_ref = mnist_flow_reference(x, params, HIDDEN_TANH_BF16)
    assert jnp.allclose(z, z_ref, rtol=3e-2, atol=3e-2), "latent mismatch"
    assert jnp.allclose(log_prob, lp_ref, rtol=3e-2, atol=5e-1), "log_prob mismatch"

    print("KERNEL_OK")
</pallas_src>

<mosaic_0001>
module attributes {stable_mosaic.version = 11 : i64} {
  func.func @flow_kernel(%arg0: i32, %arg1: memref<256x256xf32, #tpu.memory_space<vmem>>, %arg2: memref<4x128x128xbf16, #tpu.memory_space<vmem>>, %arg3: memref<4x1x128xf32, #tpu.memory_space<vmem>>, %arg4: memref<4x128x256xbf16, #tpu.memory_space<vmem>>, %arg5: memref<4x1x256xf32, #tpu.memory_space<vmem>>, %arg6: memref<256x256xf32, #tpu.memory_space<vmem>>, %arg7: memref<256x128xf32, #tpu.memory_space<vmem>>) attributes {dimension_semantics = [#tpu.dimension_semantics<parallel>], iteration_bounds = array<i64: 4>, scalar_prefetch = 0 : i64, scratch_operands = 0 : i64, tpu.core_type = #tpu.core_type<tc>, window_params = [{transform_indices = @transform_0, window_bounds = array<i64: 256, 256>}, {pipeline_mode = #tpu.pipeline_mode<synchronous>, transform_indices = @transform_1, window_bounds = array<i64: 4, 128, 128>}, {pipeline_mode = #tpu.pipeline_mode<synchronous>, transform_indices = @transform_2, window_bounds = array<i64: 4, 1, 128>}, {pipeline_mode = #tpu.pipeline_mode<synchronous>, transform_indices = @transform_3, window_bounds = array<i64: 4, 128, 256>}, {pipeline_mode = #tpu.pipeline_mode<synchronous>, transform_indices = @transform_4, window_bounds = array<i64: 4, 1, 256>}, {transform_indices = @transform_5, window_bounds = array<i64: 256, 256>}, {transform_indices = @transform_6, window_bounds = array<i64: 256, 128>}]} {
    %c0 = arith.constant 0 : index
    %c0_0 = arith.constant 0 : index
    %0 = vector.load %arg1[%c0, %c0_0] : memref<256x256xf32, #tpu.memory_space<vmem>>, vector<256x256xf32>
    %1 = vector.extract_strided_slice %0 {offsets = [0, 0], sizes = [256, 128], strides = [1, 1]} : vector<256x256xf32> to vector<256x128xf32>
    %cst = arith.constant 1.307000e-01 : f32
    %2 = vector.broadcast %cst : f32 to vector<256x128xf32>
    %3 = arith.subf %1, %2 : vector<256x128xf32>
    %cst_1 = arith.constant 3.24569941 : f32
    %4 = vector.broadcast %cst_1 : f32 to vector<256x128xf32>
    %5 = arith.mulf %3, %4 : vector<256x128xf32>
    %6 = vector.extract_strided_slice %0 {offsets = [0, 128], sizes = [256, 128], strides = [1, 1]} : vector<256x256xf32> to vector<256x128xf32>
    %cst_2 = arith.constant 1.307000e-01 : f32
    %7 = vector.broadcast %cst_2 : f32 to vector<256x128xf32>
    %8 = arith.subf %6, %7 : vector<256x128xf32>
    %cst_3 = arith.constant 3.24569941 : f32
    %9 = vector.broadcast %cst_3 : f32 to vector<256x128xf32>
    %10 = arith.mulf %8, %9 : vector<256x128xf32>
    %cst_4 = arith.constant 301.396698 : f32
    %11 = vector.broadcast %cst_4 : f32 to vector<256x1xf32>
    %12 = arith.truncf %5 : vector<256x128xf32> to vector<256x128xbf16>
    %c0_5 = arith.constant 0 : index
    %c0_6 = arith.constant 0 : index
    %c0_7 = arith.constant 0 : index
    %13 = vector.load %arg2[%c0_5, %c0_6, %c0_7] : memref<4x128x128xbf16, #tpu.memory_space<vmem>>, vector<1x128x128xbf16>
    %14 = vector.shape_cast %13 : vector<1x128x128xbf16> to vector<128x128xbf16>
    %cst_8 = arith.constant dense<0.000000e+00> : vector<256x128xf32>
    %15 = tpu.matmul %12, %14, %cst_8 {dimension_numbers = #tpu.dot_dimension_numbers<[1], [0], [0], [1], [0, 0, 1, 1], [], []>} : vector<256x128xbf16>, vector<128x128xbf16>, vector<256x128xf32> -> vector<256x128xf32>
    %c0_9 = arith.constant 0 : index
    %c0_10 = arith.constant 0 : index
    %c0_11 = arith.constant 0 : index
    %16 = vector.load %arg3[%c0_9, %c0_10, %c0_11] : memref<4x1x128xf32, #tpu.memory_space<vmem>>, vector<1x1x128xf32>
    %17 = vector.shape_cast %16 : vector<1x1x128xf32> to vector<1x128xf32>
    %18 = vector.broadcast %17 : vector<1x128xf32> to vector<256x128xf32>
    %19 = arith.addf %15, %18 : vector<256x128xf32>
    %20 = math.tanh %19 : vector<256x128xf32>
    %21 = arith.truncf %20 : vector<256x128xf32> to vector<256x128xbf16>
    %c0_12 = arith.constant 0 : index
    %c0_13 = arith.constant 0 : index
    %c0_14 = arith.constant 0 : index
    %22 = vector.load %arg4[%c0_12, %c0_13, %c0_14] : memref<4x128x256xbf16, #tpu.memory_space<vmem>>, vector<1x128x256xbf16>
    %23 = vector.shape_cast %22 : vector<1x128x256xbf16> to vector<128x256xbf16>
    %cst_15 = arith.constant dense<0.000000e+00> : vector<256x256xf32>
    %24 = tpu.matmul %21, %23, %cst_15 {dimension_numbers = #tpu.dot_dimension_numbers<[1], [0], [0], [1], [0, 0, 1, 1], [], []>} : vector<256x128xbf16>, vector<128x256xbf16>, vector<256x256xf32> -> vector<256x256xf32>
    %c0_16 = arith.constant 0 : index
    %c0_17 = arith.constant 0 : index
    %c0_18 = arith.constant 0 : index
    %25 = vector.load %arg5[%c0_16, %c0_17, %c0_18] : memref<4x1x256xf32, #tpu.memory_space<vmem>>, vector<1x1x256xf32>
    %26 = vector.shape_cast %25 : vector<1x1x256xf32> to vector<1x256xf32>
    %27 = vector.broadcast %26 : vector<1x256xf32> to vector<256x256xf32>
    %28 = arith.addf %24, %27 : vector<256x256xf32>
    %29 = vector.extract_strided_slice %28 {offsets = [0, 0], sizes = [256, 128], strides = [1, 1]} : vector<256x256xf32> to vector<256x128xf32>
    %30 = math.tanh %29 : vector<256x128xf32>
    %31 = vector.extract_strided_slice %28 {offsets = [0, 128], sizes = [256, 128], strides = [1, 1]} : vector<256x256xf32> to vector<256x128xf32>
    %32 = math.exp %30 : vector<256x128xf32>
    %33 = arith.mulf %10, %32 : vector<256x128xf32>
    %34 = arith.addf %33, %31 : vector<256x128xf32>
    %cst_19 = arith.constant dense<0.000000e+00> : vector<256xf32>
    %35 = vector.multi_reduction <add>, %30, %cst_19 [1] : vector<256x128xf32> to vector<256xf32>
    %36 = vector.shape_cast %35 : vector<256xf32> to vector<256x1xf32>
    %37 = arith.addf %11, %36 : vector<256x1xf32>
    %38 = arith.truncf %34 : vector<256x128xf32> to vector<256x128xbf16>
    %c1 = arith.constant 1 : index
    %c0_20 = arith.constant 0 : index
    %c0_21 = arith.constant 0 : index
    %39 = vector.load %arg2[%c1, %c0_20, %c0_21] : memref<4x128x128xbf16, #tpu.memory_space<vmem>>, vector<1x128x128xbf16>
    %40 = vector.shape_cast %39 : vector<1x128x128xbf16> to vector<128x128xbf16>
    %cst_22 = arith.constant dense<0.000000e+00> : vector<256x128xf32>
    %41 = tpu.matmul %38, %40, %cst_22 {dimension_numbers = #tpu.dot_dimension_numbers<[1], [0], [0], [1], [0, 0, 1, 1], [], []>} : vector<256x128xbf16>, vector<128x128xbf16>, vector<256x128xf32> -> vector<256x128xf32>
    %c1_23 = arith.constant 1 : index
    %c0_24 = arith.constant 0 : index
    %c0_25 = arith.constant 0 : index
    %42 = vector.load %arg3[%c1_23, %c0_24, %c0_25] : memref<4x1x128xf32, #tpu.memory_space<vmem>>, vector<1x1x128xf32>
    %43 = vector.shape_cast %42 : vector<1x1x128xf32> to vector<1x128xf32>
    %44 = vector.broadcast %43 : vector<1x128xf32> to vector<256x128xf32>
    %45 = arith.addf %41, %44 : vector<256x128xf32>
    %46 = math.tanh %45 : vector<256x128xf32>
    %47 = arith.truncf %46 : vector<256x128xf32> to vector<256x128xbf16>
    %c1_26 = arith.constant 1 : index
    %c0_27 = arith.constant 0 : index
    %c0_28 = arith.constant 0 : index
    %48 = vector.load %arg4[%c1_26, %c0_27, %c0_28] : memref<4x128x256xbf16, #tpu.memory_space<vmem>>, vector<1x128x256xbf16>
    %49 = vector.shape_cast %48 : vector<1x128x256xbf16> to vector<128x256xbf16>
    %cst_29 = arith.constant dense<0.000000e+00> : vector<256x256xf32>
    %50 = tpu.matmul %47, %49, %cst_29 {dimension_numbers = #tpu.dot_dimension_numbers<[1], [0], [0], [1], [0, 0, 1, 1], [], []>} : vector<256x128xbf16>, vector<128x256xbf16>, vector<256x256xf32> -> vector<256x256xf32>
    %c1_30 = arith.constant 1 : index
    %c0_31 = arith.constant 0 : index
    %c0_32 = arith.constant 0 : index
    %51 = vector.load %arg5[%c1_30, %c0_31, %c0_32] : memref<4x1x256xf32, #tpu.memory_space<vmem>>, vector<1x1x256xf32>
    %52 = vector.shape_cast %51 : vector<1x1x256xf32> to vector<1x256xf32>
    %53 = vector.broadcast %52 : vector<1x256xf32> to vector<256x256xf32>
    %54 = arith.addf %50, %53 : vector<256x256xf32>
    %55 = vector.extract_strided_slice %54 {offsets = [0, 0], sizes = [256, 128], strides = [1, 1]} : vector<256x256xf32> to vector<256x128xf32>
    %56 = math.tanh %55 : vector<256x128xf32>
    %57 = vector.extract_strided_slice %54 {offsets = [0, 128], sizes = [256, 128], strides = [1, 1]} : vector<256x256xf32> to vector<256x128xf32>
    %58 = math.exp %56 : vector<256x128xf32>
    %59 = arith.mulf %5, %58 : vector<256x128xf32>
    %60 = arith.addf %59, %57 : vector<256x128xf32>
    %cst_33 = arith.constant dense<0.000000e+00> : vector<256xf32>
    %61 = vector.multi_reduction <add>, %56, %cst_33 [1] : vector<256x128xf32> to vector<256xf32>
    %62 = vector.shape_cast %61 : vector<256xf32> to vector<256x1xf32>
    %63 = arith.addf %37, %62 : vector<256x1xf32>
    %64 = arith.truncf %60 : vector<256x128xf32> to vector<256x128xbf16>
    %c2 = arith.constant 2 : index
    %c0_34 = arith.constant 0 : index
    %c0_35 = arith.constant 0 : index
    %65 = vector.load %arg2[%c2, %c0_34, %c0_35] : memref<4x128x128xbf16, #tpu.memory_space<vmem>>, vector<1x128x128xbf16>
    %66 = vector.shape_cast %65 : vector<1x128x128xbf16> to vector<128x128xbf16>
    %cst_36 = arith.constant dense<0.000000e+00> : vector<256x128xf32>
    %67 = tpu.matmul %64, %66, %cst_36 {dimension_numbers = #tpu.dot_dimension_numbers<[1], [0], [0], [1], [0, 0, 1, 1], [], []>} : vector<256x128xbf16>, vector<128x128xbf16>, vector<256x128xf32> -> vector<256x128xf32>
    %c2_37 = arith.constant 2 : index
    %c0_38 = arith.constant 0 : index
    %c0_39 = arith.constant 0 : index
    %68 = vector.load %arg3[%c2_37, %c0_38, %c0_39] : memref<4x1x128xf32, #tpu.memory_space<vmem>>, vector<1x1x128xf32>
    %69 = vector.shape_cast %68 : vector<1x1x128xf32> to vector<1x128xf32>
    %70 = vector.broadcast %69 : vector<1x128xf32> to vector<256x128xf32>
    %71 = arith.addf %67, %70 : vector<256x128xf32>
    %72 = math.tanh %71 : vector<256x128xf32>
    %73 = arith.truncf %72 : vector<256x128xf32> to vector<256x128xbf16>
    %c2_40 = arith.constant 2 : index
    %c0_41 = arith.constant 0 : index
    %c0_42 = arith.constant 0 : index
    %74 = vector.load %arg4[%c2_40, %c0_41, %c0_42] : memref<4x128x256xbf16, #tpu.memory_space<vmem>>, vector<1x128x256xbf16>
    %75 = vector.shape_cast %74 : vector<1x128x256xbf16> to vector<128x256xbf16>
    %cst_43 = arith.constant dense<0.000000e+00> : vector<256x256xf32>
    %76 = tpu.matmul %73, %75, %cst_43 {dimension_numbers = #tpu.dot_dimension_numbers<[1], [0], [0], [1], [0, 0, 1, 1], [], []>} : vector<256x128xbf16>, vector<128x256xbf16>, vector<256x256xf32> -> vector<256x256xf32>
    %c2_44 = arith.constant 2 : index
    %c0_45 = arith.constant 0 : index
    %c0_46 = arith.constant 0 : index
    %77 = vector.load %arg5[%c2_44, %c0_45, %c0_46] : memref<4x1x256xf32, #tpu.memory_space<vmem>>, vector<1x1x256xf32>
    %78 = vector.shape_cast %77 : vector<1x1x256xf32> to vector<1x256xf32>
    %79 = vector.broadcast %78 : vector<1x256xf32> to vector<256x256xf32>
    %80 = arith.addf %76, %79 : vector<256x256xf32>
    %81 = vector.extract_strided_slice %80 {offsets = [0, 0], sizes = [256, 128], strides = [1, 1]} : vector<256x256xf32> to vector<256x128xf32>
    %82 = math.tanh %81 : vector<256x128xf32>
    %83 = vector.extract_strided_slice %80 {offsets = [0, 128], sizes = [256, 128], strides = [1, 1]} : vector<256x256xf32> to vector<256x128xf32>
    %84 = math.exp %82 : vector<256x128xf32>
    %85 = arith.mulf %34, %84 : vector<256x128xf32>
    %86 = arith.addf %85, %83 : vector<256x128xf32>
    %cst_47 = arith.constant dense<0.000000e+00> : vector<256xf32>
    %87 = vector.multi_reduction <add>, %82, %cst_47 [1] : vector<256x128xf32> to vector<256xf32>
    %88 = vector.shape_cast %87 : vector<256xf32> to vector<256x1xf32>
    %89 = arith.addf %63, %88 : vector<256x1xf32>
    %90 = arith.truncf %86 : vector<256x128xf32> to vector<256x128xbf16>
    %c3 = arith.constant 3 : index
    %c0_48 = arith.constant 0 : index
    %c0_49 = arith.constant 0 : index
    %91 = vector.load %arg2[%c3, %c0_48, %c0_49] : memref<4x128x128xbf16, #tpu.memory_space<vmem>>, vector<1x128x128xbf16>
    %92 = vector.shape_cast %91 : vector<1x128x128xbf16> to vector<128x128xbf16>
    %cst_50 = arith.constant dense<0.000000e+00> : vector<256x128xf32>
    %93 = tpu.matmul %90, %92, %cst_50 {dimension_numbers = #tpu.dot_dimension_numbers<[1], [0], [0], [1], [0, 0, 1, 1], [], []>} : vector<256x128xbf16>, vector<128x128xbf16>, vector<256x128xf32> -> vector<256x128xf32>
    %c3_51 = arith.constant 3 : index
    %c0_52 = arith.constant 0 : index
    %c0_53 = arith.constant 0 : index
    %94 = vector.load %arg3[%c3_51, %c0_52, %c0_53] : memref<4x1x128xf32, #tpu.memory_space<vmem>>, vector<1x1x128xf32>
    %95 = vector.shape_cast %94 : vector<1x1x128xf32> to vector<1x128xf32>
    %96 = vector.broadcast %95 : vector<1x128xf32> to vector<256x128xf32>
    %97 = arith.addf %93, %96 : vector<256x128xf32>
    %98 = math.tanh %97 : vector<256x128xf32>
    %99 = arith.truncf %98 : vector<256x128xf32> to vector<256x128xbf16>
    %c3_54 = arith.constant 3 : index
    %c0_55 = arith.constant 0 : index
    %c0_56 = arith.constant 0 : index
    %100 = vector.load %arg4[%c3_54, %c0_55, %c0_56] : memref<4x128x256xbf16, #tpu.memory_space<vmem>>, vector<1x128x256xbf16>
    %101 = vector.shape_cast %100 : vector<1x128x256xbf16> to vector<128x256xbf16>
    %cst_57 = arith.constant dense<0.000000e+00> : vector<256x256xf32>
    %102 = tpu.matmul %99, %101, %cst_57 {dimension_numbers = #tpu.dot_dimension_numbers<[1], [0], [0], [1], [0, 0, 1, 1], [], []>} : vector<256x128xbf16>, vector<128x256xbf16>, vector<256x256xf32> -> vector<256x256xf32>
    %c3_58 = arith.constant 3 : index
    %c0_59 = arith.constant 0 : index
    %c0_60 = arith.constant 0 : index
    %103 = vector.load %arg5[%c3_58, %c0_59, %c0_60] : memref<4x1x256xf32, #tpu.memory_space<vmem>>, vector<1x1x256xf32>
    %104 = vector.shape_cast %103 : vector<1x1x256xf32> to vector<1x256xf32>
    %105 = vector.broadcast %104 : vector<1x256xf32> to vector<256x256xf32>
    %106 = arith.addf %102, %105 : vector<256x256xf32>
    %107 = vector.extract_strided_slice %106 {offsets = [0, 0], sizes = [256, 128], strides = [1, 1]} : vector<256x256xf32> to vector<256x128xf32>
    %108 = math.tanh %107 : vector<256x128xf32>
    %109 = vector.extract_strided_slice %106 {offsets = [0, 128], sizes = [256, 128], strides = [1, 1]} : vector<256x256xf32> to vector<256x128xf32>
    %110 = math.exp %108 : vector<256x128xf32>
    %111 = arith.mulf %60, %110 : vector<256x128xf32>
    %112 = arith.addf %111, %109 : vector<256x128xf32>
    %cst_61 = arith.constant dense<0.000000e+00> : vector<256xf32>
    %113 = vector.multi_reduction <add>, %108, %cst_61 [1] : vector<256x128xf32> to vector<256xf32>
    %114 = vector.shape_cast %113 : vector<256xf32> to vector<256x1xf32>
    %115 = arith.addf %89, %114 : vector<256x1xf32>
    %c0_62 = arith.constant 0 : index
    %c0_63 = arith.constant 0 : index
    %116 = vector.load %arg6[%c0_62, %c0_63] : memref<256x256xf32, #tpu.memory_space<vmem>>, vector<256x128xf32>
    tpu.vector_store %arg6[%c0_62, %c0_63], %112 {strides = array<i32>} : memref<256x256xf32, #tpu.memory_space<vmem>>, vector<256x128xf32>,
    %c0_64 = arith.constant 0 : index
    %c128 = arith.constant 128 : index
    %117 = vector.load %arg6[%c0_64, %c128] : memref<256x256xf32, #tpu.memory_space<vmem>>, vector<256x128xf32>
    tpu.vector_store %arg6[%c0_64, %c128], %86 {strides = array<i32>} : memref<256x256xf32, #tpu.memory_space<vmem>>, vector<256x128xf32>,
    %118 = arith.mulf %112, %112 : vector<256x128xf32>
    %cst_65 = arith.constant dense<0.000000e+00> : vector<256xf32>
    %119 = vector.multi_reduction <add>, %118, %cst_65 [1] : vector<256x128xf32> to vector<256xf32>
    %120 = vector.shape_cast %119 : vector<256xf32> to vector<256x1xf32>
    %121 = arith.mulf %86, %86 : vector<256x128xf32>
    %cst_66 = arith.constant dense<0.000000e+00> : vector<256xf32>
    %122 = vector.multi_reduction <add>, %121, %cst_66 [1] : vector<256x128xf32> to vector<256xf32>
    %123 = vector.shape_cast %122 : vector<256xf32> to vector<256x1xf32>
    %124 = arith.addf %120, %123 : vector<256x1xf32>
    %cst_67 = arith.constant -5.000000e-01 : f32
    %125 = vector.broadcast %cst_67 : f32 to vector<256x1xf32>
    %126 = arith.mulf %125, %124 : vector<256x1xf32>
    %cst_68 = arith.constant -235.24826 : f32
    %127 = vector.broadcast %cst_68 : f32 to vector<256x1xf32>
    %128 = arith.addf %126, %127 : vector<256x1xf32>
    %129 = arith.addf %128, %115 : vector<256x1xf32>
    %130 = vector.shape_cast %129 : vector<256x1xf32> to vector<256x1xf32>
    %131 = vector.broadcast %130 : vector<256x1xf32> to vector<256x128xf32>
    %c0_69 = arith.constant 0 : index
    %c0_70 = arith.constant 0 : index
    %132 = vector.load %arg7[%c0_69, %c0_70] : memref<256x128xf32, #tpu.memory_space<vmem>>, vector<256x128xf32>
    tpu.vector_store %arg7[%c0_69, %c0_70], %131 {strides = array<i32>} : memref<256x128xf32, #tpu.memory_space<vmem>>, vector<256x128xf32>,
    return
  }
  func.func @transform_0(%arg0: i32) -> (i32, i32) {
    %c0_i32 = arith.constant 0 : i32
    %c0_i32_0 = arith.constant 0 : i32
    return %arg0, %c0_i32 : i32, i32
  }
  func.func @transform_1(%arg0: i32) -> (i32, i32, i32) {
    %c0_i32 = arith.constant 0 : i32
    %c0_i32_0 = arith.constant 0 : i32
    %c0_i32_1 = arith.constant 0 : i32
    %c0_i32_2 = arith.constant 0 : i32
    return %c0_i32, %c0_i32_0, %c0_i32_1 : i32, i32, i32
  }
  func.func @transform_2(%arg0: i32) -> (i32, i32, i32) {
    %c0_i32 = arith.constant 0 : i32
    %c0_i32_0 = arith.constant 0 : i32
    %c0_i32_1 = arith.constant 0 : i32
    %c0_i32_2 = arith.constant 0 : i32
    return %c0_i32, %c0_i32_0, %c0_i32_1 : i32, i32, i32
  }
  func.func @transform_3(%arg0: i32) -> (i32, i32, i32) {
    %c0_i32 = arith.constant 0 : i32
    %c0_i32_0 = arith.constant 0 : i32
    %c0_i32_1 = arith.constant 0 : i32
    %c0_i32_2 = arith.constant 0 : i32
    return %c0_i32, %c0_i32_0, %c0_i32_1 : i32, i32, i32
  }
  func.func @transform_4(%arg0: i32) -> (i32, i32, i32) {
    %c0_i32 = arith.constant 0 : i32
    %c0_i32_0 = arith.constant 0 : i32
    %c0_i32_1 = arith.constant 0 : i32
    %c0_i32_2 = arith.constant 0 : i32
    return %c0_i32, %c0_i32_0, %c0_i32_1 : i32, i32, i32
  }
  func.func @transform_5(%arg0: i32) -> (i32, i32) {
    %c0_i32 = arith.constant 0 : i32
    %c0_i32_0 = arith.constant 0 : i32
    return %arg0, %c0_i32 : i32, i32
  }
  func.func @transform_6(%arg0: i32) -> (i32, i32) {
    %c0_i32 = arith.constant 0 : i32
    %c0_i32_0 = arith.constant 0 : i32
    return %arg0, %c0_i32 : i32, i32
  }
}

</mosaic_0001>

<llo_original>
// kernel: mnist_flow_forward.1
$region0: #{mnist_flow_forward.1}
  #allocation0 [shape = 'u32[]', space=smem, size = 0x4, offset = 0x4, fixed_abs, tag = 'smem constant byte address 0x4 - core index']
  #allocation1 [shape = 'u32[144,128]{1,0:T(1,128)}', space=vmem, size = 0x12000, scoped, tag = 'internal scratch']
  %s0 = inlined_call_operand.vmem [shape: f32[1024,256], index: 0, kind: input, shape index: {}]
  %s1 = inlined_call_operand.vmem [shape: bf16[4,128,128], index: 1, kind: input, shape index: {}]
  %s2 = inlined_call_operand.vmem [shape: f32[4,1,128], index: 2, kind: input, shape index: {}]
  %s3 = inlined_call_operand.vmem [shape: bf16[4,128,256], index: 3, kind: input, shape index: {}]
  %s4 = inlined_call_operand.vmem [shape: f32[4,1,256], index: 4, kind: input, shape index: {}]
  %s5 = inlined_call_operand.hbm [shape: f32[1024,256], index: 5, kind: output, shape index: {0}]
  %s6 = inlined_call_operand.vmem [shape: f32[1024,128], index: 6, kind: output, shape index: {1}]
  %7 = xla_tuple %s5, %s6
  %s8 = sld [smem:[#allocation0]]
  $region61: #{mnist_flow_forward.1} parent=0
    _
  %s10 = ssub.s32 1, %s8
  %s11 = scalar_select 0, %s10, %s8
  $region1: #{mnist_flow_forward.1} parent=0
    #allocation2 [shape = 'u8[524288]{0}', space=vmem, size = 0x80000, scoped, tag = 'output window, operand 0']
    #allocation3 [shape = 's32[2]{0}', space=sflag, size = 0x8, scoped, tag = 'scoped memory for mnist_flow_forward.1']
    %12 = vsyncpa [#allocation3], 0
    %s13 = scalar_lea.sflag [#allocation3], 1
    %14 = vsyncpa %s13, 0
    loop: start=0, step=1, limit=6
    $region2: #{mnist_flow_forward.1} parent=1 // loop_pre_header
      _
    $region3: #{mnist_flow_forward.1} parent=1 // loop_header
      %s16 = sphi 0, %s20
      %p17 = scmp.ge.s32.totalorder %s16, 6
      %s26 = sphi 0, %s28
      %s29 = sphi 0, %s26
      %s30 = sphi 0, %s29
      %s46 = sphi 0, %s30
      %s50 = sphi 0, %s50
      %s52 = sphi 0, %s50
      %s53 = sphi 0, %s52
      %s67 = sphi 0, %s53
      %s71 = sphi 0, %s71
      %s73 = sphi 0, %s71
      %s74 = sphi 0, %s73
      %s88 = sphi 0, %s74
      %s92 = sphi 0, %s92
      %s94 = sphi 0, %s92
      %s95 = sphi 0, %s94
      %s109 = sphi 0, %s95
      %s113 = sphi 0, %s113
      %s115 = sphi 0, %s113
      %s116 = sphi 0, %s115
      %s130 = sphi 0, %s116
      %s136 = sphi 0, %s138
      %s139 = sphi 0, %s136
      %s140 = sphi 0, %s139
      %s156 = sphi 0, %s140
      %s162 = sphi 0, %s164
      %s165 = sphi 0, %s162
      %s166 = sphi 0, %s165
      %s182 = sphi 0, %s166
    $region4: #{mnist_flow_forward.1} parent=1 // loop_header_branch
      %19 = sbr.rel (%p17) target = $region8
    $region5: #{mnist_flow_forward.1} parent=1 // loop_body
      %s21 = ssub.s32 %s16, 1
      %s22 = ssub.s32 %s16, 2
      %s23 = sadd.s32 %s16, 1
      %s24 = ssub.s32 %s16, %s23
      %p25 = scmp.eq.s32.totalorder %s24, 0
      %s27 = sadd.s32 %s26, 1
      %s28 = scalar_select %p25, %s26, %s27
      %p31 = pneg %p25
      %p32 = scmp.eq.s32.totalorder %s16, 3
      %p33 = por %p31, %p32
      %p34 = scmp.ne.s32.totalorder %s26, %s29
      %p35 = scmp.eq.s32.totalorder %s16, 0
      %p36 = por %p34, %p35
      %p37 = scmp.ne.s32.totalorder %s26, %s29
      %p38 = scmp.eq.s32.totalorder %s21, 3
      %p39 = por %p37, %p38
      %p40 = scmp.ne.s32.totalorder %s29, %s30
      %p41 = scmp.eq.s32.totalorder %s21, 0
      %p42 = por %p40, %p41
      %p43 = scmp.ne.s32.totalorder %s29, %s30
      %p44 = scmp.eq.s32.totalorder %s22, 3
      %p45 = por %p43, %p44
      %p47 = scmp.ne.s32.totalorder %s30, %s46
      %p48 = scmp.eq.s32.totalorder %s22, 0
      %p49 = por %p47, %p48
      %s51 = sadd.s32 %s50, 1
      %p54 = scmp.eq.s32.totalorder %s16, 3
      %p55 = scmp.ne.s32.totalorder %s50, %s52
      %p56 = scmp.eq.s32.totalorder %s16, 0
      %p57 = por %p55, %p56
      %p58 = scmp.ne.s32.totalorder %s50, %s52
      %p59 = scmp.eq.s32.totalorder %s21, 3
      %p60 = por %p58, %p59
      %p61 = scmp.ne.s32.totalorder %s52, %s53
      %p62 = scmp.eq.s32.totalorder %s21, 0
      %p63 = por %p61, %p62
      %p64 = scmp.ne.s32.totalorder %s52, %s53
      %p65 = scmp.eq.s32.totalorder %s22, 3
      %p66 = por %p64, %p65
      %p68 = scmp.ne.s32.totalorder %s53, %s67
      %p69 = scmp.eq.s32.totalorder %s22, 0
      %p70 = por %p68, %p69
      %s72 = sadd.s32 %s71, 1
      %p75 = scmp.eq.s32.totalorder %s16, 3
      %p76 = scmp.ne.s32.totalorder %s71, %s73
      %p77 = scmp.eq.s32.totalorder %s16, 0
      %p78 = por %p76, %p77
      %p79 = scmp.ne.s32.totalorder %s71, %s73
      %p80 = scmp.eq.s32.totalorder %s21, 3
      %p81 = por %p79, %p80
      %p82 = scmp.ne.s32.totalorder %s73, %s74
      %p83 = scmp.eq.s32.totalorder %s21, 0
      %p84 = por %p82, %p83
      %p85 = scmp.ne.s32.totalorder %s73, %s74
      %p86 = scmp.eq.s32.totalorder %s22, 3
      %p87 = por %p85, %p86
      %p89 = scmp.ne.s32.totalorder %s74, %s88
      %p90 = scmp.eq.s32.totalorder %s22, 0
      %p91 = por %p89, %p90
      %s93 = sadd.s32 %s92, 1
      %p96 = scmp.eq.s32.totalorder %s16, 3
      %p97 = scmp.ne.s32.totalorder %s92, %s94
      %p98 = scmp.eq.s32.totalorder %s16, 0
      %p99 = por %p97, %p98
      %p100 = scmp.ne.s32.totalorder %s92, %s94
      %p101 = scmp.eq.s32.totalorder %s21, 3
      %p102 = por %p100, %p101
      %p103 = scmp.ne.s32.totalorder %s94, %s95
      %p104 = scmp.eq.s32.totalorder %s21, 0
      %p105 = por %p103, %p104
      %p106 = scmp.ne.s32.totalorder %s94, %s95
      %p107 = scmp.eq.s32.totalorder %s22, 3
      %p108 = por %p106, %p107
      %p110 = scmp.ne.s32.totalorder %s95, %s109
      %p111 = scmp.eq.s32.totalorder %s22, 0
      %p112 = por %p110, %p111
      %s114 = sadd.s32 %s113, 1
      %p117 = scmp.eq.s32.totalorder %s16, 3
      %p118 = scmp.ne.s32.totalorder %s113, %s115
      %p119 = scmp.eq.s32.totalorder %s16, 0
      %p120 = por %p118, %p119
      %p121 = scmp.ne.s32.totalorder %s113, %s115
      %p122 = scmp.eq.s32.totalorder %s21, 3
      %p123 = por %p121, %p122
      %p124 = scmp.ne.s32.totalorder %s115, %s116
      %p125 = scmp.eq.s32.totalorder %s21, 0
      %p126 = por %p124, %p125
      %p127 = scmp.ne.s32.totalorder %s115, %s116
      %p128 = scmp.eq.s32.totalorder %s22, 3
      %p129 = por %p127, %p128
      %p131 = scmp.ne.s32.totalorder %s116, %s130
      %p132 = scmp.eq.s32.totalorder %s22, 0
      %p133 = por %p131, %p132
      %s134 = ssub.s32 %s16, %s23
      %p135 = scmp.eq.s32.totalorder %s134, 0
      %s137 = sadd.s32 %s136, 1
      %s138 = scalar_select %p135, %s136, %s137
      %p141 = pneg %p135
      %p142 = scmp.eq.s32.totalorder %s16, 3
      %p143 = por %p141, %p142
      %p144 = scmp.ne.s32.totalorder %s136, %s139
      %p145 = scmp.eq.s32.totalorder %s16, 0
      %p146 = por %p144, %p145
      %p147 = scmp.ne.s32.totalorder %s136, %s139
      %p148 = scmp.eq.s32.totalorder %s21, 3
      %p149 = por %p147, %p148
      %p150 = scmp.ne.s32.totalorder %s139, %s140
      %p151 = scmp.eq.s32.totalorder %s21, 0
      %p152 = por %p150, %p151
      %p153 = scmp.ne.s32.totalorder %s139, %s140
      %p154 = scmp.eq.s32.totalorder %s22, 3
      %p155 = por %p153, %p154
      %p157 = scmp.ne.s32.totalorder %s140, %s156
      %p158 = scmp.eq.s32.totalorder %s22, 0
      %p159 = por %p157, %p158
      %s160 = ssub.s32 %s16, %s23
      %p161 = scmp.eq.s32.totalorder %s160, 0
      %s163 = sadd.s32 %s162, 1
      %s164 = scalar_select %p161, %s162, %s163
      %p167 = pneg %p161
      %p168 = scmp.eq.s32.totalorder %s16, 3
      %p169 = por %p167, %p168
      %p170 = scmp.ne.s32.totalorder %s162, %s165
      %p171 = scmp.eq.s32.totalorder %s16, 0
      %p172 = por %p170, %p171
      %p173 = scmp.ne.s32.totalorder %s162, %s165
      %p174 = scmp.eq.s32.totalorder %s21, 3
      %p175 = por %p173, %p174
      %p176 = scmp.ne.s32.totalorder %s165, %s166
      %p177 = scmp.eq.s32.totalorder %s21, 0
      %p178 = por %p176, %p177
      %p179 = scmp.ne.s32.totalorder %s165, %s166
      %p180 = scmp.eq.s32.totalorder %s22, 3
      %p181 = por %p179, %p180
      %p183 = scmp.ne.s32.totalorder %s166, %s182
      %p184 = scmp.eq.s32.totalorder %s22, 0
      %p185 = por %p183, %p184
      %p186 = scmp.le.s32.totalorder 1, %s16
      %p187 = scmp.lt.s32.totalorder %s16, 5
      %p188 = pnand %p186, %p187
      %p189 = pneg %p188
      // Predicated region
      $region9: #{mnist_flow_forward.1} parent=5 // pred_check
        _
      $region10: #{mnist_flow_forward.1} parent=5 // pred_check_branch
        %191 = sbr.rel (%p188) target = $region12
      $region11: #{mnist_flow_forward.1} parent=5 // pred_region
        %s192 = ssub.s32 %s16, 1
        // Predicated region
        $region13: #{mnist_flow_forward.1} parent=11 // pred_check
          %p193 = pneg %p63
        $region14: #{mnist_flow_forward.1} parent=11 // pred_check_branch
          %195 = sbr.rel (%p193) target = $region16
        $region15: #{mnist_flow_forward.1} parent=11 // pred_region
          _
        $region16: #{mnist_flow_forward.1} parent=11 // pred_fallthru
          _
        // Predicated region
        $region17: #{mnist_flow_forward.1} parent=11 // pred_check
          %p196 = pneg %p84
        $region18: #{mnist_flow_forward.1} parent=11 // pred_check_branch
          %198 = sbr.rel (%p196) target = $region20
        $region19: #{mnist_flow_forward.1} parent=11 // pred_region
          _
        $region20: #{mnist_flow_forward.1} parent=11 // pred_fallthru
          _
        // Predicated region
        $region21: #{mnist_flow_forward.1} parent=11 // pred_check
          %p199 = pneg %p105
        $region22: #{mnist_flow_forward.1} parent=11 // pred_check_branch
          %201 = sbr.rel (%p199) target = $region24
        $region23: #{mnist_flow_forward.1} parent=11 // pred_region
          _
        $region24: #{mnist_flow_forward.1} parent=11 // pred_fallthru
          _
        // Predicated region
        $region25: #{mnist_flow_forward.1} parent=11 // pred_check
          %p202 = pneg %p126
        $region26: #{mnist_flow_forward.1} parent=11 // pred_check_branch
          %204 = sbr.rel (%p202) target = $region28
        $region27: #{mnist_flow_forward.1} parent=11 // pred_region
          _
        $region28: #{mnist_flow_forward.1} parent=11 // pred_fallthru
          _
      $region12: #{mnist_flow_forward.1} parent=5 // pred_fallthru
        _
      %p205 = scmp.lt.s32.totalorder %s16, 4
      // Predicated region
      $region29: #{mnist_flow_forward.1} parent=5 // pred_check
        %p206 = pneg %p205
      $region30: #{mnist_flow_forward.1} parent=5 // pred_check_branch
        %208 = sbr.rel (%p206) target = $region32
      $region31: #{mnist_flow_forward.1} parent=5 // pred_region
        // Predicated region
        $region33: #{mnist_flow_forward.1} parent=31 // pred_check
          %p209 = pneg %p36
        $region34: #{mnist_flow_forward.1} parent=31 // pred_check_branch
          %211 = sbr.rel (%p209) target = $region36
        $region35: #{mnist_flow_forward.1} parent=31 // pred_region
          %s212 = smul.u32 32, %s16
          %p213 = scmp.lt.s32.totalorder %s212, 127
          %s214 = scalar_select %p213, %s212, 127
          %s215 = smul.addr %s214, 2
          %s216 = smul.addr %s215, 8
          %s217 = scalar_lea.vmem %s0, %s216
          %s218 = smul.u32 32, %s16
        $region36: #{mnist_flow_forward.1} parent=31 // pred_fallthru
          _
      $region32: #{mnist_flow_forward.1} parent=5 // pred_fallthru
        _
      %p219 = scmp.le.s32.totalorder 1, %s16
      %p220 = scmp.lt.s32.totalorder %s16, 5
      %p221 = pnand %p219, %p220
      %p222 = pneg %p221
      // Predicated region
      $region37: #{mnist_flow_forward.1} parent=5 // pred_check
        _
      $region38: #{mnist_flow_forward.1} parent=5 // pred_check_branch
        %224 = sbr.rel (%p221) target = $region40
      $region39: #{mnist_flow_forward.1} parent=5 // pred_region
        %s225 = ssub.s32 %s16, 1
        %s226 = smul.u32 32, %s21
        %p227 = scmp.lt.s32.totalorder %s226, 127
        %s228 = scalar_select %p227, %s226, 127
        %s229 = smul.addr %s228, 2
        %s230 = smul.addr %s229, 8
        %s231 = scalar_lea.vmem %s0, %s230
        %p232 = pneg %p42
        %p233 = pneg %p39
        %p234 = pneg %p63
        %p235 = pneg %p60
        %p236 = pneg %p84
        %p237 = pneg %p81
        %p238 = pneg %p105
        %p239 = pneg %p102
        %p240 = pneg %p126
        %p241 = pneg %p123
        %p242 = pneg %p152
        %p243 = pneg %p149
        %s244 = sand.u32 %s139, 1
        %s245 = scalar_lea.sflag [#allocation3], %s244
        %s246 = sand.u32 %s139, 1
        %s247 = smul.addr %s246, 512
        %s248 = scalar_lea.vmem [#allocation2], %s247
        %p249 = pneg %p178
        %p250 = pneg %p175
        %s251 = smul.u32 32, %s21
        %p252 = scmp.lt.s32.totalorder %s251, 127
        %s253 = scalar_select %p252, %s251, 127
        %s254 = smul.addr %s253, 8
        %s255 = scalar_lea.vmem %s6, %s254
        %s256 = smul.u32 32, %s21
        %p257 = scmp.lt.s32.totalorder %s256, 127
        %s258 = scalar_select %p257, %s256, 127
        %s259 = smul.addr %s258, 2
        %s260 = smul.addr %s259, 8
        %s261 = scalar_lea.vmem %s0, %s260
        %s262 = smul.u32 32, %s21
        %s263 = smul.u32 32, %s21
        %s264 = smul.u32 32, %s21
        %p265 = scmp.lt.s32.totalorder %s264, 127
        %s266 = scalar_select %p265, %s264, 127
        %s267 = smul.addr %s266, 8
        %s268 = scalar_lea.vmem %s6, %s267
        %s269 = smul.u32 32, %s21
        %v271 = vld [vmem:[%s261] sm:$0xff]
        %v272 = vld [vmem:[%s261 + $0x8] sm:$0xff]
        %v273 = vld [vmem:[%s261 + $0x10] sm:$0xff]
        %v274 = vld [vmem:[%s261 + $0x18] sm:$0xff]
        %v275 = vld [vmem:[%s261 + $0x20] sm:$0xff]
        %v276 = vld [vmem:[%s261 + $0x28] sm:$0xff]
        %v277 = vld [vmem:[%s261 + $0x30] sm:$0xff]
        %v278 = vld [vmem:[%s261 + $0x38] sm:$0xff]
        %v279 = vld [vmem:[%s261 + $0x40] sm:$0xff]
        %v280 = vld [vmem:[%s261 + $0x48] sm:$0xff]
        %v281 = vld [vmem:[%s261 + $0x50] sm:$0xff]
        %v282 = vld [vmem:[%s261 + $0x58] sm:$0xff]
        %v283 = vld [vmem:[%s261 + $0x60] sm:$0xff]
        %v284 = vld [vmem:[%s261 + $0x68] sm:$0xff]
        %v285 = vld [vmem:[%s261 + $0x70] sm:$0xff]
        %v286 = vld [vmem:[%s261 + $0x78] sm:$0xff]
        %v287 = vld [vmem:[%s261 + $0x80] sm:$0xff]
        %v288 = vld [vmem:[%s261 + $0x88] sm:$0xff]
        %v289 = vld [vmem:[%s261 + $0x90] sm:$0xff]
        %v290 = vld [vmem:[%s261 + $0x98] sm:$0xff]
        %v291 = vld [vmem:[%s261 + $0xa0] sm:$0xff]
        %v292 = vld [vmem:[%s261 + $0xa8] sm:$0xff]
        %v293 = vld [vmem:[%s261 + $0xb0] sm:$0xff]
        %v294 = vld [vmem:[%s261 + $0xb8] sm:$0xff]
        %v295 = vld [vmem:[%s261 + $0xc0] sm:$0xff]
        %v296 = vld [vmem:[%s261 + $0xc8] sm:$0xff]
        %v297 = vld [vmem:[%s261 + $0xd0] sm:$0xff]
        %v298 = vld [vmem:[%s261 + $0xd8] sm:$0xff]
        %v299 = vld [vmem:[%s261 + $0xe0] sm:$0xff]
        %v300 = vld [vmem:[%s261 + $0xe8] sm:$0xff]
        %v301 = vld [vmem:[%s261 + $0xf0] sm:$0xff]
        %v302 = vld [vmem:[%s261 + $0xf8] sm:$0xff]
        %v303 = vld [vmem:[%s261 + $0x100] sm:$0xff]
        %v304 = vld [vmem:[%s261 + $0x108] sm:$0xff]
        %v305 = vld [vmem:[%s261 + $0x110] sm:$0xff]
        %v306 = vld [vmem:[%s261 + $0x118] sm:$0xff]
        %v307 = vld [vmem:[%s261 + $0x120] sm:$0xff]
        %v308 = vld [vmem:[%s261 + $0x128] sm:$0xff]
        %v309 = vld [vmem:[%s261 + $0x130] sm:$0xff]
        %v310 = vld [vmem:[%s261 + $0x138] sm:$0xff]
        %v311 = vld [vmem:[%s261 + $0x140] sm:$0xff]
        %v312 = vld [vmem:[%s261 + $0x148] sm:$0xff]
        %v313 = vld [vmem:[%s261 + $0x150] sm:$0xff]
        %v314 = vld [vmem:[%s261 + $0x158] sm:$0xff]
        %v315 = vld [vmem:[%s261 + $0x160] sm:$0xff]
        %v316 = vld [vmem:[%s261 + $0x168] sm:$0xff]
        %v317 = vld [vmem:[%s261 + $0x170] sm:$0xff]
        %v318 = vld [vmem:[%s261 + $0x178] sm:$0xff]
        %v319 = vld [vmem:[%s261 + $0x180] sm:$0xff]
        %v320 = vld [vmem:[%s261 + $0x188] sm:$0xff]
        %v321 = vld [vmem:[%s261 + $0x190] sm:$0xff]
        %v322 = vld [vmem:[%s261 + $0x198] sm:$0xff]
        %v323 = vld [vmem:[%s261 + $0x1a0] sm:$0xff]
        %v324 = vld [vmem:[%s261 + $0x1a8] sm:$0xff]
        %v325 = vld [vmem:[%s261 + $0x1b0] sm:$0xff]
        %v326 = vld [vmem:[%s261 + $0x1b8] sm:$0xff]
        %v327 = vld [vmem:[%s261 + $0x1c0] sm:$0xff]
        %v328 = vld [vmem:[%s261 + $0x1c8] sm:$0xff]
        %v329 = vld [vmem:[%s261 + $0x1d0] sm:$0xff]
        %v330 = vld [vmem:[%s261 + $0x1d8] sm:$0xff]
        %v331 = vld [vmem:[%s261 + $0x1e0] sm:$0xff]
        %v332 = vld [vmem:[%s261 + $0x1e8] sm:$0xff]
        %v333 = vld [vmem:[%s261 + $0x1f0] sm:$0xff]
        %v334 = vld [vmem:[%s261 + $0x1f8] sm:$0xff]
        %v335 = vsub.f32 %v271, 0.1307
        %v336 = vsub.f32 %v273, 0.1307
        %v337 = vsub.f32 %v275, 0.1307
        %v338 = vsub.f32 %v277, 0.1307
        %v339 = vsub.f32 %v279, 0.1307
        %v340 = vsub.f32 %v281, 0.1307
        %v341 = vsub.f32 %v283, 0.1307
        %v342 = vsub.f32 %v285, 0.1307
        %v343 = vsub.f32 %v287, 0.1307
        %v344 = vsub.f32 %v289, 0.1307
        %v345 = vsub.f32 %v291, 0.1307
        %v346 = vsub.f32 %v293, 0.1307
        %v347 = vsub.f32 %v295, 0.1307
        %v348 = vsub.f32 %v297, 0.1307
        %v349 = vsub.f32 %v299, 0.1307
        %v350 = vsub.f32 %v301, 0.1307
        %v351 = vsub.f32 %v303, 0.1307
        %v352 = vsub.f32 %v305, 0.1307
        %v353 = vsub.f32 %v307, 0.1307
        %v354 = vsub.f32 %v309, 0.1307
        %v355 = vsub.f32 %v311, 0.1307
        %v356 = vsub.f32 %v313, 0.1307
        %v357 = vsub.f32 %v315, 0.1307
        %v358 = vsub.f32 %v317, 0.1307
        %v359 = vsub.f32 %v319, 0.1307
        %v360 = vsub.f32 %v321, 0.1307
        %v361 = vsub.f32 %v323, 0.1307
        %v362 = vsub.f32 %v325, 0.1307
        %v363 = vsub.f32 %v327, 0.1307
        %v364 = vsub.f32 %v329, 0.1307
        %v365 = vsub.f32 %v331, 0.1307
        %v366 = vsub.f32 %v333, 0.1307
        %v367 = vmul.f32 %v335, 3.2456994
        %v368 = vmul.f32 %v336, 3.2456994
        %v369 = vmul.f32 %v337, 3.2456994
        %v370 = vmul.f32 %v338, 3.2456994
        %v371 = vmul.f32 %v339, 3.2456994
        %v372 = vmul.f32 %v340, 3.2456994
        %v373 = vmul.f32 %v341, 3.2456994
        %v374 = vmul.f32 %v342, 3.2456994
        %v375 = vmul.f32 %v343, 3.2456994
        %v376 = vmul.f32 %v344, 3.2456994
        %v377 = vmul.f32 %v345, 3.2456994
        %v378 = vmul.f32 %v346, 3.2456994
        %v379 = vmul.f32 %v347, 3.2456994
        %v380 = vmul.f32 %v348, 3.2456994
        %v381 = vmul.f32 %v349, 3.2456994
        %v382 = vmul.f32 %v350, 3.2456994
        %v383 = vmul.f32 %v351, 3.2456994
        %v384 = vmul.f32 %v352, 3.2456994
        %v385 = vmul.f32 %v353, 3.2456994
        %v386 = vmul.f32 %v354, 3.2456994
        %v387 = vmul.f32 %v355, 3.2456994
        %v388 = vmul.f32 %v356, 3.2456994
        %v389 = vmul.f32 %v357, 3.2456994
        %v390 = vmul.f32 %v358, 3.2456994
        %v391 = vmul.f32 %v359, 3.2456994
        %v392 = vmul.f32 %v360, 3.2456994
        %v393 = vmul.f32 %v361, 3.2456994
        %v394 = vmul.f32 %v362, 3.2456994
        %v395 = vmul.f32 %v363, 3.2456994
        %v396 = vmul.f32 %v364, 3.2456994
        %v397 = vmul.f32 %v365, 3.2456994
        %v398 = vmul.f32 %v366, 3.2456994
        %v399 = vsub.f32 %v272, 0.1307
        %v400 = vsub.f32 %v274, 0.1307
        %v401 = vsub.f32 %v276, 0.1307
        %v402 = vsub.f32 %v278, 0.1307
        %v403 = vsub.f32 %v280, 0.1307
        %v404 = vsub.f32 %v282, 0.1307
        %v405 = vsub.f32 %v284, 0.1307
        %v406 = vsub.f32 %v286, 0.1307
        %v407 = vsub.f32 %v288, 0.1307
        %v408 = vsub.f32 %v290, 0.1307
        %v409 = vsub.f32 %v292, 0.1307
        %v410 = vsub.f32 %v294, 0.1307
        %v411 = vsub.f32 %v296, 0.1307
        %v412 = vsub.f32 %v298, 0.1307
        %v413 = vsub.f32 %v300, 0.1307
        %v414 = vsub.f32 %v302, 0.1307
        %v415 = vsub.f32 %v304, 0.1307
        %v416 = vsub.f32 %v306, 0.1307
        %v417 = vsub.f32 %v308, 0.1307
        %v418 = vsub.f32 %v310, 0.1307
        %v419 = vsub.f32 %v312, 0.1307
        %v420 = vsub.f32 %v314, 0.1307
        %v421 = vsub.f32 %v316, 0.1307
        %v422 = vsub.f32 %v318, 0.1307
        %v423 = vsub.f32 %v320, 0.1307
        %v424 = vsub.f32 %v322, 0.1307
        %v425 = vsub.f32 %v324, 0.1307
        %v426 = vsub.f32 %v326, 0.1307
        %v427 = vsub.f32 %v328, 0.1307
        %v428 = vsub.f32 %v330, 0.1307
        %v429 = vsub.f32 %v332, 0.1307
        %v430 = vsub.f32 %v334, 0.1307
        %v431 = vmul.f32 %v399, 3.2456994
        %v432 = vmul.f32 %v400, 3.2456994
        %v433 = vmul.f32 %v401, 3.2456994
        %v434 = vmul.f32 %v402, 3.2456994
        %v435 = vmul.f32 %v403, 3.2456994
        %v436 = vmul.f32 %v404, 3.2456994
        %v437 = vmul.f32 %v405, 3.2456994
        %v438 = vmul.f32 %v406, 3.2456994
        %v439 = vmul.f32 %v407, 3.2456994
        %v440 = vmul.f32 %v408, 3.2456994
        %v441 = vmul.f32 %v409, 3.2456994
        %v442 = vmul.f32 %v410, 3.2456994
        %v443 = vmul.f32 %v411, 3.2456994
        %v444 = vmul.f32 %v412, 3.2456994
        %v445 = vmul.f32 %v413, 3.2456994
        %v446 = vmul.f32 %v414, 3.2456994
        %v447 = vmul.f32 %v415, 3.2456994
        %v448 = vmul.f32 %v416, 3.2456994
        %v449 = vmul.f32 %v417, 3.2456994
        %v450 = vmul.f32 %v418, 3.2456994
        %v451 = vmul.f32 %v419, 3.2456994
        %v452 = vmul.f32 %v420, 3.2456994
        %v453 = vmul.f32 %v421, 3.2456994
        %v454 = vmul.f32 %v422, 3.2456994
        %v455 = vmul.f32 %v423, 3.2456994
        %v456 = vmul.f32 %v424, 3.2456994
        %v457 = vmul.f32 %v425, 3.2456994
        %v458 = vmul.f32 %v426, 3.2456994
        %v459 = vmul.f32 %v427, 3.2456994
        %v460 = vmul.f32 %v428, 3.2456994
        %v461 = vmul.f32 %v429, 3.2456994
        %v462 = vmul.f32 %v430, 3.2456994
        %v463 = vpack.c.bf16 %v368, %v367
        %v464 = vpack.c.bf16 %v370, %v369
        %v465 = vpack.c.bf16 %v372, %v371
        %v466 = vpack.c.bf16 %v374, %v373
        %v467 = vpack.c.bf16 %v376, %v375
        %v468 = vpack.c.bf16 %v378, %v377
        %v469 = vpack.c.bf16 %v380, %v379
        %v470 = vpack.c.bf16 %v382, %v381
        %v471 = vpack.c.bf16 %v384, %v383
        %v472 = vpack.c.bf16 %v386, %v385
        %v473 = vpack.c.bf16 %v388, %v387
        %v474 = vpack.c.bf16 %v390, %v389
        %v475 = vpack.c.bf16 %v392, %v391
        %v476 = vpack.c.bf16 %v394, %v393
        %v477 = vpack.c.bf16 %v396, %v395
        %v478 = vpack.c.bf16 %v398, %v397
        %v479 = vld [vmem:[%s1] sm:$0xf]
        %v480 = vld [vmem:[%s1 + $0x4] sm:$0xf]
        %v481 = vld [vmem:[%s1 + $0x8] sm:$0xf]
        %v482 = vld [vmem:[%s1 + $0xc] sm:$0xf]
        %v483 = vld [vmem:[%s1 + $0x10] sm:$0xf]
        %v484 = vld [vmem:[%s1 + $0x14] sm:$0xf]
        %v485 = vld [vmem:[%s1 + $0x18] sm:$0xf]
        %v486 = vld [vmem:[%s1 + $0x1c] sm:$0xf]
        %v487 = vld [vmem:[%s1 + $0x20] sm:$0xf]
        %v488 = vld [vmem:[%s1 + $0x24] sm:$0xf]
        %v489 = vld [vmem:[%s1 + $0x28] sm:$0xf]
        %v490 = vld [vmem:[%s1 + $0x2c] sm:$0xf]
        %v491 = vld [vmem:[%s1 + $0x30] sm:$0xf]
        %v492 = vld [vmem:[%s1 + $0x34] sm:$0xf]
        %v493 = vld [vmem:[%s1 + $0x38] sm:$0xf]
        %v494 = vld [vmem:[%s1 + $0x3c] sm:$0xf]
        %v495 = vld [vmem:[%s2] sm:$0x1]
        %v497 = vlaneseq
        %v498 = vshrl.u32 %v497, 7
        %v499 = vsub.s32 0, %v498
        %v500 = vrot.slane %v495, %v499
        %v518 = vunpack.c.l.b16 %v479
        %v519 = vunpack.c.l.b16 %v480
        %v520 = vunpack.c.l.b16 %v481
        %v521 = vunpack.c.l.b16 %v482
        %v522 = vunpack.c.l.b16 %v483
        %v523 = vunpack.c.l.b16 %v484
        %v524 = vunpack.c.l.b16 %v485
        %v525 = vunpack.c.l.b16 %v486
        %v526 = vunpack.c.l.b16 %v487
        %v527 = vunpack.c.l.b16 %v488
        %v528 = vunpack.c.l.b16 %v489
        %v529 = vunpack.c.l.b16 %v490
        %v530 = vunpack.c.l.b16 %v491
        %v531 = vunpack.c.l.b16 %v492
        %v532 = vunpack.c.l.b16 %v493
        %v533 = vunpack.c.l.b16 %v494
        %v534 = vpack.c.b16 %v519, %v518
        %v535 = vpack.c.b16 %v521, %v520
        %v536 = vpack.c.b16 %v523, %v522
        %v537 = vpack.c.b16 %v525, %v524
        %v538 = vpack.c.b16 %v527, %v526
        %v539 = vpack.c.b16 %v529, %v528
        %v540 = vpack.c.b16 %v531, %v530
        %v541 = vpack.c.b16 %v533, %v532
        %550 = vmatprep.subr.bf16.mxu0 0
        %551 = vmatpush1.bf16.msra.mxu0 %v534
        %552 = vmatprep.subr.bf16.mxu0 0
        %553 = vmatpush1.bf16.msra.mxu0 %v535
        %554 = vmatprep.subr.bf16.mxu0 0
        %555 = vmatpush1.bf16.msra.mxu0 %v536
        %556 = vmatprep.subr.bf16.mxu0 0
        %557 = vmatpush1.bf16.msra.mxu0 %v537
        %558 = vmatprep.subr.bf16.mxu0 0
        %559 = vmatpush1.bf16.msra.mxu0 %v538
        %560 = vmatprep.subr.bf16.mxu0 0
        %561 = vmatpush1.bf16.msra.mxu0 %v539
        %562 = vmatprep.subr.bf16.mxu0 0
        %563 = vmatpush1.bf16.msra.mxu0 %v540
        %564 = vmatprep.subr.bf16.mxu0 0
        %565 = vmatpush1.bf16.msra.mxu0 %v541
        %566 = vmatprep.subr.bf16.mxu0 0
        %567 = vmatpush1.bf16.msra.mxu0 0
        %568 = vmatprep.subr.bf16.mxu0 0
        %569 = vmatpush1.bf16.msra.mxu0 0
        %570 = vmatprep.subr.bf16.mxu0 0
        %571 = vmatpush1.bf16.msra.mxu0 0
        %572 = vmatprep.subr.bf16.mxu0 0
        %573 = vmatpush1.bf16.msra.mxu0 0
        %574 = vmatprep.subr.bf16.mxu0 0
        %575 = vmatpush1.bf16.msra.mxu0 0
        %576 = vmatprep.subr.bf16.mxu0 0
        %577 = vmatpush1.bf16.msra.mxu0 0
        %578 = vmatprep.subr.bf16.mxu0 0
        %579 = vmatpush1.bf16.msra.mxu0 0
        %580 = vmatprep.subr.bf16.mxu0 0
        %581 = vmatpush1.bf16.msra.mxu0 0
        %582 = vmatprep.mubr.bf16.mxu0 0
        %583 = vmatmul.mubr.bf16.gmra.mrb[0].mxu0 %v463
        %v584 = vpop.f32.mrb[0].mxu0
        %v585 = vadd.f32 %v500, %v584
        %v586 = vpop.f32.mrb[0].mxu0
        %v587 = vpop.f32.mrb[0].mxu0
        %v588 = vadd.f32 %v500, %v587
        %v589 = vpop.f32.mrb[0].mxu0
        %590 = vmatprep.mubr.bf16.mxu0 0
        %591 = vmatmul.mubr.bf16.gmra.mrb[0].mxu0 %v464
        %v592 = vpop.f32.mrb[0].mxu0
        %v593 = vadd.f32 %v500, %v592
        %v594 = vpop.f32.mrb[0].mxu0
        %v595 = vpop.f32.mrb[0].mxu0
        %v596 = vadd.f32 %v500, %v595
        %v597 = vpop.f32.mrb[0].mxu0
        %598 = vmatprep.mubr.bf16.mxu0 0
        %599 = vmatmul.mubr.bf16.gmra.mrb[0].mxu0 %v465
        %v600 = vpop.f32.mrb[0].mxu0
        %v601 = vadd.f32 %v500, %v600
        %v602 = vpop.f32.mrb[0].mxu0
        %v603 = vpop.f32.mrb[0].mxu0
        %v604 = vadd.f32 %v500, %v603
        %v605 = vpop.f32.mrb[0].mxu0
        %606 = vmatprep.mubr.bf16.mxu0 0
        %607 = vmatmul.mubr.bf16.gmra.mrb[0].mxu0 %v466
        %v608 = vpop.f32.mrb[0].mxu0
        %v609 = vadd.f32 %v500, %v608
        %v610 = vpop.f32.mrb[0].mxu0
        %v611 = vpop.f32.mrb[0].mxu0
        %v612 = vadd.f32 %v500, %v611
        %v613 = vpop.f32.mrb[0].mxu0
        %614 = vmatprep.mubr.bf16.mxu0 0
        %615 = vmatmul.mubr.bf16.gmra.mrb[0].mxu0 %v467
        %v616 = vpop.f32.mrb[0].mxu0
        %v617 = vadd.f32 %v500, %v616
        %v618 = vpop.f32.mrb[0].mxu0
        %v619 = vpop.f32.mrb[0].mxu0
        %v620 = vadd.f32 %v500, %v619
        %v621 = vpop.f32.mrb[0].mxu0
        %622 = vmatprep.mubr.bf16.mxu0 0
        %623 = vmatmul.mubr.bf16.gmra.mrb[0].mxu0 %v468
        %v624 = vpop.f32.mrb[0].mxu0
        %v625 = vadd.f32 %v500, %v624
        %v626 = vpop.f32.mrb[0].mxu0
        %v627 = vpop.f32.mrb[0].mxu0
        %v628 = vadd.f32 %v500, %v627
        %v629 = vpop.f32.mrb[0].mxu0
        %630 = vmatprep.mubr.bf16.mxu0 0
        %631 = vmatmul.mubr.bf16.gmra.mrb[0].mxu0 %v469
        %v632 = vpop.f32.mrb[0].mxu0
        %v633 = vadd.f32 %v500, %v632
        %v634 = vpop.f32.mrb[0].mxu0
        %v635 = vpop.f32.mrb[0].mxu0
        %v636 = vadd.f32 %v500, %v635
        %v637 = vpop.f32.mrb[0].mxu0
        %638 = vmatprep.mubr.bf16.mxu0 0
        %639 = vmatmul.mubr.bf16.gmra.mrb[0].mxu0 %v470
        %v640 = vpop.f32.mrb[0].mxu0
        %v641 = vadd.f32 %v500, %v640
        %v642 = vpop.f32.mrb[0].mxu0
        %v643 = vpop.f32.mrb[0].mxu0
        %v644 = vadd.f32 %v500, %v643
        %v645 = vpop.f32.mrb[0].mxu0
        %646 = vmatprep.mubr.bf16.mxu0 0
        %647 = vmatmul.mubr.bf16.gmra.mrb[0].mxu0 %v471
        %v648 = vpop.f32.mrb[0].mxu0
        %v649 = vadd.f32 %v500, %v648
        %v650 = vpop.f32.mrb[0].mxu0
        %v651 = vpop.f32.mrb[0].mxu0
        %v652 = vadd.f32 %v500, %v651
        %v653 = vpop.f32.mrb[0].mxu0
        %654 = vmatprep.mubr.bf16.mxu0 0
        %655 = vmatmul.mubr.bf16.gmra.mrb[0].mxu0 %v472
        %v656 = vpop.f32.mrb[0].mxu0
        %v657 = vadd.f32 %v500, %v656
        %v658 = vpop.f32.mrb[0].mxu0
        %v659 = vpop.f32.mrb[0].mxu0
        %v660 = vadd.f32 %v500, %v659
        %v661 = vpop.f32.mrb[0].mxu0
        %662 = vmatprep.mubr.bf16.mxu0 0
        %663 = vmatmul.mubr.bf16.gmra.mrb[0].mxu0 %v473
        %v664 = vpop.f32.mrb[0].mxu0
        %v665 = vadd.f32 %v500, %v664
        %v666 = vpop.f32.mrb[0].mxu0
        %v667 = vpop.f32.mrb[0].mxu0
        %v668 = vadd.f32 %v500, %v667
        %v669 = vpop.f32.mrb[0].mxu0
        %670 = vmatprep.mubr.bf16.mxu0 0
        %671 = vmatmul.mubr.bf16.gmra.mrb[0].mxu0 %v474
        %v672 = vpop.f32.mrb[0].mxu0
        %v673 = vadd.f32 %v500, %v672
        %v674 = vpop.f32.mrb[0].mxu0
        %v675 = vpop.f32.mrb[0].mxu0
        %v676 = vadd.f32 %v500, %v675
        %v677 = vpop.f32.mrb[0].mxu0
        %678 = vmatprep.mubr.bf16.mxu0 0
        %679 = vmatmul.mubr.bf16.gmra.mrb[0].mxu0 %v475
        %v680 = vpop.f32.mrb[0].mxu0
        %v681 = vadd.f32 %v500, %v680
        %v682 = vpop.f32.mrb[0].mxu0
        %v683 = vpop.f32.mrb[0].mxu0
        %v684 = vadd.f32 %v500, %v683
        %v685 = vpop.f32.mrb[0].mxu0
        %686 = vmatprep.mubr.bf16.mxu0 0
        %687 = vmatmul.mubr.bf16.gmra.mrb[0].mxu0 %v476
        %v688 = vpop.f32.mrb[0].mxu0
        %v689 = vadd.f32 %v500, %v688
        %v690 = vpop.f32.mrb[0].mxu0
        %v691 = vpop.f32.mrb[0].mxu0
        %v692 = vadd.f32 %v500, %v691
        %v693 = vpop.f32.mrb[0].mxu0
        %694 = vmatprep.mubr.bf16.mxu0 0
        %695 = vmatmul.mubr.bf16.gmra.mrb[0].mxu0 %v477
        %v696 = vpop.f32.mrb[0].mxu0
        %v697 = vadd.f32 %v500, %v696
        %v698 = vpop.f32.mrb[0].mxu0
        %v699 = vpop.f32.mrb[0].mxu0
        %v700 = vadd.f32 %v500, %v699
        %v701 = vpop.f32.mrb[0].mxu0
        %702 = vmatprep.mubr.bf16.mxu0 0
        %703 = vmatmul.mubr.bf16.gmra.mrb[0].mxu0 %v478
        %v704 = vpop.f32.mrb[0].mxu0
        %v705 = vadd.f32 %v500, %v704
        %v706 = vpop.f32.mrb[0].mxu0
        %v707 = vpop.f32.mrb[0].mxu0
        %v708 = vadd.f32 %v500, %v707
        %v709 = vpop.f32.mrb[0].mxu0
        %710 = vdwg.mxu0
        %v711 = vtanh.pop %v585
        %v712 = vtanh.pop %v588
        %v713 = vtanh.pop %v593
        %v714 = vtanh.pop %v596
        %v715 = vtanh.pop %v601
        %v716 = vtanh.pop %v604
        %v717 = vtanh.pop %v609
        %v718 = vtanh.pop %v612
        %v719 = vtanh.pop %v617
        %v720 = vtanh.pop %v620
        %v721 = vtanh.pop %v625
        %v722 = vtanh.pop %v628
        %v723 = vtanh.pop %v633
        %v724 = vtanh.pop %v636
        %v725 = vtanh.pop %v641
        %v726 = vtanh.pop %v644
        %v727 = vtanh.pop %v649
        %v728 = vtanh.pop %v652
        %v729 = vtanh.pop %v657
        %v730 = vtanh.pop %v660
        %v731 = vtanh.pop %v665
        %v732 = vtanh.pop %v668
        %v733 = vtanh.pop %v673
        %v734 = vtanh.pop %v676
        %v735 = vtanh.pop %v681
        %v736 = vtanh.pop %v684
        %v737 = vtanh.pop %v689
        %v738 = vtanh.pop %v692
        %v739 = vtanh.pop %v697
        %v740 = vtanh.pop %v700
        %v741 = vtanh.pop %v705
        %v742 = vtanh.pop %v708
        %v743 = vpack.c.bf16 %v712, %v711
        %v744 = vpack.c.bf16 %v714, %v713
        %v745 = vpack.c.bf16 %v716, %v715
        %v746 = vpack.c.bf16 %v718, %v717
        %v747 = vpack.c.bf16 %v720, %v719
        %v748 = vpack.c.bf16 %v722, %v721
        %v749 = vpack.c.bf16 %v724, %v723
        %v750 = vpack.c.bf16 %v726, %v725
        %v751 = vpack.c.bf16 %v728, %v727
        %v752 = vpack.c.bf16 %v730, %v729
        %v753 = vpack.c.bf16 %v732, %v731
        %v754 = vpack.c.bf16 %v734, %v733
        %v755 = vpack.c.bf16 %v736, %v735
        %v756 = vpack.c.bf16 %v738, %v737
        %v757 = vpack.c.bf16 %v740, %v739
        %v758 = vpack.c.bf16 %v742, %v741
        %v759 = vld [vmem:[%s3] sm:$0xff]
        %v760 = vld [vmem:[%s3 + $0x8] sm:$0xff]
        %v761 = vld [vmem:[%s3 + $0x10] sm:$0xff]
        %v762 = vld [vmem:[%s3 + $0x18] sm:$0xff]
        %v763 = vld [vmem:[%s3 + $0x20] sm:$0xff]
        %v764 = vld [vmem:[%s3 + $0x28] sm:$0xff]
        %v765 = vld [vmem:[%s3 + $0x30] sm:$0xff]
        %v766 = vld [vmem:[%s3 + $0x38] sm:$0xff]
        %v767 = vld [vmem:[%s3 + $0x40] sm:$0xff]
        %v768 = vld [vmem:[%s3 + $0x48] sm:$0xff]
        %v769 = vld [vmem:[%s3 + $0x50] sm:$0xff]
        %v770 = vld [vmem:[%s3 + $0x58] sm:$0xff]
        %v771 = vld [vmem:[%s3 + $0x60] sm:$0xff]
        %v772 = vld [vmem:[%s3 + $0x68] sm:$0xff]
        %v773 = vld [vmem:[%s3 + $0x70] sm:$0xff]
        %v774 = vld [vmem:[%s3 + $0x78] sm:$0xff]
        %v775 = vld [vmem:[%s4] sm:$0x3]
        %v777 = vlaneseq
        %v778 = vshrl.u32 %v777, 7
        %v779 = vsub.s32 0, %v778
        %v780 = vrot.slane %v775, %v779
        %v781 = vlaneseq
        %v782 = vshrl.u32 %v781, 7
        %v783 = vsub.s32 1, %v782
        %v784 = vrot.slane %v775, %v783
        %v803 = vunpack.c.l.b16 %v759
        %v804 = vunpack.c.h.b16 %v759
        %v805 = vunpack.c.l.b16 %v760
        %v806 = vunpack.c.h.b16 %v760
        %v807 = vunpack.c.l.b16 %v761
        %v808 = vunpack.c.h.b16 %v761
        %v809 = vunpack.c.l.b16 %v762
        %v810 = vunpack.c.h.b16 %v762
        %v811 = vunpack.c.l.b16 %v763
        %v812 = vunpack.c.h.b16 %v763
        %v813 = vunpack.c.l.b16 %v764
        %v814 = vunpack.c.h.b16 %v764
        %v815 = vunpack.c.l.b16 %v765
        %v816 = vunpack.c.h.b16 %v765
        %v817 = vunpack.c.l.b16 %v766
        %v818 = vunpack.c.h.b16 %v766
        %v819 = vunpack.c.l.b16 %v767
        %v820 = vunpack.c.h.b16 %v767
        %v821 = vunpack.c.l.b16 %v768
        %v822 = vunpack.c.h.b16 %v768
        %v823 = vunpack.c.l.b16 %v769
        %v824 = vunpack.c.h.b16 %v769
        %v825 = vunpack.c.l.b16 %v770
        %v826 = vunpack.c.h.b16 %v770
        %v827 = vunpack.c.l.b16 %v771
        %v828 = vunpack.c.h.b16 %v771
        %v829 = vunpack.c.l.b16 %v772
        %v830 = vunpack.c.h.b16 %v772
        %v831 = vunpack.c.l.b16 %v773
        %v832 = vunpack.c.h.b16 %v773
        %v833 = vunpack.c.l.b16 %v774
        %v834 = vunpack.c.h.b16 %v774
        %v835 = vpack.c.b16 %v805, %v803
        %v836 = vpack.c.b16 %v806, %v804
        %v837 = vpack.c.b16 %v809, %v807
        %v838 = vpack.c.b16 %v810, %v808
        %v839 = vpack.c.b16 %v813, %v811
        %v840 = vpack.c.b16 %v814, %v812
        %v841 = vpack.c.b16 %v817, %v815
        %v842 = vpack.c.b16 %v818, %v816
        %v843 = vpack.c.b16 %v821, %v819
        %v844 = vpack.c.b16 %v822, %v820
        %v845 = vpack.c.b16 %v825, %v823
        %v846 = vpack.c.b16 %v826, %v824
        %v847 = vpack.c.b16 %v829, %v827
        %v848 = vpack.c.b16 %v830, %v828
        %v849 = vpack.c.b16 %v833, %v831
        %v850 = vpack.c.b16 %v834, %v832
        %867 = vmatprep.subr.bf16.mxu0 %v836
        %868 = vmatpush1.bf16.msra.mxu0 %v835
        %869 = vmatprep.subr.bf16.mxu0 %v838
        %870 = vmatpush1.bf16.msra.mxu0 %v837
        %871 = vmatprep.subr.bf16.mxu0 %v840
        %872 = vmatpush1.bf16.msra.mxu0 %v839
        %873 = vmatprep.subr.bf16.mxu0 %v842
        %874 = vmatpush1.bf16.msra.mxu0 %v841
        %875 = vmatprep.subr.bf16.mxu0 %v844
        %876 = vmatpush1.bf16.msra.mxu0 %v843
        %877 = vmatprep.subr.bf16.mxu0 %v846
        %878 = vmatpush1.bf16.msra.mxu0 %v845
        %879 = vmatprep.subr.bf16.mxu0 %v848
        %880 = vmatpush1.bf16.msra.mxu0 %v847
        %881 = vmatprep.subr.bf16.mxu0 %v850
        %882 = vmatpush1.bf16.msra.mxu0 %v849
        %883 = vmatprep.subr.bf16.mxu0 0
        %884 = vmatpush1.bf16.msra.mxu0 0
        %885 = vmatprep.subr.bf16.mxu0 0
        %886 = vmatpush1.bf16.msra.mxu0 0
        %887 = vmatprep.subr.bf16.mxu0 0
        %888 = vmatpush1.bf16.msra.mxu0 0
        %889 = vmatprep.subr.bf16.mxu0 0
        %890 = vmatpush1.bf16.msra.mxu0 0
        %891 = vmatprep.subr.bf16.mxu0 0
        %892 = vmatpush1.bf16.msra.mxu0 0
        %893 = vmatprep.subr.bf16.mxu0 0
        %894 = vmatpush1.bf16.msra.mxu0 0
        %895 = vmatprep.subr.bf16.mxu0 0
        %896 = vmatpush1.bf16.msra.mxu0 0
        %897 = vmatprep.subr.bf16.mxu0 0
        %898 = vmatpush1.bf16.msra.mxu0 0
        %899 = vmatprep.mubr.bf16.mxu0 0
        %900 = vmatmul.mubr.bf16.gmra.mrb[0].mxu0 %v743
        %v901 = vpop.f32.mrb[0].mxu0
        %v902 = vadd.f32 %v780, %v901
        %v903 = vpop.f32.mrb[0].mxu0
        %v904 = vadd.f32 %v784, %v903
        %v905 = vpop.f32.mrb[0].mxu0
        %v906 = vadd.f32 %v780, %v905
        %v907 = vpop.f32.mrb[0].mxu0
        %v908 = vadd.f32 %v784, %v907
        %909 = vmatprep.mubr.bf16.mxu0 0
        %910 = vmatmul.mubr.bf16.gmra.mrb[0].mxu0 %v744
        %v911 = vpop.f32.mrb[0].mxu0
        %v912 = vadd.f32 %v780, %v911
        %v913 = vpop.f32.mrb[0].mxu0
        %v914 = vadd.f32 %v784, %v913
        %v915 = vpop.f32.mrb[0].mxu0
        %v916 = vadd.f32 %v780, %v915
        %v917 = vpop.f32.mrb[0].mxu0
        %v918 = vadd.f32 %v784, %v917
        %919 = vmatprep.mubr.bf16.mxu0 0
        %920 = vmatmul.mubr.bf16.gmra.mrb[0].mxu0 %v745
        %v921 = vpop.f32.mrb[0].mxu0
        %v922 = vadd.f32 %v780, %v921
        %v923 = vpop.f32.mrb[0].mxu0
        %v924 = vadd.f32 %v784, %v923
        %v925 = vpop.f32.mrb[0].mxu0
        %v926 = vadd.f32 %v780, %v925
        %v927 = vpop.f32.mrb[0].mxu0
        %v928 = vadd.f32 %v784, %v927
        %929 = vmatprep.mubr.bf16.mxu0 0
        %930 = vmatmul.mubr.bf16.gmra.mrb[0].mxu0 %v746
        %v931 = vpop.f32.mrb[0].mxu0
        %v932 = vadd.f32 %v780, %v931
        %v933 = vpop.f32.mrb[0].mxu0
        %v934 = vadd.f32 %v784, %v933
        %v935 = vpop.f32.mrb[0].mxu0
        %v936 = vadd.f32 %v780, %v935
        %v937 = vpop.f32.mrb[0].mxu0
        %v938 = vadd.f32 %v784, %v937
        %939 = vmatprep.mubr.bf16.mxu0 0
        %940 = vmatmul.mubr.bf16.gmra.mrb[0].mxu0 %v747
        %v941 = vpop.f32.mrb[0].mxu0
        %v942 = vadd.f32 %v780, %v941
        %v943 = vpop.f32.mrb[0].mxu0
        %v944 = vadd.f32 %v784, %v943
        %v945 = vpop.f32.mrb[0].mxu0
        %v946 = vadd.f32 %v780, %v945
        %v947 = vpop.f32.mrb[0].mxu0
        %v948 = vadd.f32 %v784, %v947
        %949 = vmatprep.mubr.bf16.mxu0 0
        %950 = vmatmul.mubr.bf16.gmra.mrb[0].mxu0 %v748
        %v951 = vpop.f32.mrb[0].mxu0
        %v952 = vadd.f32 %v780, %v951
        %v953 = vpop.f32.mrb[0].mxu0
        %v954 = vadd.f32 %v784, %v953
        %v955 = vpop.f32.mrb[0].mxu0
        %v956 = vadd.f32 %v780, %v955
        %v957 = vpop.f32.mrb[0].mxu0
        %v958 = vadd.f32 %v784, %v957
        %959 = vmatprep.mubr.bf16.mxu0 0
        %960 = vmatmul.mubr.bf16.gmra.mrb[0].mxu0 %v749
        %v961 = vpop.f32.mrb[0].mxu0
        %v962 = vadd.f32 %v780, %v961
        %v963 = vpop.f32.mrb[0].mxu0
        %v964 = vadd.f32 %v784, %v963
        %v965 = vpop.f32.mrb[0].mxu0
        %v966 = vadd.f32 %v780, %v965
        %v967 = vpop.f32.mrb[0].mxu0
        %v968 = vadd.f32 %v784, %v967
        %969 = vmatprep.mubr.bf16.mxu0 0
        %970 = vmatmul.mubr.bf16.gmra.mrb[0].mxu0 %v750
        %v971 = vpop.f32.mrb[0].mxu0
        %v972 = vadd.f32 %v780, %v971
        %v973 = vpop.f32.mrb[0].mxu0
        %v974 = vadd.f32 %v784, %v973
        %v975 = vpop.f32.mrb[0].mxu0
        %v976 = vadd.f32 %v780, %v975
        %v977 = vpop.f32.mrb[0].mxu0
        %v978 = vadd.f32 %v784, %v977
        %979 = vmatprep.mubr.bf16.mxu0 0
        %980 = vmatmul.mubr.bf16.gmra.mrb[0].mxu0 %v751
        %v981 = vpop.f32.mrb[0].mxu0
        %v982 = vadd.f32 %v780, %v981
        %v983 = vpop.f32.mrb[0].mxu0
        %v984 = vadd.f32 %v784, %v983
        %v985 = vpop.f32.mrb[0].mxu0
        %v986 = vadd.f32 %v780, %v985
        %v987 = vpop.f32.mrb[0].mxu0
        %v988 = vadd.f32 %v784, %v987
        %989 = vmatprep.mubr.bf16.mxu0 0
        %990 = vmatmul.mubr.bf16.gmra.mrb[0].mxu0 %v752
        %v991 = vpop.f32.mrb[0].mxu0
        %v992 = vadd.f32 %v780, %v991
        %v993 = vpop.f32.mrb[0].mxu0
        %v994 = vadd.f32 %v784, %v993
        %v995 = vpop.f32.mrb[0].mxu0
        %v996 = vadd.f32 %v780, %v995
        %v997 = vpop.f32.mrb[0].mxu0
        %v998 = vadd.f32 %v784, %v997
        %999 = vmatprep.mubr.bf16.mxu0 0
        %1000 = vmatmul.mubr.bf16.gmra.mrb[0].mxu0 %v753
        %v1001 = vpop.f32.mrb[0].mxu0
        %v1002 = vadd.f32 %v780, %v1001
        %v1003 = vpop.f32.mrb[0].mxu0
        %v1004 = vadd.f32 %v784, %v1003
        %v1005 = vpop.f32.mrb[0].mxu0
        %v1006 = vadd.f32 %v780, %v1005
        %v1007 = vpop.f32.mrb[0].mxu0
        %v1008 = vadd.f32 %v784, %v1007
        %1009 = vmatprep.mubr.bf16.mxu0 0
        %1010 = vmatmul.mubr.bf16.gmra.mrb[0].mxu0 %v754
        %v1011 = vpop.f32.mrb[0].mxu0
        %v1012 = vadd.f32 %v780, %v1011
        %v1013 = vpop.f32.mrb[0].mxu0
        %v1014 = vadd.f32 %v784, %v1013
        %v1015 = vpop.f32.mrb[0].mxu0
        %v1016 = vadd.f32 %v780, %v1015
        %v1017 = vpop.f32.mrb[0].mxu0
        %v1018 = vadd.f32 %v784, %v1017
        %1019 = vmatprep.mubr.bf16.mxu0 0
        %1020 = vmatmul.mubr.bf16.gmra.mrb[0].mxu0 %v755
        %v1021 = vpop.f32.mrb[0].mxu0
        %v1022 = vadd.f32 %v780, %v1021
        %v1023 = vpop.f32.mrb[0].mxu0
        %v1024 = vadd.f32 %v784, %v1023
        %v1025 = vpop.f32.mrb[0].mxu0
        %v1026 = vadd.f32 %v780, %v1025
        %v1027 = vpop.f32.mrb[0].mxu0
        %v1028 = vadd.f32 %v784, %v1027
        %1029 = vmatprep.mubr.bf16.mxu0 0
        %1030 = vmatmul.mubr.bf16.gmra.mrb[0].mxu0 %v756
        %v1031 = vpop.f32.mrb[0].mxu0
        %v1032 = vadd.f32 %v780, %v1031
        %v1033 = vpop.f32.mrb[0].mxu0
        %v1034 = vadd.f32 %v784, %v1033
        %v1035 = vpop.f32.mrb[0].mxu0
        %v1036 = vadd.f32 %v780, %v1035
        %v1037 = vpop.f32.mrb[0].mxu0
        %v1038 = vadd.f32 %v784, %v1037
        %1039 = vmatprep.mubr.bf16.mxu0 0
        %1040 = vmatmul.mubr.bf16.gmra.mrb[0].mxu0 %v757
        %v1041 = vpop.f32.mrb[0].mxu0
        %v1042 = vadd.f32 %v780, %v1041
        %v1043 = vpop.f32.mrb[0].mxu0
        %v1044 = vadd.f32 %v784, %v1043
        %v1045 = vpop.f32.mrb[0].mxu0
        %v1046 = vadd.f32 %v780, %v1045
        %v1047 = vpop.f32.mrb[0].mxu0
        %v1048 = vadd.f32 %v784, %v1047
        %1049 = vmatprep.mubr.bf16.mxu0 0
        %1050 = vmatmul.mubr.bf16.gmra.mrb[0].mxu0 %v758
        %v1051 = vpop.f32.mrb[0].mxu0
        %v1052 = vadd.f32 %v780, %v1051
        %v1053 = vpop.f32.mrb[0].mxu0
        %v1054 = vadd.f32 %v784, %v1053
        %v1055 = vpop.f32.mrb[0].mxu0
        %v1056 = vadd.f32 %v780, %v1055
        %v1057 = vpop.f32.mrb[0].mxu0
        %v1058 = vadd.f32 %v784, %v1057
        %1059 = vdwg.mxu0
        %v1060 = vtanh.pop %v902
        %v1061 = vtanh.pop %v906
        %v1062 = vtanh.pop %v912
        %v1063 = vtanh.pop %v916
        %v1064 = vtanh.pop %v922
        %v1065 = vtanh.pop %v926
        %v1066 = vtanh.pop %v932
        %v1067 = vtanh.pop %v936
        %v1068 = vtanh.pop %v942
        %v1069 = vtanh.pop %v946
        %v1070 = vtanh.pop %v952
        %v1071 = vtanh.pop %v956
        %v1072 = vtanh.pop %v962
        %v1073 = vtanh.pop %v966
        %v1074 = vtanh.pop %v972
        %v1075 = vtanh.pop %v976
        %v1076 = vtanh.pop %v982
        %v1077 = vtanh.pop %v986
        %v1078 = vtanh.pop %v992
        %v1079 = vtanh.pop %v996
        %v1080 = vtanh.pop %v1002
        %v1081 = vtanh.pop %v1006
        %v1082 = vtanh.pop %v1012
        %v1083 = vtanh.pop %v1016
        %v1084 = vtanh.pop %v1022
        %v1085 = vtanh.pop %v1026
        %v1086 = vtanh.pop %v1032
        %v1087 = vtanh.pop %v1036
        %v1088 = vtanh.pop %v1042
        %v1089 = vtanh.pop %v1046
        %v1090 = vtanh.pop %v1052
        %v1091 = vtanh.pop %v1056
        %v1092 = vmul.f32 %v1060, 1.442695
        %v1093 = vpow.pop %v1092
        %v1094 = vmul.f32 %v1061, 1.442695
        %v1095 = vpow.pop %v1094
        %v1096 = vmul.f32 %v1062, 1.442695
        %v1097 = vpow.pop %v1096
        %v1098 = vmul.f32 %v1063, 1.442695
        %v1099 = vpow.pop %v1098
        %v1100 = vmul.f32 %v1064, 1.442695
        %v1101 = vpow.pop %v1100
        %v1102 = vmul.f32 %v1065, 1.442695
        %v1103 = vpow.pop %v1102
        %v1104 = vmul.f32 %v1066, 1.442695
        %v1105 = vpow.pop %v1104
        %v1106 = vmul.f32 %v1067, 1.442695
        %v1107 = vpow.pop %v1106
        %v1108 = vmul.f32 %v1068, 1.442695
        %v1109 = vpow.pop %v1108
        %v1110 = vmul.f32 %v1069, 1.442695
        %v1111 = vpow.pop %v1110
        %v1112 = vmul.f32 %v1070, 1.442695
        %v1113 = vpow.pop %v1112
        %v1114 = vmul.f32 %v1071, 1.442695
        %v1115 = vpow.pop %v1114
        %v1116 = vmul.f32 %v1072, 1.442695
        %v1117 = vpow.pop %v1116
        %v1118 = vmul.f32 %v1073, 1.442695
        %v1119 = vpow.pop %v1118
        %v1120 = vmul.f32 %v1074, 1.442695
        %v1121 = vpow.pop %v1120
        %v1122 = vmul.f32 %v1075, 1.442695
        %v1123 = vpow.pop %v1122
        %v1124 = vmul.f32 %v1076, 1.442695
        %v1125 = vpow.pop %v1124
        %v1126 = vmul.f32 %v1077, 1.442695
        %v1127 = vpow.pop %v1126
        %v1128 = vmul.f32 %v1078, 1.442695
        %v1129 = vpow.pop %v1128
        %v1130 = vmul.f32 %v1079, 1.442695
        %v1131 = vpow.pop %v1130
        %v1132 = vmul.f32 %v1080, 1.442695
        %v1133 = vpow.pop %v1132
        %v1134 = vmul.f32 %v1081, 1.442695
        %v1135 = vpow.pop %v1134
        %v1136 = vmul.f32 %v1082, 1.442695
        %v1137 = vpow.pop %v1136
        %v1138 = vmul.f32 %v1083, 1.442695
        %v1139 = vpow.pop %v1138
        %v1140 = vmul.f32 %v1084, 1.442695
        %v1141 = vpow.pop %v1140
        %v1142 = vmul.f32 %v1085, 1.442695
        %v1143 = vpow.pop %v1142
        %v1144 = vmul.f32 %v1086, 1.442695
        %v1145 = vpow.pop %v1144
        %v1146 = vmul.f32 %v1087, 1.442695
        %v1147 = vpow.pop %v1146
        %v1148 = vmul.f32 %v1088, 1.442695
        %v1149 = vpow.pop %v1148
        %v1150 = vmul.f32 %v1089, 1.442695
        %v1151 = vpow.pop %v1150
        %v1152 = vmul.f32 %v1090, 1.442695
        %v1153 = vpow.pop %v1152
        %v1154 = vmul.f32 %v1091, 1.442695
        %v1155 = vpow.pop %v1154
        %v1156 = vmul.f32 %v431, %v1093
        %v1157 = vmul.f32 %v432, %v1095
        %v1158 = vmul.f32 %v433, %v1097
        %v1159 = vmul.f32 %v434, %v1099
        %v1160 = vmul.f32 %v435, %v1101
        %v1161 = vmul.f32 %v436, %v1103
        %v1162 = vmul.f32 %v437, %v1105
        %v1163 = vmul.f32 %v438, %v1107
        %v1164 = vmul.f32 %v439, %v1109
        %v1165 = vmul.f32 %v440, %v1111
        %v1166 = vmul.f32 %v441, %v1113
        %v1167 = vmul.f32 %v442, %v1115
        %v1168 = vmul.f32 %v443, %v1117
        %v1169 = vmul.f32 %v444, %v1119
        %v1170 = vmul.f32 %v445, %v1121
        %v1171 = vmul.f32 %v446, %v1123
        %v1172 = vmul.f32 %v447, %v1125
        %v1173 = vmul.f32 %v448, %v1127
        %v1174 = vmul.f32 %v449, %v1129
        %v1175 = vmul.f32 %v450, %v1131
        %v1176 = vmul.f32 %v451, %v1133
        %v1177 = vmul.f32 %v452, %v1135
        %v1178 = vmul.f32 %v453, %v1137
        %v1179 = vmul.f32 %v454, %v1139
        %v1180 = vmul.f32 %v455, %v1141
        %v1181 = vmul.f32 %v456, %v1143
        %v1182 = vmul.f32 %v457, %v1145
        %v1183 = vmul.f32 %v458, %v1147
        %v1184 = vmul.f32 %v459, %v1149
        %v1185 = vmul.f32 %v460, %v1151
        %v1186 = vmul.f32 %v461, %v1153
        %v1187 = vmul.f32 %v462, %v1155
        %v1188 = vadd.f32 %v1156, %v904
        %v1189 = vadd.f32 %v1157, %v908
        %v1190 = vadd.f32 %v1158, %v914
        %v1191 = vadd.f32 %v1159, %v918
        %v1192 = vadd.f32 %v1160, %v924
        %v1193 = vadd.f32 %v1161, %v928
        %v1194 = vadd.f32 %v1162, %v934
        %v1195 = vadd.f32 %v1163, %v938
        %v1196 = vadd.f32 %v1164, %v944
        %v1197 = vadd.f32 %v1165, %v948
        %v1198 = vadd.f32 %v1166, %v954
        %v1199 = vadd.f32 %v1167, %v958
        %v1200 = vadd.f32 %v1168, %v964
        %v1201 = vadd.f32 %v1169, %v968
        %v1202 = vadd.f32 %v1170, %v974
        %v1203 = vadd.f32 %v1171, %v978
        %v1204 = vadd.f32 %v1172, %v984
        %v1205 = vadd.f32 %v1173, %v988
        %v1206 = vadd.f32 %v1174, %v994
        %v1207 = vadd.f32 %v1175, %v998
        %v1208 = vadd.f32 %v1176, %v1004
        %v1209 = vadd.f32 %v1177, %v1008
        %v1210 = vadd.f32 %v1178, %v1014
        %v1211 = vadd.f32 %v1179, %v1018
        %v1212 = vadd.f32 %v1180, %v1024
        %v1213 = vadd.f32 %v1181, %v1028
        %v1214 = vadd.f32 %v1182, %v1034
        %v1215 = vadd.f32 %v1183, %v1038
        %v1216 = vadd.f32 %v1184, %v1044
        %v1217 = vadd.f32 %v1185, %v1048
        %v1218 = vadd.f32 %v1186, %v1054
        %v1219 = vadd.f32 %v1187, %v1058
        %1220 = vadd.xlane.f32.xlu0 %v1060
        %v1221 = vpop.xlane.xlu0 %1220
        %1222 = vadd.xlane.f32.xlu0 %v1061
        %v1223 = vpop.xlane.xlu0 %1222
        %1224 = vadd.xlane.f32.xlu0 %v1062
        %v1225 = vpop.xlane.xlu0 %1224
        %1226 = vadd.xlane.f32.xlu0 %v1063
        %v1227 = vpop.xlane.xlu0 %1226
        %1228 = vadd.xlane.f32.xlu0 %v1064
        %v1229 = vpop.xlane.xlu0 %1228
        %1230 = vadd.xlane.f32.xlu0 %v1065
        %v1231 = vpop.xlane.xlu0 %1230
        %1232 = vadd.xlane.f32.xlu0 %v1066
        %v1233 = vpop.xlane.xlu0 %1232
        %1234 = vadd.xlane.f32.xlu0 %v1067
        %v1235 = vpop.xlane.xlu0 %1234
        %1236 = vadd.xlane.f32.xlu0 %v1068
        %v1237 = vpop.xlane.xlu0 %1236
        %1238 = vadd.xlane.f32.xlu0 %v1069
        %v1239 = vpop.xlane.xlu0 %1238
        %1240 = vadd.xlane.f32.xlu0 %v1070
        %v1241 = vpop.xlane.xlu0 %1240
        %1242 = vadd.xlane.f32.xlu0 %v1071
        %v1243 = vpop.xlane.xlu0 %1242
        %1244 = vadd.xlane.f32.xlu0 %v1072
        %v1245 = vpop.xlane.xlu0 %1244
        %1246 = vadd.xlane.f32.xlu0 %v1073
        %v1247 = vpop.xlane.xlu0 %1246
        %1248 = vadd.xlane.f32.xlu0 %v1074
        %v1249 = vpop.xlane.xlu0 %1248
        %1250 = vadd.xlane.f32.xlu0 %v1075
        %v1251 = vpop.xlane.xlu0 %1250
        %1252 = vadd.xlane.f32.xlu0 %v1076
        %v1253 = vpop.xlane.xlu0 %1252
        %1254 = vadd.xlane.f32.xlu0 %v1077
        %v1255 = vpop.xlane.xlu0 %1254
        %1256 = vadd.xlane.f32.xlu0 %v1078
        %v1257 = vpop.xlane.xlu0 %1256
        %1258 = vadd.xlane.f32.xlu0 %v1079
        %v1259 = vpop.xlane.xlu0 %1258
        %1260 = vadd.xlane.f32.xlu0 %v1080
        %v1261 = vpop.xlane.xlu0 %1260
        %1262 = vadd.xlane.f32.xlu0 %v1081
        %v1263 = vpop.xlane.xlu0 %1262
        %1264 = vadd.xlane.f32.xlu0 %v1082
        %v1265 = vpop.xlane.xlu0 %1264
        %1266 = vadd.xlane.f32.xlu0 %v1083
        %v1267 = vpop.xlane.xlu0 %1266
        %1268 = vadd.xlane.f32.xlu0 %v1084
        %v1269 = vpop.xlane.xlu0 %1268
        %1270 = vadd.xlane.f32.xlu0 %v1085
        %v1271 = vpop.xlane.xlu0 %1270
        %1272 = vadd.xlane.f32.xlu0 %v1086
        %v1273 = vpop.xlane.xlu0 %1272
        %1274 = vadd.xlane.f32.xlu0 %v1087
        %v1275 = vpop.xlane.xlu0 %1274
        %1276 = vadd.xlane.f32.xlu0 %v1088
        %v1277 = vpop.xlane.xlu0 %1276
        %1278 = vadd.xlane.f32.xlu0 %v1089
        %v1279 = vpop.xlane.xlu0 %1278
        %1280 = vadd.xlane.f32.xlu0 %v1090
        %v1281 = vpop.xlane.xlu0 %1280
        %1282 = vadd.xlane.f32.xlu0 %v1091
        %v1283 = vpop.xlane.xlu0 %1282
        %v1284 = vadd.f32 %v1221, 301.3967
        %v1285 = vadd.f32 %v1223, 301.3967
        %v1286 = vadd.f32 %v1225, 301.3967
        %v1287 = vadd.f32 %v1227, 301.3967
        %v1288 = vadd.f32 %v1229, 301.3967
        %v1289 = vadd.f32 %v1231, 301.3967
        %v1290 = vadd.f32 %v1233, 301.3967
        %v1291 = vadd.f32 %v1235, 301.3967
        %v1292 = vadd.f32 %v1237, 301.3967
        %v1293 = vadd.f32 %v1239, 301.3967
        %v1294 = vadd.f32 %v1241, 301.3967
        %v1295 = vadd.f32 %v1243, 301.3967
        %v1296 = vadd.f32 %v1245, 301.3967
        %v1297 = vadd.f32 %v1247, 301.3967
        %v1298 = vadd.f32 %v1249, 301.3967
        %v1299 = vadd.f32 %v1251, 301.3967
        %v1300 = vadd.f32 %v1253, 301.3967
        %v1301 = vadd.f32 %v1255, 301.3967
        %v1302 = vadd.f32 %v1257, 301.3967
        %v1303 = vadd.f32 %v1259, 301.3967
        %v1304 = vadd.f32 %v1261, 301.3967
        %v1305 = vadd.f32 %v1263, 301.3967
        %v1306 = vadd.f32 %v1265, 301.3967
        %v1307 = vadd.f32 %v1267, 301.3967
        %v1308 = vadd.f32 %v1269, 301.3967
        %v1309 = vadd.f32 %v1271, 301.3967
        %v1310 = vadd.f32 %v1273, 301.3967
        %v1311 = vadd.f32 %v1275, 301.3967
        %v1312 = vadd.f32 %v1277, 301.3967
        %v1313 = vadd.f32 %v1279, 301.3967
        %v1314 = vadd.f32 %v1281, 301.3967
        %v1315 = vadd.f32 %v1283, 301.3967
        %v1316 = vpack.c.bf16 %v1189, %v1188
        %v1317 = vpack.c.bf16 %v1191, %v1190
        %v1318 = vpack.c.bf16 %v1193, %v1192
        %v1319 = vpack.c.bf16 %v1195, %v1194
        %v1320 = vpack.c.bf16 %v1197, %v1196
        %v1321 = vpack.c.bf16 %v1199, %v1198
        %v1322 = vpack.c.bf16 %v1201, %v1200
        %v1323 = vpack.c.bf16 %v1203, %v1202
        %v1324 = vpack.c.bf16 %v1205, %v1204
        %v1325 = vpack.c.bf16 %v1207, %v1206
        %v1326 = vpack.c.bf16 %v1209, %v1208
        %v1327 = vpack.c.bf16 %v1211, %v1210
        %v1328 = vpack.c.bf16 %v1213, %v1212
        %v1329 = vpack.c.bf16 %v1215, %v1214
        %v1330 = vpack.c.bf16 %v1217, %v1216
        %v1331 = vpack.c.bf16 %v1219, %v1218
        %s1332 = scalar_lea.vmem %s1, 64
        %v1333 = vld [vmem:[%s1332] sm:$0xf]
        %v1334 = vld [vmem:[%s1332 + $0x4] sm:$0xf]
        %v1335 = vld [vmem:[%s1332 + $0x8] sm:$0xf]
        %v1336 = vld [vmem:[%s1332 + $0xc] sm:$0xf]
        %v1337 = vld [vmem:[%s1332 + $0x10] sm:$0xf]
        %v1338 = vld [vmem:[%s1332 + $0x14] sm:$0xf]
        %v1339 = vld [vmem:[%s1332 + $0x18] sm:$0xf]
        %v1340 = vld [vmem:[%s1332 + $0x1c] sm:$0xf]
        %v1341 = vld [vmem:[%s1332 + $0x20] sm:$0xf]
        %v1342 = vld [vmem:[%s1332 + $0x24] sm:$0xf]
        %v1343 = vld [vmem:[%s1332 + $0x28] sm:$0xf]
        %v1344 = vld [vmem:[%s1332 + $0x2c] sm:$0xf]
        %v1345 = vld [vmem:[%s1332 + $0x30] sm:$0xf]
        %v1346 = vld [vmem:[%s1332 + $0x34] sm:$0xf]
        %v1347 = vld [vmem:[%s1332 + $0x38] sm:$0xf]
        %v1348 = vld [vmem:[%s1332 + $0x3c] sm:$0xf]
        %s1349 = scalar_lea.vmem %s2, 1
        %v1350 = vld [vmem:[%s1349] sm:$0x1]
        %v1352 = vlaneseq
        %v1353 = vshrl.u32 %v1352, 7
        %v1354 = vsub.s32 0, %v1353
        %v1355 = vrot.slane %v1350, %v1354
        %v1373 = vunpack.c.l.b16 %v1333
        %v1374 = vunpack.c.l.b16 %v1334
        %v1375 = vunpack.c.l.b16 %v1335
        %v1376 = vunpack.c.l.b16 %v1336
        %v1377 = vunpack.c.l.b16 %v1337
        %v1378 = vunpack.c.l.b16 %v1338
        %v1379 = vunpack.c.l.b16 %v1339
        %v1380 = vunpack.c.l.b16 %v1340
        %v1381 = vunpack.c.l.b16 %v1341
        %v1382 = vunpack.c.l.b16 %v1342
        %v1383 = vunpack.c.l.b16 %v1343
        %v1384 = vunpack.c.l.b16 %v1344
        %v1385 = vunpack.c.l.b16 %v1345
        %v1386 = vunpack.c.l.b16 %v1346
        %v1387 = vunpack.c.l.b16 %v1347
        %v1388 = vunpack.c.l.b16 %v1348
        %v1389 = vpack.c.b16 %v1374, %v1373
        %v1390 = vpack.c.b16 %v1376, %v1375
        %v1391 = vpack.c.b16 %v1378, %v1377
        %v1392 = vpack.c.b16 %v1380, %v1379
        %v1393 = vpack.c.b16 %v1382, %v1381
        %v1394 = vpack.c.b16 %v1384, %v1383
        %v1395 = vpack.c.b16 %v1386, %v1385
        %v1396 = vpack.c.b16 %v1388, %v1387
        %1405 = vmatprep.subr.bf16.mxu0 0
        %1406 = vmatpush1.bf16.msra.mxu0 %v1389
        %1407 = vmatprep.subr.bf16.mxu0 0
        %1408 = vmatpush1.bf16.msra.mxu0 %v1390
        %1409 = vmatprep.subr.bf16.mxu0 0
        %1410 = vmatpush1.bf16.msra.mxu0 %v1391
        %1411 = vmatprep.subr.bf16.mxu0 0
        %1412 = vmatpush1.bf16.msra.mxu0 %v1392
        %1413 = vmatprep.subr.bf16.mxu0 0
        %1414 = vmatpush1.bf16.msra.mxu0 %v1393
        %1415 = vmatprep.subr.bf16.mxu0 0
        %1416 = vmatpush1.bf16.msra.mxu0 %v1394
        %1417 = vmatprep.subr.bf16.mxu0 0
        %1418 = vmatpush1.bf16.msra.mxu0 %v1395
        %1419 = vmatprep.subr.bf16.mxu0 0
        %1420 = vmatpush1.bf16.msra.mxu0 %v1396
        %1421 = vmatprep.subr.bf16.mxu0 0
        %1422 = vmatpush1.bf16.msra.mxu0 0
        %1423 = vmatprep.subr.bf16.mxu0 0
        %1424 = vmatpush1.bf16.msra.mxu0 0
        %1425 = vmatprep.subr.bf16.mxu0 0
        %1426 = vmatpush1.bf16.msra.mxu0 0
        %1427 = vmatprep.subr.bf16.mxu0 0
        %1428 = vmatpush1.bf16.msra.mxu0 0
        %1429 = vmatprep.subr.bf16.mxu0 0
        %1430 = vmatpush1.bf16.msra.mxu0 0
        %1431 = vmatprep.subr.bf16.mxu0 0
        %1432 = vmatpush1.bf16.msra.mxu0 0
        %1433 = vmatprep.subr.bf16.mxu0 0
        %1434 = vmatpush1.bf16.msra.mxu0 0
        %1435 = vmatprep.subr.bf16.mxu0 0
        %1436 = vmatpush1.bf16.msra.mxu0 0
        %1437 = vmatprep.mubr.bf16.mxu0 0
        %1438 = vmatmul.mubr.bf16.gmra.mrb[0].mxu0 %v1316
        %v1439 = vpop.f32.mrb[0].mxu0
        %v1440 = vadd.f32 %v1355, %v1439
        %v1441 = vpop.f32.mrb[0].mxu0
        %v1442 = vpop.f32.mrb[0].mxu0
        %v1443 = vadd.f32 %v1355, %v1442
        %v1444 = vpop.f32.mrb[0].mxu0
        %1445 = vmatprep.mubr.bf16.mxu0 0
        %1446 = vmatmul.mubr.bf16.gmra.mrb[0].mxu0 %v1317
        %v1447 = vpop.f32.mrb[0].mxu0
        %v1448 = vadd.f32 %v1355, %v1447
        %v1449 = vpop.f32.mrb[0].mxu0
        %v1450 = vpop.f32.mrb[0].mxu0
        %v1451 = vadd.f32 %v1355, %v1450
        %v1452 = vpop.f32.mrb[0].mxu0
        %1453 = vmatprep.mubr.bf16.mxu0 0
        %1454 = vmatmul.mubr.bf16.gmra.mrb[0].mxu0 %v1318
        %v1455 = vpop.f32.mrb[0].mxu0
        %v1456 = vadd.f32 %v1355, %v1455
        %v1457 = vpop.f32.mrb[0].mxu0
        %v1458 = vpop.f32.mrb[0].mxu0
        %v1459 = vadd.f32 %v1355, %v1458
        %v1460 = vpop.f32.mrb[0].mxu0
        %1461 = vmatprep.mubr.bf16.mxu0 0
        %1462 = vmatmul.mubr.bf16.gmra.mrb[0].mxu0 %v1319
        %v1463 = vpop.f32.mrb[0].mxu0
        %v1464 = vadd.f32 %v1355, %v1463
        %v1465 = vpop.f32.mrb[0].mxu0
        %v1466 = vpop.f32.mrb[0].mxu0
        %v1467 = vadd.f32 %v1355, %v1466
        %v1468 = vpop.f32.mrb[0].mxu0
        %1469 = vmatprep.mubr.bf16.mxu0 0
        %1470 = vmatmul.mubr.bf16.gmra.mrb[0].mxu0 %v1320
        %v1471 = vpop.f32.mrb[0].mxu0
        %v1472 = vadd.f32 %v1355, %v1471
        %v1473 = vpop.f32.mrb[0].mxu0
        %v1474 = vpop.f32.mrb[0].mxu0
        %v1475 = vadd.f32 %v1355, %v1474
        %v1476 = vpop.f32.mrb[0].mxu0
        %1477 = vmatprep.mubr.bf16.mxu0 0
        %1478 = vmatmul.mubr.bf16.gmra.mrb[0].mxu0 %v1321
        %v1479 = vpop.f32.mrb[0].mxu0
        %v1480 = vadd.f32 %v1355, %v1479
        %v1481 = vpop.f32.mrb[0].mxu0
        %v1482 = vpop.f32.mrb[0].mxu0
        %v1483 = vadd.f32 %v1355, %v1482
        %v1484 = vpop.f32.mrb[0].mxu0
        %1485 = vmatprep.mubr.bf16.mxu0 0
        %1486 = vmatmul.mubr.bf16.gmra.mrb[0].mxu0 %v1322
        %v1487 = vpop.f32.mrb[0].mxu0
        %v1488 = vadd.f32 %v1355, %v1487
        %v1489 = vpop.f32.mrb[0].mxu0
        %v1490 = vpop.f32.mrb[0].mxu0
        %v1491 = vadd.f32 %v1355, %v1490
        %v1492 = vpop.f32.mrb[0].mxu0
        %1493 = vmatprep.mubr.bf16.mxu0 0
        %1494 = vmatmul.mubr.bf16.gmra.mrb[0].mxu0 %v1323
        %v1495 = vpop.f32.mrb[0].mxu0
        %v1496 = vadd.f32 %v1355, %v1495
        %v1497 = vpop.f32.mrb[0].mxu0
        %v1498 = vpop.f32.mrb[0].mxu0
        %v1499 = vadd.f32 %v1355, %v1498
        %v1500 = vpop.f32.mrb[0].mxu0
        %1501 = vmatprep.mubr.bf16.mxu0 0
        %1502 = vmatmul.mubr.bf16.gmra.mrb[0].mxu0 %v1324
        %v1503 = vpop.f32.mrb[0].mxu0
        %v1504 = vadd.f32 %v1355, %v1503
        %v1505 = vpop.f32.mrb[0].mxu0
        %v1506 = vpop.f32.mrb[0].mxu0
        %v1507 = vadd.f32 %v1355, %v1506
        %v1508 = vpop.f32.mrb[0].mxu0
        %1509 = vmatprep.mubr.bf16.mxu0 0
        %1510 = vmatmul.mubr.bf16.gmra.mrb[0].mxu0 %v1325
        %v1511 = vpop.f32.mrb[0].mxu0
        %v1512 = vadd.f32 %v1355, %v1511
        %v1513 = vpop.f32.mrb[0].mxu0
        %v1514 = vpop.f32.mrb[0].mxu0
        %v1515 = vadd.f32 %v1355, %v1514
        %v1516 = vpop.f32.mrb[0].mxu0
        %1517 = vmatprep.mubr.bf16.mxu0 0
        %1518 = vmatmul.mubr.bf16.gmra.mrb[0].mxu0 %v1326
        %v1519 = vpop.f32.mrb[0].mxu0
        %v1520 = vadd.f32 %v1355, %v1519
        %v1521 = vpop.f32.mrb[0].mxu0
        %v1522 = vpop.f32.mrb[0].mxu0
        %v1523 = vadd.f32 %v1355, %v1522
        %v1524 = vpop.f32.mrb[0].mxu0
        %1525 = vmatprep.mubr.bf16.mxu0 0
        %1526 = vmatmul.mubr.bf16.gmra.mrb[0].mxu0 %v1327
        %v1527 = vpop.f32.mrb[0].mxu0
        %v1528 = vadd.f32 %v1355, %v1527
        %v1529 = vpop.f32.mrb[0].mxu0
        %v1530 = vpop.f32.mrb[0].mxu0
        %v1531 = vadd.f32 %v1355, %v1530
        %v1532 = vpop.f32.mrb[0].mxu0
        %1533 = vmatprep.mubr.bf16.mxu0 0
        %1534 = vmatmul.mubr.bf16.gmra.mrb[0].mxu0 %v1328
        %v1535 = vpop.f32.mrb[0].mxu0
        %v1536 = vadd.f32 %v1355, %v1535
        %v1537 = vpop.f32.mrb[0].mxu0
        %v1538 = vpop.f32.mrb[0].mxu0
        %v1539 = vadd.f32 %v1355, %v1538
        %v1540 = vpop.f32.mrb[0].mxu0
        %1541 = vmatprep.mubr.bf16.mxu0 0
        %1542 = vmatmul.mubr.bf16.gmra.mrb[0].mxu0 %v1329
        %v1543 = vpop.f32.mrb[0].mxu0
        %v1544 = vadd.f32 %v1355, %v1543
        %v1545 = vpop.f32.mrb[0].mxu0
        %v1546 = vpop.f32.mrb[0].mxu0
        %v1547 = vadd.f32 %v1355, %v1546
        %v1548 = vpop.f32.mrb[0].mxu0
        %1549 = vmatprep.mubr.bf16.mxu0 0
        %1550 = vmatmul.mubr.bf16.gmra.mrb[0].mxu0 %v1330
        %v1551 = vpop.f32.mrb[0].mxu0
        %v1552 = vadd.f32 %v1355, %v1551
        %v1553 = vpop.f32.mrb[0].mxu0
        %v1554 = vpop.f32.mrb[0].mxu0
        %v1555 = vadd.f32 %v1355, %v1554
        %v1556 = vpop.f32.mrb[0].mxu0
        %1557 = vmatprep.mubr.bf16.mxu0 0
        %1558 = vmatmul.mubr.bf16.gmra.mrb[0].mxu0 %v1331
        %v1559 = vpop.f32.mrb[0].mxu0
        %v1560 = vadd.f32 %v1355, %v1559
        %v1561 = vpop.f32.mrb[0].mxu0
        %v1562 = vpop.f32.mrb[0].mxu0
        %v1563 = vadd.f32 %v1355, %v1562
        %v1564 = vpop.f32.mrb[0].mxu0
        %1565 = vdwg.mxu0
        %v1566 = vtanh.pop %v1440
        %v1567 = vtanh.pop %v1443
        %v1568 = vtanh.pop %v1448
        %v1569 = vtanh.pop %v1451
        %v1570 = vtanh.pop %v1456
        %v1571 = vtanh.pop %v1459
        %v1572 = vtanh.pop %v1464
        %v1573 = vtanh.pop %v1467
        %v1574 = vtanh.pop %v1472
        %v1575 = vtanh.pop %v1475
        %v1576 = vtanh.pop %v1480
        %v1577 = vtanh.pop %v1483
        %v1578 = vtanh.pop %v1488
        %v1579 = vtanh.pop %v1491
        %v1580 = vtanh.pop %v1496
        %v1581 = vtanh.pop %v1499
        %v1582 = vtanh.pop %v1504
        %v1583 = vtanh.pop %v1507
        %v1584 = vtanh.pop %v1512
        %v1585 = vtanh.pop %v1515
        %v1586 = vtanh.pop %v1520
        %v1587 = vtanh.pop %v1523
        %v1588 = vtanh.pop %v1528
        %v1589 = vtanh.pop %v1531
        %v1590 = vtanh.pop %v1536
        %v1591 = vtanh.pop %v1539
        %v1592 = vtanh.pop %v1544
        %v1593 = vtanh.pop %v1547
        %v1594 = vtanh.pop %v1552
        %v1595 = vtanh.pop %v1555
        %v1596 = vtanh.pop %v1560
        %v1597 = vtanh.pop %v1563
        %v1598 = vpack.c.bf16 %v1567, %v1566
        %v1599 = vpack.c.bf16 %v1569, %v1568
        %v1600 = vpack.c.bf16 %v1571, %v1570
        %v1601 = vpack.c.bf16 %v1573, %v1572
        %v1602 = vpack.c.bf16 %v1575, %v1574
        %v1603 = vpack.c.bf16 %v1577, %v1576
        %v1604 = vpack.c.bf16 %v1579, %v1578
        %v1605 = vpack.c.bf16 %v1581, %v1580
        %v1606 = vpack.c.bf16 %v1583, %v1582
        %v1607 = vpack.c.bf16 %v1585, %v1584
        %v1608 = vpack.c.bf16 %v1587, %v1586
        %v1609 = vpack.c.bf16 %v1589, %v1588
        %v1610 = vpack.c.bf16 %v1591, %v1590
        %v1611 = vpack.c.bf16 %v1593, %v1592
        %v1612 = vpack.c.bf16 %v1595, %v1594
        %v1613 = vpack.c.bf16 %v1597, %v1596
        %s1614 = scalar_lea.vmem %s3, 128
        %v1615 = vld [vmem:[%s1614] sm:$0xff]
        %v1616 = vld [vmem:[%s1614 + $0x8] sm:$0xff]
        %v1617 = vld [vmem:[%s1614 + $0x10] sm:$0xff]
        %v1618 = vld [vmem:[%s1614 + $0x18] sm:$0xff]
        %v1619 = vld [vmem:[%s1614 + $0x20] sm:$0xff]
        %v1620 = vld [vmem:[%s1614 + $0x28] sm:$0xff]
        %v1621 = vld [vmem:[%s1614 + $0x30] sm:$0xff]
        %v1622 = vld [vmem:[%s1614 + $0x38] sm:$0xff]
        %v1623 = vld [vmem:[%s1614 + $0x40] sm:$0xff]
        %v1624 = vld [vmem:[%s1614 + $0x48] sm:$0xff]
        %v1625 = vld [vmem:[%s1614 + $0x50] sm:$0xff]
        %v1626 = vld [vmem:[%s1614 + $0x58] sm:$0xff]
        %v1627 = vld [vmem:[%s1614 + $0x60] sm:$0xff]
        %v1628 = vld [vmem:[%s1614 + $0x68] sm:$0xff]
        %v1629 = vld [vmem:[%s1614 + $0x70] sm:$0xff]
        %v1630 = vld [vmem:[%s1614 + $0x78] sm:$0xff]
        %s1631 = scalar_lea.vmem %s4, 2
        %v1632 = vld [vmem:[%s1631] sm:$0x3]
        %v1634 = vlaneseq
        %v1635 = vshrl.u32 %v1634, 7
        %v1636 = vsub.s32 0, %v1635
        %v1637 = vrot.slane %v1632, %v1636
        %v1638 = vlaneseq
        %v1639 = vshrl.u32 %v1638, 7
        %v1640 = vsub.s32 1, %v1639
        %v1641 = vrot.slane %v1632, %v1640
        %v1660 = vunpack.c.l.b16 %v1615
        %v1661 = vunpack.c.h.b16 %v1615
        %v1662 = vunpack.c.l.b16 %v1616
        %v1663 = vunpack.c.h.b16 %v1616
        %v1664 = vunpack.c.l.b16 %v1617
        %v1665 = vunpack.c.h.b16 %v1617
        %v1666 = vunpack.c.l.b16 %v1618
        %v1667 = vunpack.c.h.b16 %v1618
        %v1668 = vunpack.c.l.b16 %v1619
        %v1669 = vunpack.c.h.b16 %v1619
        %v1670 = vunpack.c.l.b16 %v1620
        %v1671 = vunpack.c.h.b16 %v1620
        %v1672 = vunpack.c.l.b16 %v1621
        %v1673 = vunpack.c.h.b16 %v1621
        %v1674 = vunpack.c.l.b16 %v1622
        %v1675 = vunpack.c.h.b16 %v1622
        %v1676 = vunpack.c.l.b16 %v1623
        %v1677 = vunpack.c.h.b16 %v1623
        %v1678 = vunpack.c.l.b16 %v1624
        %v1679 = vunpack.c.h.b16 %v1624
        %v1680 = vunpack.c.l.b16 %v1625
        %v1681 = vunpack.c.h.b16 %v1625
        %v1682 = vunpack.c.l.b16 %v1626
        %v1683 = vunpack.c.h.b16 %v1626
        %v1684 = vunpack.c.l.b16 %v1627
        %v1685 = vunpack.c.h.b16 %v1627
        %v1686 = vunpack.c.l.b16 %v1628
        %v1687 = vunpack.c.h.b16 %v1628
        %v1688 = vunpack.c.l.b16 %v1629
        %v1689 = vunpack.c.h.b16 %v1629
        %v1690 = vunpack.c.l.b16 %v1630
        %v1691 = vunpack.c.h.b16 %v1630
        %v1692 = vpack.c.b16 %v1662, %v1660
        %v1693 = vpack.c.b16 %v1663, %v1661
        %v1694 = vpack.c.b16 %v1666, %v1664
        %v1695 = vpack.c.b16 %v1667, %v1665
        %v1696 = vpack.c.b16 %v1670, %v1668
        %v1697 = vpack.c.b16 %v1671, %v1669
        %v1698 = vpack.c.b16 %v1674, %v1672
        %v1699 = vpack.c.b16 %v1675, %v1673
        %v1700 = vpack.c.b16 %v1678, %v1676
        %v1701 = vpack.c.b16 %v1679, %v1677
        %v1702 = vpack.c.b16 %v1682, %v1680
        %v1703 = vpack.c.b16 %v1683, %v1681
        %v1704 = vpack.c.b16 %v1686, %v1684
        %v1705 = vpack.c.b16 %v1687, %v1685
        %v1706 = vpack.c.b16 %v1690, %v1688
        %v1707 = vpack.c.b16 %v1691, %v1689
        %1724 = vmatprep.subr.bf16.mxu0 %v1693
        %1725 = vmatpush1.bf16.msra.mxu0 %v1692
        %1726 = vmatprep.subr.bf16.mxu0 %v1695
        %1727 = vmatpush1.bf16.msra.mxu0 %v1694
        %1728 = vmatprep.subr.bf16.mxu0 %v1697
        %1729 = vmatpush1.bf16.msra.mxu0 %v1696
        %1730 = vmatprep.subr.bf16.mxu0 %v1699
        %1731 = vmatpush1.bf16.msra.mxu0 %v1698
        %1732 = vmatprep.subr.bf16.mxu0 %v1701
        %1733 = vmatpush1.bf16.msra.mxu0 %v1700
        %1734 = vmatprep.subr.bf16.mxu0 %v1703
        %1735 = vmatpush1.bf16.msra.mxu0 %v1702
        %1736 = vmatprep.subr.bf16.mxu0 %v1705
        %1737 = vmatpush1.bf16.msra.mxu0 %v1704
        %1738 = vmatprep.subr.bf16.mxu0 %v1707
        %1739 = vmatpush1.bf16.msra.mxu0 %v1706
        %1740 = vmatprep.subr.bf16.mxu0 0
        %1741 = vmatpush1.bf16.msra.mxu0 0
        %1742 = vmatprep.subr.bf16.mxu0 0
        %1743 = vmatpush1.bf16.msra.mxu0 0
        %1744 = vmatprep.subr.bf16.mxu0 0
        %1745 = vmatpush1.bf16.msra.mxu0 0
        %1746 = vmatprep.subr.bf16.mxu0 0
        %1747 = vmatpush1.bf16.msra.mxu0 0
        %1748 = vmatprep.subr.bf16.mxu0 0
        %1749 = vmatpush1.bf16.msra.mxu0 0
        %1750 = vmatprep.subr.bf16.mxu0 0
        %1751 = vmatpush1.bf16.msra.mxu0 0
        %1752 = vmatprep.subr.bf16.mxu0 0
        %1753 = vmatpush1.bf16.msra.mxu0 0
        %1754 = vmatprep.subr.bf16.mxu0 0
        %1755 = vmatpush1.bf16.msra.mxu0 0
        %1756 = vmatprep.mubr.bf16.mxu0 0
        %1757 = vmatmul.mubr.bf16.gmra.mrb[0].mxu0 %v1598
        %v1758 = vpop.f32.mrb[0].mxu0
        %v1759 = vadd.f32 %v1637, %v1758
        %v1760 = vpop.f32.mrb[0].mxu0
        %v1761 = vadd.f32 %v1641, %v1760
        %v1762 = vpop.f32.mrb[0].mxu0
        %v1763 = vadd.f32 %v1637, %v1762
        %v1764 = vpop.f32.mrb[0].mxu0
        %v1765 = vadd.f32 %v1641, %v1764
        %1766 = vmatprep.mubr.bf16.mxu0 0
        %1767 = vmatmul.mubr.bf16.gmra.mrb[0].mxu0 %v1599
        %v1768 = vpop.f32.mrb[0].mxu0
        %v1769 = vadd.f32 %v1637, %v1768
        %v1770 = vpop.f32.mrb[0].mxu0
        %v1771 = vadd.f32 %v1641, %v1770
        %v1772 = vpop.f32.mrb[0].mxu0
        %v1773 = vadd.f32 %v1637, %v1772
        %v1774 = vpop.f32.mrb[0].mxu0
        %v1775 = vadd.f32 %v1641, %v1774
        %1776 = vmatprep.mubr.bf16.mxu0 0
        %1777 = vmatmul.mubr.bf16.gmra.mrb[0].mxu0 %v1600
        %v1778 = vpop.f32.mrb[0].mxu0
        %v1779 = vadd.f32 %v1637, %v1778
        %v1780 = vpop.f32.mrb[0].mxu0
        %v1781 = vadd.f32 %v1641, %v1780
        %v1782 = vpop.f32.mrb[0].mxu0
        %v1783 = vadd.f32 %v1637, %v1782
        %v1784 = vpop.f32.mrb[0].mxu0
        %v1785 = vadd.f32 %v1641, %v1784
        %1786 = vmatprep.mubr.bf16.mxu0 0
        %1787 = vmatmul.mubr.bf16.gmra.mrb[0].mxu0 %v1601
        %v1788 = vpop.f32.mrb[0].mxu0
        %v1789 = vadd.f32 %v1637, %v1788
        %v1790 = vpop.f32.mrb[0].mxu0
        %v1791 = vadd.f32 %v1641, %v1790
        %v1792 = vpop.f32.mrb[0].mxu0
        %v1793 = vadd.f32 %v1637, %v1792
        %v1794 = vpop.f32.mrb[0].mxu0
        %v1795 = vadd.f32 %v1641, %v1794
        %1796 = vmatprep.mubr.bf16.mxu0 0
        %1797 = vmatmul.mubr.bf16.gmra.mrb[0].mxu0 %v1602
        %v1798 = vpop.f32.mrb[0].mxu0
        %v1799 = vadd.f32 %v1637, %v1798
        %v1800 = vpop.f32.mrb[0].mxu0
        %v1801 = vadd.f32 %v1641, %v1800
        %v1802 = vpop.f32.mrb[0].mxu0
        %v1803 = vadd.f32 %v1637, %v1802
        %v1804 = vpop.f32.mrb[0].mxu0
        %v1805 = vadd.f32 %v1641, %v1804
        %1806 = vmatprep.mubr.bf16.mxu0 0
        %1807 = vmatmul.mubr.bf16.gmra.mrb[0].mxu0 %v1603
        %v1808 = vpop.f32.mrb[0].mxu0
        %v1809 = vadd.f32 %v1637, %v1808
        %v1810 = vpop.f32.mrb[0].mxu0
        %v1811 = vadd.f32 %v1641, %v1810
        %v1812 = vpop.f32.mrb[0].mxu0
        %v1813 = vadd.f32 %v1637, %v1812
        %v1814 = vpop.f32.mrb[0].mxu0
        %v1815 = vadd.f32 %v1641, %v1814
        %1816 = vmatprep.mubr.bf16.mxu0 0
        %1817 = vmatmul.mubr.bf16.gmra.mrb[0].mxu0 %v1604
        %v1818 = vpop.f32.mrb[0].mxu0
        %v1819 = vadd.f32 %v1637, %v1818
        %v1820 = vpop.f32.mrb[0].mxu0
        %v1821 = vadd.f32 %v1641, %v1820
        %v1822 = vpop.f32.mrb[0].mxu0
        %v1823 = vadd.f32 %v1637, %v1822
        %v1824 = vpop.f32.mrb[0].mxu0
        %v1825 = vadd.f32 %v1641, %v1824
        %1826 = vmatprep.mubr.bf16.mxu0 0
        %1827 = vmatmul.mubr.bf16.gmra.mrb[0].mxu0 %v1605
        %v1828 = vpop.f32.mrb[0].mxu0
        %v1829 = vadd.f32 %v1637, %v1828
        %v1830 = vpop.f32.mrb[0].mxu0
        %v1831 = vadd.f32 %v1641, %v1830
        %v1832 = vpop.f32.mrb[0].mxu0
        %v1833 = vadd.f32 %v1637, %v1832
        %v1834 = vpop.f32.mrb[0].mxu0
        %v1835 = vadd.f32 %v1641, %v1834
        %1836 = vmatprep.mubr.bf16.mxu0 0
        %1837 = vmatmul.mubr.bf16.gmra.mrb[0].mxu0 %v1606
        %v1838 = vpop.f32.mrb[0].mxu0
        %v1839 = vadd.f32 %v1637, %v1838
        %v1840 = vpop.f32.mrb[0].mxu0
        %v1841 = vadd.f32 %v1641, %v1840
        %v1842 = vpop.f32.mrb[0].mxu0
        %v1843 = vadd.f32 %v1637, %v1842
        %v1844 = vpop.f32.mrb[0].mxu0
        %v1845 = vadd.f32 %v1641, %v1844
        %1846 = vmatprep.mubr.bf16.mxu0 0
        %1847 = vmatmul.mubr.bf16.gmra.mrb[0].mxu0 %v1607
        %v1848 = vpop.f32.mrb[0].mxu0
        %v1849 = vadd.f32 %v1637, %v1848
        %v1850 = vpop.f32.mrb[0].mxu0
        %v1851 = vadd.f32 %v1641, %v1850
        %v1852 = vpop.f32.mrb[0].mxu0
        %v1853 = vadd.f32 %v1637, %v1852
        %v1854 = vpop.f32.mrb[0].mxu0
        %v1855 = vadd.f32 %v1641, %v1854
        %1856 = vmatprep.mubr.bf16.mxu0 0
        %1857 = vmatmul.mubr.bf16.gmra.mrb[0].mxu0 %v1608
        %v1858 = vpop.f32.mrb[0].mxu0
        %v1859 = vadd.f32 %v1637, %v1858
        %v1860 = vpop.f32.mrb[0].mxu0
        %v1861 = vadd.f32 %v1641, %v1860
        %v1862 = vpop.f32.mrb[0].mxu0
        %v1863 = vadd.f32 %v1637, %v1862
        %v1864 = vpop.f32.mrb[0].mxu0
        %v1865 = vadd.f32 %v1641, %v1864
        %1866 = vmatprep.mubr.bf16.mxu0 0
        %1867 = vmatmul.mubr.bf16.gmra.mrb[0].mxu0 %v1609
        %v1868 = vpop.f32.mrb[0].mxu0
        %v1869 = vadd.f32 %v1637, %v1868
        %v1870 = vpop.f32.mrb[0].mxu0
        %v1871 = vadd.f32 %v1641, %v1870
        %v1872 = vpop.f32.mrb[0].mxu0
        %v1873 = vadd.f32 %v1637, %v1872
        %v1874 = vpop.f32.mrb[0].mxu0
        %v1875 = vadd.f32 %v1641, %v1874
        %1876 = vmatprep.mubr.bf16.mxu0 0
        %1877 = vmatmul.mubr.bf16.gmra.mrb[0].mxu0 %v1610
        %v1878 = vpop.f32.mrb[0].mxu0
        %v1879 = vadd.f32 %v1637, %v1878
        %v1880 = vpop.f32.mrb[0].mxu0
        %v1881 = vadd.f32 %v1641, %v1880
        %v1882 = vpop.f32.mrb[0].mxu0
        %v1883 = vadd.f32 %v1637, %v1882
        %v1884 = vpop.f32.mrb[0].mxu0
        %v1885 = vadd.f32 %v1641, %v1884
        %1886 = vmatprep.mubr.bf16.mxu0 0
        %1887 = vmatmul.mubr.bf16.gmra.mrb[0].mxu0 %v1611
        %v1888 = vpop.f32.mrb[0].mxu0
        %v1889 = vadd.f32 %v1637, %v1888
        %v1890 = vpop.f32.mrb[0].mxu0
        %v1891 = vadd.f32 %v1641, %v1890
        %v1892 = vpop.f32.mrb[0].mxu0
        %v1893 = vadd.f32 %v1637, %v1892
        %v1894 = vpop.f32.mrb[0].mxu0
        %v1895 = vadd.f32 %v1641, %v1894
        %1896 = vmatprep.mubr.bf16.mxu0 0
        %1897 = vmatmul.mubr.bf16.gmra.mrb[0].mxu0 %v1612
        %v1898 = vpop.f32.mrb[0].mxu0
        %v1899 = vadd.f32 %v1637, %v1898
        %v1900 = vpop.f32.mrb[0].mxu0
        %v1901 = vadd.f32 %v1641, %v1900
        %v1902 = vpop.f32.mrb[0].mxu0
        %v1903 = vadd.f32 %v1637, %v1902
        %v1904 = vpop.f32.mrb[0].mxu0
        %v1905 = vadd.f32 %v1641, %v1904
        %1906 = vmatprep.mubr.bf16.mxu0 0
        %1907 = vmatmul.mubr.bf16.gmra.mrb[0].mxu0 %v1613
        %v1908 = vpop.f32.mrb[0].mxu0
        %v1909 = vadd.f32 %v1637, %v1908
        %v1910 = vpop.f32.mrb[0].mxu0
        %v1911 = vadd.f32 %v1641, %v1910
        %v1912 = vpop.f32.mrb[0].mxu0
        %v1913 = vadd.f32 %v1637, %v1912
        %v1914 = vpop.f32.mrb[0].mxu0
        %v1915 = vadd.f32 %v1641, %v1914
        %1916 = vdwg.mxu0
        %v1917 = vtanh.pop %v1759
        %v1918 = vtanh.pop %v1763
        %v1919 = vtanh.pop %v1769
        %v1920 = vtanh.pop %v1773
        %v1921 = vtanh.pop %v1779
        %v1922 = vtanh.pop %v1783
        %v1923 = vtanh.pop %v1789
        %v1924 = vtanh.pop %v1793
        %v1925 = vtanh.pop %v1799
        %v1926 = vtanh.pop %v1803
        %v1927 = vtanh.pop %v1809
        %v1928 = vtanh.pop %v1813
        %v1929 = vtanh.pop %v1819
        %v1930 = vtanh.pop %v1823
        %v1931 = vtanh.pop %v1829
        %v1932 = vtanh.pop %v1833
        %v1933 = vtanh.pop %v1839
        %v1934 = vtanh.pop %v1843
        %v1935 = vtanh.pop %v1849
        %v1936 = vtanh.pop %v1853
        %v1937 = vtanh.pop %v1859
        %v1938 = vtanh.pop %v1863
        %v1939 = vtanh.pop %v1869
        %v1940 = vtanh.pop %v1873
        %v1941 = vtanh.pop %v1879
        %v1942 = vtanh.pop %v1883
        %v1943 = vtanh.pop %v1889
        %v1944 = vtanh.pop %v1893
        %v1945 = vtanh.pop %v1899
        %v1946 = vtanh.pop %v1903
        %v1947 = vtanh.pop %v1909
        %v1948 = vtanh.pop %v1913
        %v1949 = vmul.f32 %v1917, 1.442695
        %v1950 = vpow.pop %v1949
        %v1951 = vmul.f32 %v1918, 1.442695
        %v1952 = vpow.pop %v1951
        %v1953 = vmul.f32 %v1919, 1.442695
        %v1954 = vpow.pop %v1953
        %v1955 = vmul.f32 %v1920, 1.442695
        %v1956 = vpow.pop %v1955
        %v1957 = vmul.f32 %v1921, 1.442695
        %v1958 = vpow.pop %v1957
        %v1959 = vmul.f32 %v1922, 1.442695
        %v1960 = vpow.pop %v1959
        %v1961 = vmul.f32 %v1923, 1.442695
        %v1962 = vpow.pop %v1961
        %v1963 = vmul.f32 %v1924, 1.442695
        %v1964 = vpow.pop %v1963
        %v1965 = vmul.f32 %v1925, 1.442695
        %v1966 = vpow.pop %v1965
        %v1967 = vmul.f32 %v1926, 1.442695
        %v1968 = vpow.pop %v1967
        %v1969 = vmul.f32 %v1927, 1.442695
        %v1970 = vpow.pop %v1969
        %v1971 = vmul.f32 %v1928, 1.442695
        %v1972 = vpow.pop %v1971
        %v1973 = vmul.f32 %v1929, 1.442695
        %v1974 = vpow.pop %v1973
        %v1975 = vmul.f32 %v1930, 1.442695
        %v1976 = vpow.pop %v1975
        %v1977 = vmul.f32 %v1931, 1.442695
        %v1978 = vpow.pop %v1977
        %v1979 = vmul.f32 %v1932, 1.442695
        %v1980 = vpow.pop %v1979
        %v1981 = vmul.f32 %v1933, 1.442695
        %v1982 = vpow.pop %v1981
        %v1983 = vmul.f32 %v1934, 1.442695
        %v1984 = vpow.pop %v1983
        %v1985 = vmul.f32 %v1935, 1.442695
        %v1986 = vpow.pop %v1985
        %v1987 = vmul.f32 %v1936, 1.442695
        %v1988 = vpow.pop %v1987
        %v1989 = vmul.f32 %v1937, 1.442695
        %v1990 = vpow.pop %v1989
        %v1991 = vmul.f32 %v1938, 1.442695
        %v1992 = vpow.pop %v1991
        %v1993 = vmul.f32 %v1939, 1.442695
        %v1994 = vpow.pop %v1993
        %v1995 = vmul.f32 %v1940, 1.442695
        %v1996 = vpow.pop %v1995
        %v1997 = vmul.f32 %v1941, 1.442695
        %v1998 = vpow.pop %v1997
        %v1999 = vmul.f32 %v1942, 1.442695
        %v2000 = vpow.pop %v1999
        %v2001 = vmul.f32 %v1943, 1.442695
        %v2002 = vpow.pop %v2001
        %v2003 = vmul.f32 %v1944, 1.442695
        %v2004 = vpow.pop %v2003
        %v2005 = vmul.f32 %v1945, 1.442695
        %v2006 = vpow.pop %v2005
        %v2007 = vmul.f32 %v1946, 1.442695
        %v2008 = vpow.pop %v2007
        %v2009 = vmul.f32 %v1947, 1.442695
        %v2010 = vpow.pop %v2009
        %v2011 = vmul.f32 %v1948, 1.442695
        %v2012 = vpow.pop %v2011
        %v2013 = vmul.f32 %v367, %v1950
        %v2014 = vmul.f32 %v368, %v1952
        %v2015 = vmul.f32 %v369, %v1954
        %v2016 = vmul.f32 %v370, %v1956
        %v2017 = vmul.f32 %v371, %v1958
        %v2018 = vmul.f32 %v372, %v1960
        %v2019 = vmul.f32 %v373, %v1962
        %v2020 = vmul.f32 %v374, %v1964
        %v2021 = vmul.f32 %v375, %v1966
        %v2022 = vmul.f32 %v376, %v1968
        %v2023 = vmul.f32 %v377, %v1970
        %v2024 = vmul.f32 %v378, %v1972
        %v2025 = vmul.f32 %v379, %v1974
        %v2026 = vmul.f32 %v380, %v1976
        %v2027 = vmul.f32 %v381, %v1978
        %v2028 = vmul.f32 %v382, %v1980
        %v2029 = vmul.f32 %v383, %v1982
        %v2030 = vmul.f32 %v384, %v1984
        %v2031 = vmul.f32 %v385, %v1986
        %v2032 = vmul.f32 %v386, %v1988
        %v2033 = vmul.f32 %v387, %v1990
        %v2034 = vmul.f32 %v388, %v1992
        %v2035 = vmul.f32 %v389, %v1994
        %v2036 = vmul.f32 %v390, %v1996
        %v2037 = vmul.f32 %v391, %v1998
        %v2038 = vmul.f32 %v392, %v2000
        %v2039 = vmul.f32 %v393, %v2002
        %v2040 = vmul.f32 %v394, %v2004
        %v2041 = vmul.f32 %v395, %v2006
        %v2042 = vmul.f32 %v396, %v2008
        %v2043 = vmul.f32 %v397, %v2010
        %v2044 = vmul.f32 %v398, %v2012
        %v2045 = vadd.f32 %v2013, %v1761
        %v2046 = vadd.f32 %v2014, %v1765
        %v2047 = vadd.f32 %v2015, %v1771
        %v2048 = vadd.f32 %v2016, %v1775
        %v2049 = vadd.f32 %v2017, %v1781
        %v2050 = vadd.f32 %v2018, %v1785
        %v2051 = vadd.f32 %v2019, %v1791
        %v2052 = vadd.f32 %v2020, %v1795
        %v2053 = vadd.f32 %v2021, %v1801
        %v2054 = vadd.f32 %v2022, %v1805
        %v2055 = vadd.f32 %v2023, %v1811
        %v2056 = vadd.f32 %v2024, %v1815
        %v2057 = vadd.f32 %v2025, %v1821
        %v2058 = vadd.f32 %v2026, %v1825
        %v2059 = vadd.f32 %v2027, %v1831
        %v2060 = vadd.f32 %v2028, %v1835
        %v2061 = vadd.f32 %v2029, %v1841
        %v2062 = vadd.f32 %v2030, %v1845
        %v2063 = vadd.f32 %v2031, %v1851
        %v2064 = vadd.f32 %v2032, %v1855
        %v2065 = vadd.f32 %v2033, %v1861
        %v2066 = vadd.f32 %v2034, %v1865
        %v2067 = vadd.f32 %v2035, %v1871
        %v2068 = vadd.f32 %v2036, %v1875
        %v2069 = vadd.f32 %v2037, %v1881
        %v2070 = vadd.f32 %v2038, %v1885
        %v2071 = vadd.f32 %v2039, %v1891
        %v2072 = vadd.f32 %v2040, %v1895
        %v2073 = vadd.f32 %v2041, %v1901
        %v2074 = vadd.f32 %v2042, %v1905
        %v2075 = vadd.f32 %v2043, %v1911
        %v2076 = vadd.f32 %v2044, %v1915
        %2077 = vadd.xlane.f32.xlu0 %v1917
        %v2078 = vpop.xlane.xlu0 %2077
        %2079 = vadd.xlane.f32.xlu0 %v1918
        %v2080 = vpop.xlane.xlu0 %2079
        %2081 = vadd.xlane.f32.xlu0 %v1919
        %v2082 = vpop.xlane.xlu0 %2081
        %2083 = vadd.xlane.f32.xlu0 %v1920
        %v2084 = vpop.xlane.xlu0 %2083
        %2085 = vadd.xlane.f32.xlu0 %v1921
        %v2086 = vpop.xlane.xlu0 %2085
        %2087 = vadd.xlane.f32.xlu0 %v1922
        %v2088 = vpop.xlane.xlu0 %2087
        %2089 = vadd.xlane.f32.xlu0 %v1923
        %v2090 = vpop.xlane.xlu0 %2089
        %2091 = vadd.xlane.f32.xlu0 %v1924
        %v2092 = vpop.xlane.xlu0 %2091
        %2093 = vadd.xlane.f32.xlu0 %v1925
        %v2094 = vpop.xlane.xlu0 %2093
        %2095 = vadd.xlane.f32.xlu0 %v1926
        %v2096 = vpop.xlane.xlu0 %2095
        %2097 = vadd.xlane.f32.xlu0 %v1927
        %v2098 = vpop.xlane.xlu0 %2097
        %2099 = vadd.xlane.f32.xlu0 %v1928
        %v2100 = vpop.xlane.xlu0 %2099
        %2101 = vadd.xlane.f32.xlu0 %v1929
        %v2102 = vpop.xlane.xlu0 %2101
        %2103 = vadd.xlane.f32.xlu0 %v1930
        %v2104 = vpop.xlane.xlu0 %2103
        %2105 = vadd.xlane.f32.xlu0 %v1931
        %v2106 = vpop.xlane.xlu0 %2105
        %2107 = vadd.xlane.f32.xlu0 %v1932
        %v2108 = vpop.xlane.xlu0 %2107
        %2109 = vadd.xlane.f32.xlu0 %v1933
        %v2110 = vpop.xlane.xlu0 %2109
        %2111 = vadd.xlane.f32.xlu0 %v1934
        %v2112 = vpop.xlane.xlu0 %2111
        %2113 = vadd.xlane.f32.xlu0 %v1935
        %v2114 = vpop.xlane.xlu0 %2113
        %2115 = vadd.xlane.f32.xlu0 %v1936
        %v2116 = vpop.xlane.xlu0 %2115
        %2117 = vadd.xlane.f32.xlu0 %v1937
        %v2118 = vpop.xlane.xlu0 %2117
        %2119 = vadd.xlane.f32.xlu0 %v1938
        %v2120 = vpop.xlane.xlu0 %2119
        %2121 = vadd.xlane.f32.xlu0 %v1939
        %v2122 = vpop.xlane.xlu0 %2121
        %2123 = vadd.xlane.f32.xlu0 %v1940
        %v2124 = vpop.xlane.xlu0 %2123
        %2125 = vadd.xlane.f32.xlu0 %v1941
        %v2126 = vpop.xlane.xlu0 %2125
        %2127 = vadd.xlane.f32.xlu0 %v1942
        %v2128 = vpop.xlane.xlu0 %2127
        %2129 = vadd.xlane.f32.xlu0 %v1943
        %v2130 = vpop.xlane.xlu0 %2129
        %2131 = vadd.xlane.f32.xlu0 %v1944
        %v2132 = vpop.xlane.xlu0 %2131
        %2133 = vadd.xlane.f32.xlu0 %v1945
        %v2134 = vpop.xlane.xlu0 %2133
        %2135 = vadd.xlane.f32.xlu0 %v1946
        %v2136 = vpop.xlane.xlu0 %2135
        %2137 = vadd.xlane.f32.xlu0 %v1947
        %v2138 = vpop.xlane.xlu0 %2137
        %2139 = vadd.xlane.f32.xlu0 %v1948
        %v2140 = vpop.xlane.xlu0 %2139
        %v2141 = vadd.f32 %v1284, %v2078
        %v2142 = vadd.f32 %v1285, %v2080
        %v2143 = vadd.f32 %v1286, %v2082
        %v2144 = vadd.f32 %v1287, %v2084
        %v2145 = vadd.f32 %v1288, %v2086
        %v2146 = vadd.f32 %v1289, %v2088
        %v2147 = vadd.f32 %v1290, %v2090
        %v2148 = vadd.f32 %v1291, %v2092
        %v2149 = vadd.f32 %v1292, %v2094
        %v2150 = vadd.f32 %v1293, %v2096
        %v2151 = vadd.f32 %v1294, %v2098
        %v2152 = vadd.f32 %v1295, %v2100
        %v2153 = vadd.f32 %v1296, %v2102
        %v2154 = vadd.f32 %v1297, %v2104
        %v2155 = vadd.f32 %v1298, %v2106
        %v2156 = vadd.f32 %v1299, %v2108
        %v2157 = vadd.f32 %v1300, %v2110
        %v2158 = vadd.f32 %v1301, %v2112
        %v2159 = vadd.f32 %v1302, %v2114
        %v2160 = vadd.f32 %v1303, %v2116
        %v2161 = vadd.f32 %v1304, %v2118
        %v2162 = vadd.f32 %v1305, %v2120
        %v2163 = vadd.f32 %v1306, %v2122
        %v2164 = vadd.f32 %v1307, %v2124
        %v2165 = vadd.f32 %v1308, %v2126
        %v2166 = vadd.f32 %v1309, %v2128
        %v2167 = vadd.f32 %v1310, %v2130
        %v2168 = vadd.f32 %v1311, %v2132
        %v2169 = vadd.f32 %v1312, %v2134
        %v2170 = vadd.f32 %v1313, %v2136
        %v2171 = vadd.f32 %v1314, %v2138
        %v2172 = vadd.f32 %v1315, %v2140
        %v2173 = vpack.c.bf16 %v2046, %v2045
        %v2174 = vpack.c.bf16 %v2048, %v2047
        %v2175 = vpack.c.bf16 %v2050, %v2049
        %v2176 = vpack.c.bf16 %v2052, %v2051
        %v2177 = vpack.c.bf16 %v2054, %v2053
        %v2178 = vpack.c.bf16 %v2056, %v2055
        %v2179 = vpack.c.bf16 %v2058, %v2057
        %v2180 = vpack.c.bf16 %v2060, %v2059
        %v2181 = vpack.c.bf16 %v2062, %v2061
        %v2182 = vpack.c.bf16 %v2064, %v2063
        %v2183 = vpack.c.bf16 %v2066, %v2065
        %v2184 = vpack.c.bf16 %v2068, %v2067
        %v2185 = vpack.c.bf16 %v2070, %v2069
        %v2186 = vpack.c.bf16 %v2072, %v2071
        %v2187 = vpack.c.bf16 %v2074, %v2073
        %v2188 = vpack.c.bf16 %v2076, %v2075
        %s2189 = scalar_lea.vmem %s1, 128
        %v2190 = vld [vmem:[%s2189] sm:$0xf]
        %v2191 = vld [vmem:[%s2189 + $0x4] sm:$0xf]
        %v2192 = vld [vmem:[%s2189 + $0x8] sm:$0xf]
        %v2193 = vld [vmem:[%s2189 + $0xc] sm:$0xf]
        %v2194 = vld [vmem:[%s2189 + $0x10] sm:$0xf]
        %v2195 = vld [vmem:[%s2189 + $0x14] sm:$0xf]
        %v2196 = vld [vmem:[%s2189 + $0x18] sm:$0xf]
        %v2197 = vld [vmem:[%s2189 + $0x1c] sm:$0xf]
        %v2198 = vld [vmem:[%s2189 + $0x20] sm:$0xf]
        %v2199 = vld [vmem:[%s2189 + $0x24] sm:$0xf]
        %v2200 = vld [vmem:[%s2189 + $0x28] sm:$0xf]
        %v2201 = vld [vmem:[%s2189 + $0x2c] sm:$0xf]
        %v2202 = vld [vmem:[%s2189 + $0x30] sm:$0xf]
        %v2203 = vld [vmem:[%s2189 + $0x34] sm:$0xf]
        %v2204 = vld [vmem:[%s2189 + $0x38] sm:$0xf]
        %v2205 = vld [vmem:[%s2189 + $0x3c] sm:$0xf]
        %s2206 = scalar_lea.vmem %s2, 2
        %v2207 = vld [vmem:[%s2206] sm:$0x1]
        %v2209 = vlaneseq
        %v2210 = vshrl.u32 %v2209, 7
        %v2211 = vsub.s32 0, %v2210
        %v2212 = vrot.slane %v2207, %v2211
        %v2230 = vunpack.c.l.b16 %v2190
        %v2231 = vunpack.c.l.b16 %v2191
        %v2232 = vunpack.c.l.b16 %v2192
        %v2233 = vunpack.c.l.b16 %v2193
        %v2234 = vunpack.c.l.b16 %v2194
        %v2235 = vunpack.c.l.b16 %v2195
        %v2236 = vunpack.c.l.b16 %v2196
        %v2237 = vunpack.c.l.b16 %v2197
        %v2238 = vunpack.c.l.b16 %v2198
        %v2239 = vunpack.c.l.b16 %v2199
        %v2240 = vunpack.c.l.b16 %v2200
        %v2241 = vunpack.c.l.b16 %v2201
        %v2242 = vunpack.c.l.b16 %v2202
        %v2243 = vunpack.c.l.b16 %v2203
        %v2244 = vunpack.c.l.b16 %v2204
        %v2245 = vunpack.c.l.b16 %v2205
        %v2246 = vpack.c.b16 %v2231, %v2230
        %v2247 = vpack.c.b16 %v2233, %v2232
        %v2248 = vpack.c.b16 %v2235, %v2234
        %v2249 = vpack.c.b16 %v2237, %v2236
        %v2250 = vpack.c.b16 %v2239, %v2238
        %v2251 = vpack.c.b16 %v2241, %v2240
        %v2252 = vpack.c.b16 %v2243, %v2242
        %v2253 = vpack.c.b16 %v2245, %v2244
        %2262 = vmatprep.subr.bf16.mxu0 0
        %2263 = vmatpush1.bf16.msra.mxu0 %v2246
        %2264 = vmatprep.subr.bf16.mxu0 0
        %2265 = vmatpush1.bf16.msra.mxu0 %v2247
        %2266 = vmatprep.subr.bf16.mxu0 0
        %2267 = vmatpush1.bf16.msra.mxu0 %v2248
        %2268 = vmatprep.subr.bf16.mxu0 0
        %2269 = vmatpush1.bf16.msra.mxu0 %v2249
        %2270 = vmatprep.subr.bf16.mxu0 0
        %2271 = vmatpush1.bf16.msra.mxu0 %v2250
        %2272 = vmatprep.subr.bf16.mxu0 0
        %2273 = vmatpush1.bf16.msra.mxu0 %v2251
        %2274 = vmatprep.subr.bf16.mxu0 0
        %2275 = vmatpush1.bf16.msra.mxu0 %v2252
        %2276 = vmatprep.subr.bf16.mxu0 0
        %2277 = vmatpush1.bf16.msra.mxu0 %v2253
        %2278 = vmatprep.subr.bf16.mxu0 0
        %2279 = vmatpush1.bf16.msra.mxu0 0
        %2280 = vmatprep.subr.bf16.mxu0 0
        %2281 = vmatpush1.bf16.msra.mxu0 0
        %2282 = vmatprep.subr.bf16.mxu0 0
        %2283 = vmatpush1.bf16.msra.mxu0 0
        %2284 = vmatprep.subr.bf16.mxu0 0
        %2285 = vmatpush1.bf16.msra.mxu0 0
        %2286 = vmatprep.subr.bf16.mxu0 0
        %2287 = vmatpush1.bf16.msra.mxu0 0
        %2288 = vmatprep.subr.bf16.mxu0 0
        %2289 = vmatpush1.bf16.msra.mxu0 0
        %2290 = vmatprep.subr.bf16.mxu0 0
        %2291 = vmatpush1.bf16.msra.mxu0 0
        %2292 = vmatprep.subr.bf16.mxu0 0
        %2293 = vmatpush1.bf16.msra.mxu0 0
        %2294 = vmatprep.mubr.bf16.mxu0 0
        %2295 = vmatmul.mubr.bf16.gmra.mrb[0].mxu0 %v2173
        %v2296 = vpop.f32.mrb[0].mxu0
        %v2297 = vadd.f32 %v2212, %v2296
        %v2298 = vpop.f32.mrb[0].mxu0
        %v2299 = vpop.f32.mrb[0].mxu0
        %v2300 = vadd.f32 %v2212, %v2299
        %v2301 = vpop.f32.mrb[0].mxu0
        %2302 = vmatprep.mubr.bf16.mxu0 0
        %2303 = vmatmul.mubr.bf16.gmra.mrb[0].mxu0 %v2174
        %v2304 = vpop.f32.mrb[0].mxu0
        %v2305 = vadd.f32 %v2212, %v2304
        %v2306 = vpop.f32.mrb[0].mxu0
        %v2307 = vpop.f32.mrb[0].mxu0
        %v2308 = vadd.f32 %v2212, %v2307
        %v2309 = vpop.f32.mrb[0].mxu0
        %2310 = vmatprep.mubr.bf16.mxu0 0
        %2311 = vmatmul.mubr.bf16.gmra.mrb[0].mxu0 %v2175
        %v2312 = vpop.f32.mrb[0].mxu0
        %v2313 = vadd.f32 %v2212, %v2312
        %v2314 = vpop.f32.mrb[0].mxu0
        %v2315 = vpop.f32.mrb[0].mxu0
        %v2316 = vadd.f32 %v2212, %v2315
        %v2317 = vpop.f32.mrb[0].mxu0
        %2318 = vmatprep.mubr.bf16.mxu0 0
        %2319 = vmatmul.mubr.bf16.gmra.mrb[0].mxu0 %v2176
        %v2320 = vpop.f32.mrb[0].mxu0
        %v2321 = vadd.f32 %v2212, %v2320
        %v2322 = vpop.f32.mrb[0].mxu0
        %v2323 = vpop.f32.mrb[0].mxu0
        %v2324 = vadd.f32 %v2212, %v2323
        %v2325 = vpop.f32.mrb[0].mxu0
        %2326 = vmatprep.mubr.bf16.mxu0 0
        %2327 = vmatmul.mubr.bf16.gmra.mrb[0].mxu0 %v2177
        %v2328 = vpop.f32.mrb[0].mxu0
        %v2329 = vadd.f32 %v2212, %v2328
        %v2330 = vpop.f32.mrb[0].mxu0
        %v2331 = vpop.f32.mrb[0].mxu0
        %v2332 = vadd.f32 %v2212, %v2331
        %v2333 = vpop.f32.mrb[0].mxu0
        %2334 = vmatprep.mubr.bf16.mxu0 0
        %2335 = vmatmul.mubr.bf16.gmra.mrb[0].mxu0 %v2178
        %v2336 = vpop.f32.mrb[0].mxu0
        %v2337 = vadd.f32 %v2212, %v2336
        %v2338 = vpop.f32.mrb[0].mxu0
        %v2339 = vpop.f32.mrb[0].mxu0
        %v2340 = vadd.f32 %v2212, %v2339
        %v2341 = vpop.f32.mrb[0].mxu0
        %2342 = vmatprep.mubr.bf16.mxu0 0
        %2343 = vmatmul.mubr.bf16.gmra.mrb[0].mxu0 %v2179
        %v2344 = vpop.f32.mrb[0].mxu0
        %v2345 = vadd.f32 %v2212, %v2344
        %v2346 = vpop.f32.mrb[0].mxu0
        %v2347 = vpop.f32.mrb[0].mxu0
        %v2348 = vadd.f32 %v2212, %v2347
        %v2349 = vpop.f32.mrb[0].mxu0
        %2350 = vmatprep.mubr.bf16.mxu0 0
        %2351 = vmatmul.mubr.bf16.gmra.mrb[0].mxu0 %v2180
        %v2352 = vpop.f32.mrb[0].mxu0
        %v2353 = vadd.f32 %v2212, %v2352
        %v2354 = vpop.f32.mrb[0].mxu0
        %v2355 = vpop.f32.mrb[0].mxu0
        %v2356 = vadd.f32 %v2212, %v2355
        %v2357 = vpop.f32.mrb[0].mxu0
        %2358 = vmatprep.mubr.bf16.mxu0 0
        %2359 = vmatmul.mubr.bf16.gmra.mrb[0].mxu0 %v2181
        %v2360 = vpop.f32.mrb[0].mxu0
        %v2361 = vadd.f32 %v2212, %v2360
        %v2362 = vpop.f32.mrb[0].mxu0
        %v2363 = vpop.f32.mrb[0].mxu0
        %v2364 = vadd.f32 %v2212, %v2363
        %v2365 = vpop.f32.mrb[0].mxu0
        %2366 = vmatprep.mubr.bf16.mxu0 0
        %2367 = vmatmul.mubr.bf16.gmra.mrb[0].mxu0 %v2182
        %v2368 = vpop.f32.mrb[0].mxu0
        %v2369 = vadd.f32 %v2212, %v2368
        %v2370 = vpop.f32.mrb[0].mxu0
        %v2371 = vpop.f32.mrb[0].mxu0
        %v2372 = vadd.f32 %v2212, %v2371
        %v2373 = vpop.f32.mrb[0].mxu0
        %2374 = vmatprep.mubr.bf16.mxu0 0
        %2375 = vmatmul.mubr.bf16.gmra.mrb[0].mxu0 %v2183
        %v2376 = vpop.f32.mrb[0].mxu0
        %v2377 = vadd.f32 %v2212, %v2376
        %v2378 = vpop.f32.mrb[0].mxu0
        %v2379 = vpop.f32.mrb[0].mxu0
        %v2380 = vadd.f32 %v2212, %v2379
        %v2381 = vpop.f32.mrb[0].mxu0
        %2382 = vmatprep.mubr.bf16.mxu0 0
        %2383 = vmatmul.mubr.bf16.gmra.mrb[0].mxu0 %v2184
        %v2384 = vpop.f32.mrb[0].mxu0
        %v2385 = vadd.f32 %v2212, %v2384
        %v2386 = vpop.f32.mrb[0].mxu0
        %v2387 = vpop.f32.mrb[0].mxu0
        %v2388 = vadd.f32 %v2212, %v2387
        %v2389 = vpop.f32.mrb[0].mxu0
        %2390 = vmatprep.mubr.bf16.mxu0 0
        %2391 = vmatmul.mubr.bf16.gmra.mrb[0].mxu0 %v2185
        %v2392 = vpop.f32.mrb[0].mxu0
        %v2393 = vadd.f32 %v2212, %v2392
        %v2394 = vpop.f32.mrb[0].mxu0
        %v2395 = vpop.f32.mrb[0].mxu0
        %v2396 = vadd.f32 %v2212, %v2395
        %v2397 = vpop.f32.mrb[0].mxu0
        %2398 = vmatprep.mubr.bf16.mxu0 0
        %2399 = vmatmul.mubr.bf16.gmra.mrb[0].mxu0 %v2186
        %v2400 = vpop.f32.mrb[0].mxu0
        %v2401 = vadd.f32 %v2212, %v2400
        %v2402 = vpop.f32.mrb[0].mxu0
        %v2403 = vpop.f32.mrb[0].mxu0
        %v2404 = vadd.f32 %v2212, %v2403
        %v2405 = vpop.f32.mrb[0].mxu0
        %2406 = vmatprep.mubr.bf16.mxu0 0
        %2407 = vmatmul.mubr.bf16.gmra.mrb[0].mxu0 %v2187
        %v2408 = vpop.f32.mrb[0].mxu0
        %v2409 = vadd.f32 %v2212, %v2408
        %v2410 = vpop.f32.mrb[0].mxu0
        %v2411 = vpop.f32.mrb[0].mxu0
        %v2412 = vadd.f32 %v2212, %v2411
        %v2413 = vpop.f32.mrb[0].mxu0
        %2414 = vmatprep.mubr.bf16.mxu0 0
        %2415 = vmatmul.mubr.bf16.gmra.mrb[0].mxu0 %v2188
        %v2416 = vpop.f32.mrb[0].mxu0
        %v2417 = vadd.f32 %v2212, %v2416
        %v2418 = vpop.f32.mrb[0].mxu0
        %v2419 = vpop.f32.mrb[0].mxu0
        %v2420 = vadd.f32 %v2212, %v2419
        %v2421 = vpop.f32.mrb[0].mxu0
        %2422 = vdwg.mxu0
        %v2423 = vtanh.pop %v2297
        %v2424 = vtanh.pop %v2300
        %v2425 = vtanh.pop %v2305
        %v2426 = vtanh.pop %v2308
        %v2427 = vtanh.pop %v2313
        %v2428 = vtanh.pop %v2316
        %v2429 = vtanh.pop %v2321
        %v2430 = vtanh.pop %v2324
        %v2431 = vtanh.pop %v2329
        %v2432 = vtanh.pop %v2332
        %v2433 = vtanh.pop %v2337
        %v2434 = vtanh.pop %v2340
        %v2435 = vtanh.pop %v2345
        %v2436 = vtanh.pop %v2348
        %v2437 = vtanh.pop %v2353
        %v2438 = vtanh.pop %v2356
        %v2439 = vtanh.pop %v2361
        %v2440 = vtanh.pop %v2364
        %v2441 = vtanh.pop %v2369
        %v2442 = vtanh.pop %v2372
        %v2443 = vtanh.pop %v2377
        %v2444 = vtanh.pop %v2380
        %v2445 = vtanh.pop %v2385
        %v2446 = vtanh.pop %v2388
        %v2447 = vtanh.pop %v2393
        %v2448 = vtanh.pop %v2396
        %v2449 = vtanh.pop %v2401
        %v2450 = vtanh.pop %v2404
        %v2451 = vtanh.pop %v2409
        %v2452 = vtanh.pop %v2412
        %v2453 = vtanh.pop %v2417
        %v2454 = vtanh.pop %v2420
        %v2455 = vpack.c.bf16 %v2424, %v2423
        %v2456 = vpack.c.bf16 %v2426, %v2425
        %v2457 = vpack.c.bf16 %v2428, %v2427
        %v2458 = vpack.c.bf16 %v2430, %v2429
        %v2459 = vpack.c.bf16 %v2432, %v2431
        %v2460 = vpack.c.bf16 %v2434, %v2433
        %v2461 = vpack.c.bf16 %v2436, %v2435
        %v2462 = vpack.c.bf16 %v2438, %v2437
        %v2463 = vpack.c.bf16 %v2440, %v2439
        %v2464 = vpack.c.bf16 %v2442, %v2441
        %v2465 = vpack.c.bf16 %v2444, %v2443
        %v2466 = vpack.c.bf16 %v2446, %v2445
        %v2467 = vpack.c.bf16 %v2448, %v2447
        %v2468 = vpack.c.bf16 %v2450, %v2449
        %v2469 = vpack.c.bf16 %v2452, %v2451
        %v2470 = vpack.c.bf16 %v2454, %v2453
        %s2471 = scalar_lea.vmem %s3, 256
        %v2472 = vld [vmem:[%s2471] sm:$0xff]
        %v2473 = vld [vmem:[%s2471 + $0x8] sm:$0xff]
        %v2474 = vld [vmem:[%s2471 + $0x10] sm:$0xff]
        %v2475 = vld [vmem:[%s2471 + $0x18] sm:$0xff]
        %v2476 = vld [vmem:[%s2471 + $0x20] sm:$0xff]
        %v2477 = vld [vmem:[%s2471 + $0x28] sm:$0xff]
        %v2478 = vld [vmem:[%s2471 + $0x30] sm:$0xff]
        %v2479 = vld [vmem:[%s2471 + $0x38] sm:$0xff]
        %v2480 = vld [vmem:[%s2471 + $0x40] sm:$0xff]
        %v2481 = vld [vmem:[%s2471 + $0x48] sm:$0xff]
        %v2482 = vld [vmem:[%s2471 + $0x50] sm:$0xff]
        %v2483 = vld [vmem:[%s2471 + $0x58] sm:$0xff]
        %v2484 = vld [vmem:[%s2471 + $0x60] sm:$0xff]
        %v2485 = vld [vmem:[%s2471 + $0x68] sm:$0xff]
        %v2486 = vld [vmem:[%s2471 + $0x70] sm:$0xff]
        %v2487 = vld [vmem:[%s2471 + $0x78] sm:$0xff]
        %s2488 = scalar_lea.vmem %s4, 4
        %v2489 = vld [vmem:[%s2488] sm:$0x3]
        %v2491 = vlaneseq
        %v2492 = vshrl.u32 %v2491, 7
        %v2493 = vsub.s32 0, %v2492
        %v2494 = vrot.slane %v2489, %v2493
        %v2495 = vlaneseq
        %v2496 = vshrl.u32 %v2495, 7
        %v2497 = vsub.s32 1, %v2496
        %v2498 = vrot.slane %v2489, %v2497
        %v2517 = vunpack.c.l.b16 %v2472
        %v2518 = vunpack.c.h.b16 %v2472
        %v2519 = vunpack.c.l.b16 %v2473
        %v2520 = vunpack.c.h.b16 %v2473
        %v2521 = vunpack.c.l.b16 %v2474
        %v2522 = vunpack.c.h.b16 %v2474
        %v2523 = vunpack.c.l.b16 %v2475
        %v2524 = vunpack.c.h.b16 %v2475
        %v2525 = vunpack.c.l.b16 %v2476
        %v2526 = vunpack.c.h.b16 %v2476
        %v2527 = vunpack.c.l.b16 %v2477
        %v2528 = vunpack.c.h.b16 %v2477
        %v2529 = vunpack.c.l.b16 %v2478
        %v2530 = vunpack.c.h.b16 %v2478
        %v2531 = vunpack.c.l.b16 %v2479
        %v2532 = vunpack.c.h.b16 %v2479
        %v2533 = vunpack.c.l.b16 %v2480
        %v2534 = vunpack.c.h.b16 %v2480
        %v2535 = vunpack.c.l.b16 %v2481
        %v2536 = vunpack.c.h.b16 %v2481
        %v2537 = vunpack.c.l.b16 %v2482
        %v2538 = vunpack.c.h.b16 %v2482
        %v2539 = vunpack.c.l.b16 %v2483
        %v2540 = vunpack.c.h.b16 %v2483
        %v2541 = vunpack.c.l.b16 %v2484
        %v2542 = vunpack.c.h.b16 %v2484
        %v2543 = vunpack.c.l.b16 %v2485
        %v2544 = vunpack.c.h.b16 %v2485
        %v2545 = vunpack.c.l.b16 %v2486
        %v2546 = vunpack.c.h.b16 %v2486
        %v2547 = vunpack.c.l.b16 %v2487
        %v2548 = vunpack.c.h.b16 %v2487
        %v2549 = vpack.c.b16 %v2519, %v2517
        %v2550 = vpack.c.b16 %v2520, %v2518
        %v2551 = vpack.c.b16 %v2523, %v2521
        %v2552 = vpack.c.b16 %v2524, %v2522
        %v2553 = vpack.c.b16 %v2527, %v2525
        %v2554 = vpack.c.b16 %v2528, %v2526
        %v2555 = vpack.c.b16 %v2531, %v2529
        %v2556 = vpack.c.b16 %v2532, %v2530
        %v2557 = vpack.c.b16 %v2535, %v2533
        %v2558 = vpack.c.b16 %v2536, %v2534
        %v2559 = vpack.c.b16 %v2539, %v2537
        %v2560 = vpack.c.b16 %v2540, %v2538
        %v2561 = vpack.c.b16 %v2543, %v2541
        %v2562 = vpack.c.b16 %v2544, %v2542
        %v2563 = vpack.c.b16 %v2547, %v2545
        %v2564 = vpack.c.b16 %v2548, %v2546
        %2581 = vmatprep.subr.bf16.mxu0 %v2550
        %2582 = vmatpush1.bf16.msra.mxu0 %v2549
        %2583 = vmatprep.subr.bf16.mxu0 %v2552
        %2584 = vmatpush1.bf16.msra.mxu0 %v2551
        %2585 = vmatprep.subr.bf16.mxu0 %v2554
        %2586 = vmatpush1.bf16.msra.mxu0 %v2553
        %2587 = vmatprep.subr.bf16.mxu0 %v2556
        %2588 = vmatpush1.bf16.msra.mxu0 %v2555
        %2589 = vmatprep.subr.bf16.mxu0 %v2558
        %2590 = vmatpush1.bf16.msra.mxu0 %v2557
        %2591 = vmatprep.subr.bf16.mxu0 %v2560
        %2592 = vmatpush1.bf16.msra.mxu0 %v2559
        %2593 = vmatprep.subr.bf16.mxu0 %v2562
        %2594 = vmatpush1.bf16.msra.mxu0 %v2561
        %2595 = vmatprep.subr.bf16.mxu0 %v2564
        %2596 = vmatpush1.bf16.msra.mxu0 %v2563
        %2597 = vmatprep.subr.bf16.mxu0 0
        %2598 = vmatpush1.bf16.msra.mxu0 0
        %2599 = vmatprep.subr.bf16.mxu0 0
        %2600 = vmatpush1.bf16.msra.mxu0 0
        %2601 = vmatprep.subr.bf16.mxu0 0
        %2602 = vmatpush1.bf16.msra.mxu0 0
        %2603 = vmatprep.subr.bf16.mxu0 0
        %2604 = vmatpush1.bf16.msra.mxu0 0
        %2605 = vmatprep.subr.bf16.mxu0 0
        %2606 = vmatpush1.bf16.msra.mxu0 0
        %2607 = vmatprep.subr.bf16.mxu0 0
        %2608 = vmatpush1.bf16.msra.mxu0 0
        %2609 = vmatprep.subr.bf16.mxu0 0
        %2610 = vmatpush1.bf16.msra.mxu0 0
        %2611 = vmatprep.subr.bf16.mxu0 0
        %2612 = vmatpush1.bf16.msra.mxu0 0
        %2613 = vmatprep.mubr.bf16.mxu0 0
        %2614 = vmatmul.mubr.bf16.gmra.mrb[0].mxu0 %v2455
        %v2615 = vpop.f32.mrb[0].mxu0
        %v2616 = vadd.f32 %v2494, %v2615
        %v2617 = vpop.f32.mrb[0].mxu0
        %v2618 = vadd.f32 %v2498, %v2617
        %v2619 = vpop.f32.mrb[0].mxu0
        %v2620 = vadd.f32 %v2494, %v2619
        %v2621 = vpop.f32.mrb[0].mxu0
        %v2622 = vadd.f32 %v2498, %v2621
        %2623 = vmatprep.mubr.bf16.mxu0 0
        %2624 = vmatmul.mubr.bf16.gmra.mrb[0].mxu0 %v2456
        %v2625 = vpop.f32.mrb[0].mxu0
        %v2626 = vadd.f32 %v2494, %v2625
        %v2627 = vpop.f32.mrb[0].mxu0
        %v2628 = vadd.f32 %v2498, %v2627
        %v2629 = vpop.f32.mrb[0].mxu0
        %v2630 = vadd.f32 %v2494, %v2629
        %v2631 = vpop.f32.mrb[0].mxu0
        %v2632 = vadd.f32 %v2498, %v2631
        %2633 = vmatprep.mubr.bf16.mxu0 0
        %2634 = vmatmul.mubr.bf16.gmra.mrb[0].mxu0 %v2457
        %v2635 = vpop.f32.mrb[0].mxu0
        %v2636 = vadd.f32 %v2494, %v2635
        %v2637 = vpop.f32.mrb[0].mxu0
        %v2638 = vadd.f32 %v2498, %v2637
        %v2639 = vpop.f32.mrb[0].mxu0
        %v2640 = vadd.f32 %v2494, %v2639
        %v2641 = vpop.f32.mrb[0].mxu0
        %v2642 = vadd.f32 %v2498, %v2641
        %2643 = vmatprep.mubr.bf16.mxu0 0
        %2644 = vmatmul.mubr.bf16.gmra.mrb[0].mxu0 %v2458
        %v2645 = vpop.f32.mrb[0].mxu0
        %v2646 = vadd.f32 %v2494, %v2645
        %v2647 = vpop.f32.mrb[0].mxu0
        %v2648 = vadd.f32 %v2498, %v2647
        %v2649 = vpop.f32.mrb[0].mxu0
        %v2650 = vadd.f32 %v2494, %v2649
        %v2651 = vpop.f32.mrb[0].mxu0
        %v2652 = vadd.f32 %v2498, %v2651
        %2653 = vmatprep.mubr.bf16.mxu0 0
        %2654 = vmatmul.mubr.bf16.gmra.mrb[0].mxu0 %v2459
        %v2655 = vpop.f32.mrb[0].mxu0
        %v2656 = vadd.f32 %v2494, %v2655
        %v2657 = vpop.f32.mrb[0].mxu0
        %v2658 = vadd.f32 %v2498, %v2657
        %v2659 = vpop.f32.mrb[0].mxu0
        %v2660 = vadd.f32 %v2494, %v2659
        %v2661 = vpop.f32.mrb[0].mxu0
        %v2662 = vadd.f32 %v2498, %v2661
        %2663 = vmatprep.mubr.bf16.mxu0 0
        %2664 = vmatmul.mubr.bf16.gmra.mrb[0].mxu0 %v2460
        %v2665 = vpop.f32.mrb[0].mxu0
        %v2666 = vadd.f32 %v2494, %v2665
        %v2667 = vpop.f32.mrb[0].mxu0
        %v2668 = vadd.f32 %v2498, %v2667
        %v2669 = vpop.f32.mrb[0].mxu0
        %v2670 = vadd.f32 %v2494, %v2669
        %v2671 = vpop.f32.mrb[0].mxu0
        %v2672 = vadd.f32 %v2498, %v2671
        %2673 = vmatprep.mubr.bf16.mxu0 0
        %2674 = vmatmul.mubr.bf16.gmra.mrb[0].mxu0 %v2461
        %v2675 = vpop.f32.mrb[0].mxu0
        %v2676 = vadd.f32 %v2494, %v2675
        %v2677 = vpop.f32.mrb[0].mxu0
        %v2678 = vadd.f32 %v2498, %v2677
        %v2679 = vpop.f32.mrb[0].mxu0
        %v2680 = vadd.f32 %v2494, %v2679
        %v2681 = vpop.f32.mrb[0].mxu0
        %v2682 = vadd.f32 %v2498, %v2681
        %2683 = vmatprep.mubr.bf16.mxu0 0
        %2684 = vmatmul.mubr.bf16.gmra.mrb[0].mxu0 %v2462
        %v2685 = vpop.f32.mrb[0].mxu0
        %v2686 = vadd.f32 %v2494, %v2685
        %v2687 = vpop.f32.mrb[0].mxu0
        %v2688 = vadd.f32 %v2498, %v2687
        %v2689 = vpop.f32.mrb[0].mxu0
        %v2690 = vadd.f32 %v2494, %v2689
        %v2691 = vpop.f32.mrb[0].mxu0
        %v2692 = vadd.f32 %v2498, %v2691
        %2693 = vmatprep.mubr.bf16.mxu0 0
        %2694 = vmatmul.mubr.bf16.gmra.mrb[0].mxu0 %v2463
        %v2695 = vpop.f32.mrb[0].mxu0
        %v2696 = vadd.f32 %v2494, %v2695
        %v2697 = vpop.f32.mrb[0].mxu0
        %v2698 = vadd.f32 %v2498, %v2697
        %v2699 = vpop.f32.mrb[0].mxu0
        %v2700 = vadd.f32 %v2494, %v2699
        %v2701 = vpop.f32.mrb[0].mxu0
        %v2702 = vadd.f32 %v2498, %v2701
        %2703 = vmatprep.mubr.bf16.mxu0 0
        %2704 = vmatmul.mubr.bf16.gmra.mrb[0].mxu0 %v2464
        %v2705 = vpop.f32.mrb[0].mxu0
        %v2706 = vadd.f32 %v2494, %v2705
        %v2707 = vpop.f32.mrb[0].mxu0
        %v2708 = vadd.f32 %v2498, %v2707
        %v2709 = vpop.f32.mrb[0].mxu0
        %v2710 = vadd.f32 %v2494, %v2709
        %v2711 = vpop.f32.mrb[0].mxu0
        %v2712 = vadd.f32 %v2498, %v2711
        %2713 = vmatprep.mubr.bf16.mxu0 0
        %2714 = vmatmul.mubr.bf16.gmra.mrb[0].mxu0 %v2465
        %v2715 = vpop.f32.mrb[0].mxu0
        %v2716 = vadd.f32 %v2494, %v2715
        %v2717 = vpop.f32.mrb[0].mxu0
        %v2718 = vadd.f32 %v2498, %v2717
        %v2719 = vpop.f32.mrb[0].mxu0
        %v2720 = vadd.f32 %v2494, %v2719
        %v2721 = vpop.f32.mrb[0].mxu0
        %v2722 = vadd.f32 %v2498, %v2721
        %2723 = vmatprep.mubr.bf16.mxu0 0
        %2724 = vmatmul.mubr.bf16.gmra.mrb[0].mxu0 %v2466
        %v2725 = vpop.f32.mrb[0].mxu0
        %v2726 = vadd.f32 %v2494, %v2725
        %v2727 = vpop.f32.mrb[0].mxu0
        %v2728 = vadd.f32 %v2498, %v2727
        %v2729 = vpop.f32.mrb[0].mxu0
        %v2730 = vadd.f32 %v2494, %v2729
        %v2731 = vpop.f32.mrb[0].mxu0
        %v2732 = vadd.f32 %v2498, %v2731
        %2733 = vmatprep.mubr.bf16.mxu0 0
        %2734 = vmatmul.mubr.bf16.gmra.mrb[0].mxu0 %v2467
        %v2735 = vpop.f32.mrb[0].mxu0
        %v2736 = vadd.f32 %v2494, %v2735
        %v2737 = vpop.f32.mrb[0].mxu0
        %v2738 = vadd.f32 %v2498, %v2737
        %v2739 = vpop.f32.mrb[0].mxu0
        %v2740 = vadd.f32 %v2494, %v2739
        %v2741 = vpop.f32.mrb[0].mxu0
        %v2742 = vadd.f32 %v2498, %v2741
        %2743 = vmatprep.mubr.bf16.mxu0 0
        %2744 = vmatmul.mubr.bf16.gmra.mrb[0].mxu0 %v2468
        %v2745 = vpop.f32.mrb[0].mxu0
        %v2746 = vadd.f32 %v2494, %v2745
        %v2747 = vpop.f32.mrb[0].mxu0
        %v2748 = vadd.f32 %v2498, %v2747
        %v2749 = vpop.f32.mrb[0].mxu0
        %v2750 = vadd.f32 %v2494, %v2749
        %v2751 = vpop.f32.mrb[0].mxu0
        %v2752 = vadd.f32 %v2498, %v2751
        %2753 = vmatprep.mubr.bf16.mxu0 0
        %2754 = vmatmul.mubr.bf16.gmra.mrb[0].mxu0 %v2469
        %v2755 = vpop.f32.mrb[0].mxu0
        %v2756 = vadd.f32 %v2494, %v2755
        %v2757 = vpop.f32.mrb[0].mxu0
        %v2758 = vadd.f32 %v2498, %v2757
        %v2759 = vpop.f32.mrb[0].mxu0
        %v2760 = vadd.f32 %v2494, %v2759
        %v2761 = vpop.f32.mrb[0].mxu0
        %v2762 = vadd.f32 %v2498, %v2761
        %2763 = vmatprep.mubr.bf16.mxu0 0
        %2764 = vmatmul.mubr.bf16.gmra.mrb[0].mxu0 %v2470
        %v2765 = vpop.f32.mrb[0].mxu0
        %v2766 = vadd.f32 %v2494, %v2765
        %v2767 = vpop.f32.mrb[0].mxu0
        %v2768 = vadd.f32 %v2498, %v2767
        %v2769 = vpop.f32.mrb[0].mxu0
        %v2770 = vadd.f32 %v2494, %v2769
        %v2771 = vpop.f32.mrb[0].mxu0
        %v2772 = vadd.f32 %v2498, %v2771
        %2773 = vdwg.mxu0
        %v2774 = vtanh.pop %v2616
        %v2775 = vtanh.pop %v2620
        %v2776 = vtanh.pop %v2626
        %v2777 = vtanh.pop %v2630
        %v2778 = vtanh.pop %v2636
        %v2779 = vtanh.pop %v2640
        %v2780 = vtanh.pop %v2646
        %v2781 = vtanh.pop %v2650
        %v2782 = vtanh.pop %v2656
        %v2783 = vtanh.pop %v2660
        %v2784 = vtanh.pop %v2666
        %v2785 = vtanh.pop %v2670
        %v2786 = vtanh.pop %v2676
        %v2787 = vtanh.pop %v2680
        %v2788 = vtanh.pop %v2686
        %v2789 = vtanh.pop %v2690
        %v2790 = vtanh.pop %v2696
        %v2791 = vtanh.pop %v2700
        %v2792 = vtanh.pop %v2706
        %v2793 = vtanh.pop %v2710
        %v2794 = vtanh.pop %v2716
        %v2795 = vtanh.pop %v2720
        %v2796 = vtanh.pop %v2726
        %v2797 = vtanh.pop %v2730
        %v2798 = vtanh.pop %v2736
        %v2799 = vtanh.pop %v2740
        %v2800 = vtanh.pop %v2746
        %v2801 = vtanh.pop %v2750
        %v2802 = vtanh.pop %v2756
        %v2803 = vtanh.pop %v2760
        %v2804 = vtanh.pop %v2766
        %v2805 = vtanh.pop %v2770
        %v2806 = vmul.f32 %v2774, 1.442695
        %v2807 = vpow.pop %v2806
        %v2808 = vmul.f32 %v2775, 1.442695
        %v2809 = vpow.pop %v2808
        %v2810 = vmul.f32 %v2776, 1.442695
        %v2811 = vpow.pop %v2810
        %v2812 = vmul.f32 %v2777, 1.442695
        %v2813 = vpow.pop %v2812
        %v2814 = vmul.f32 %v2778, 1.442695
        %v2815 = vpow.pop %v2814
        %v2816 = vmul.f32 %v2779, 1.442695
        %v2817 = vpow.pop %v2816
        %v2818 = vmul.f32 %v2780, 1.442695
        %v2819 = vpow.pop %v2818
        %v2820 = vmul.f32 %v2781, 1.442695
        %v2821 = vpow.pop %v2820
        %v2822 = vmul.f32 %v2782, 1.442695
        %v2823 = vpow.pop %v2822
        %v2824 = vmul.f32 %v2783, 1.442695
        %v2825 = vpow.pop %v2824
        %v2826 = vmul.f32 %v2784, 1.442695
        %v2827 = vpow.pop %v2826
        %v2828 = vmul.f32 %v2785, 1.442695
        %v2829 = vpow.pop %v2828
        %v2830 = vmul.f32 %v2786, 1.442695
        %v2831 = vpow.pop %v2830
        %v2832 = vmul.f32 %v2787, 1.442695
        %v2833 = vpow.pop %v2832
        %v2834 = vmul.f32 %v2788, 1.442695
        %v2835 = vpow.pop %v2834
        %v2836 = vmul.f32 %v2789, 1.442695
        %v2837 = vpow.pop %v2836
        %v2838 = vmul.f32 %v2790, 1.442695
        %v2839 = vpow.pop %v2838
        %v2840 = vmul.f32 %v2791, 1.442695
        %v2841 = vpow.pop %v2840
        %v2842 = vmul.f32 %v2792, 1.442695
        %v2843 = vpow.pop %v2842
        %v2844 = vmul.f32 %v2793, 1.442695
        %v2845 = vpow.pop %v2844
        %v2846 = vmul.f32 %v2794, 1.442695
        %v2847 = vpow.pop %v2846
        %v2848 = vmul.f32 %v2795, 1.442695
        %v2849 = vpow.pop %v2848
        %v2850 = vmul.f32 %v2796, 1.442695
        %v2851 = vpow.pop %v2850
        %v2852 = vmul.f32 %v2797, 1.442695
        %v2853 = vpow.pop %v2852
        %v2854 = vmul.f32 %v2798, 1.442695
        %v2855 = vpow.pop %v2854
        %v2856 = vmul.f32 %v2799, 1.442695
        %v2857 = vpow.pop %v2856
        %v2858 = vmul.f32 %v2800, 1.442695
        %v2859 = vpow.pop %v2858
        %v2860 = vmul.f32 %v2801, 1.442695
        %v2861 = vpow.pop %v2860
        %v2862 = vmul.f32 %v2802, 1.442695
        %v2863 = vpow.pop %v2862
        %v2864 = vmul.f32 %v2803, 1.442695
        %v2865 = vpow.pop %v2864
        %v2866 = vmul.f32 %v2804, 1.442695
        %v2867 = vpow.pop %v2866
        %v2868 = vmul.f32 %v2805, 1.442695
        %v2869 = vpow.pop %v2868
        %v2870 = vmul.f32 %v1188, %v2807
        %v2871 = vmul.f32 %v1189, %v2809
        %v2872 = vmul.f32 %v1190, %v2811
        %v2873 = vmul.f32 %v1191, %v2813
        %v2874 = vmul.f32 %v1192, %v2815
        %v2875 = vmul.f32 %v1193, %v2817
        %v2876 = vmul.f32 %v1194, %v2819
        %v2877 = vmul.f32 %v1195, %v2821
        %v2878 = vmul.f32 %v1196, %v2823
        %v2879 = vmul.f32 %v1197, %v2825
        %v2880 = vmul.f32 %v1198, %v2827
        %v2881 = vmul.f32 %v1199, %v2829
        %v2882 = vmul.f32 %v1200, %v2831
        %v2883 = vmul.f32 %v1201, %v2833
        %v2884 = vmul.f32 %v1202, %v2835
        %v2885 = vmul.f32 %v1203, %v2837
        %v2886 = vmul.f32 %v1204, %v2839
        %v2887 = vmul.f32 %v1205, %v2841
        %v2888 = vmul.f32 %v1206, %v2843
        %v2889 = vmul.f32 %v1207, %v2845
        %v2890 = vmul.f32 %v1208, %v2847
        %v2891 = vmul.f32 %v1209, %v2849
        %v2892 = vmul.f32 %v1210, %v2851
        %v2893 = vmul.f32 %v1211, %v2853
        %v2894 = vmul.f32 %v1212, %v2855
        %v2895 = vmul.f32 %v1213, %v2857
        %v2896 = vmul.f32 %v1214, %v2859
        %v2897 = vmul.f32 %v1215, %v2861
        %v2898 = vmul.f32 %v1216, %v2863
        %v2899 = vmul.f32 %v1217, %v2865
        %v2900 = vmul.f32 %v1218, %v2867
        %v2901 = vmul.f32 %v1219, %v2869
        %v2902 = vadd.f32 %v2870, %v2618
        %v2903 = vadd.f32 %v2871, %v2622
        %v2904 = vadd.f32 %v2872, %v2628
        %v2905 = vadd.f32 %v2873, %v2632
        %v2906 = vadd.f32 %v2874, %v2638
        %v2907 = vadd.f32 %v2875, %v2642
        %v2908 = vadd.f32 %v2876, %v2648
        %v2909 = vadd.f32 %v2877, %v2652
        %v2910 = vadd.f32 %v2878, %v2658
        %v2911 = vadd.f32 %v2879, %v2662
        %v2912 = vadd.f32 %v2880, %v2668
        %v2913 = vadd.f32 %v2881, %v2672
        %v2914 = vadd.f32 %v2882, %v2678
        %v2915 = vadd.f32 %v2883, %v2682
        %v2916 = vadd.f32 %v2884, %v2688
        %v2917 = vadd.f32 %v2885, %v2692
        %v2918 = vadd.f32 %v2886, %v2698
        %v2919 = vadd.f32 %v2887, %v2702
        %v2920 = vadd.f32 %v2888, %v2708
        %v2921 = vadd.f32 %v2889, %v2712
        %v2922 = vadd.f32 %v2890, %v2718
        %v2923 = vadd.f32 %v2891, %v2722
        %v2924 = vadd.f32 %v2892, %v2728
        %v2925 = vadd.f32 %v2893, %v2732
        %v2926 = vadd.f32 %v2894, %v2738
        %v2927 = vadd.f32 %v2895, %v2742
        %v2928 = vadd.f32 %v2896, %v2748
        %v2929 = vadd.f32 %v2897, %v2752
        %v2930 = vadd.f32 %v2898, %v2758
        %v2931 = vadd.f32 %v2899, %v2762
        %v2932 = vadd.f32 %v2900, %v2768
        %v2933 = vadd.f32 %v2901, %v2772
        %2934 = vadd.xlane.f32.xlu0 %v2774
        %v2935 = vpop.xlane.xlu0 %2934
        %2936 = vadd.xlane.f32.xlu0 %v2775
        %v2937 = vpop.xlane.xlu0 %2936
        %2938 = vadd.xlane.f32.xlu0 %v2776
        %v2939 = vpop.xlane.xlu0 %2938
        %2940 = vadd.xlane.f32.xlu0 %v2777
        %v2941 = vpop.xlane.xlu0 %2940
        %2942 = vadd.xlane.f32.xlu0 %v2778
        %v2943 = vpop.xlane.xlu0 %2942
        %2944 = vadd.xlane.f32.xlu0 %v2779
        %v2945 = vpop.xlane.xlu0 %2944
        %2946 = vadd.xlane.f32.xlu0 %v2780
        %v2947 = vpop.xlane.xlu0 %2946
        %2948 = vadd.xlane.f32.xlu0 %v2781
        %v2949 = vpop.xlane.xlu0 %2948
        %2950 = vadd.xlane.f32.xlu0 %v2782
        %v2951 = vpop.xlane.xlu0 %2950
        %2952 = vadd.xlane.f32.xlu0 %v2783
        %v2953 = vpop.xlane.xlu0 %2952
        %2954 = vadd.xlane.f32.xlu0 %v2784
        %v2955 = vpop.xlane.xlu0 %2954
        %2956 = vadd.xlane.f32.xlu0 %v2785
        %v2957 = vpop.xlane.xlu0 %2956
        %2958 = vadd.xlane.f32.xlu0 %v2786
        %v2959 = vpop.xlane.xlu0 %2958
        %2960 = vadd.xlane.f32.xlu0 %v2787
        %v2961 = vpop.xlane.xlu0 %2960
        %2962 = vadd.xlane.f32.xlu0 %v2788
        %v2963 = vpop.xlane.xlu0 %2962
        %2964 = vadd.xlane.f32.xlu0 %v2789
        %v2965 = vpop.xlane.xlu0 %2964
        %2966 = vadd.xlane.f32.xlu0 %v2790
        %v2967 = vpop.xlane.xlu0 %2966
        %2968 = vadd.xlane.f32.xlu0 %v2791
        %v2969 = vpop.xlane.xlu0 %2968
        %2970 = vadd.xlane.f32.xlu0 %v2792
        %v2971 = vpop.xlane.xlu0 %2970
        %2972 = vadd.xlane.f32.xlu0 %v2793
        %v2973 = vpop.xlane.xlu0 %2972
        %2974 = vadd.xlane.f32.xlu0 %v2794
        %v2975 = vpop.xlane.xlu0 %2974
        %2976 = vadd.xlane.f32.xlu0 %v2795
        %v2977 = vpop.xlane.xlu0 %2976
        %2978 = vadd.xlane.f32.xlu0 %v2796
        %v2979 = vpop.xlane.xlu0 %2978
        %2980 = vadd.xlane.f32.xlu0 %v2797
        %v2981 = vpop.xlane.xlu0 %2980
        %2982 = vadd.xlane.f32.xlu0 %v2798
        %v2983 = vpop.xlane.xlu0 %2982
        %2984 = vadd.xlane.f32.xlu0 %v2799
        %v2985 = vpop.xlane.xlu0 %2984
        %2986 = vadd.xlane.f32.xlu0 %v2800
        %v2987 = vpop.xlane.xlu0 %2986
        %2988 = vadd.xlane.f32.xlu0 %v2801
        %v2989 = vpop.xlane.xlu0 %2988
        %2990 = vadd.xlane.f32.xlu0 %v2802
        %v2991 = vpop.xlane.xlu0 %2990
        %2992 = vadd.xlane.f32.xlu0 %v2803
        %v2993 = vpop.xlane.xlu0 %2992
        %2994 = vadd.xlane.f32.xlu0 %v2804
        %v2995 = vpop.xlane.xlu0 %2994
        %2996 = vadd.xlane.f32.xlu0 %v2805
        %v2997 = vpop.xlane.xlu0 %2996
        %v2998 = vadd.f32 %v2141, %v2935
        %v2999 = vadd.f32 %v2142, %v2937
        %v3000 = vadd.f32 %v2143, %v2939
        %v3001 = vadd.f32 %v2144, %v2941
        %v3002 = vadd.f32 %v2145, %v2943
        %v3003 = vadd.f32 %v2146, %v2945
        %v3004 = vadd.f32 %v2147, %v2947
        %v3005 = vadd.f32 %v2148, %v2949
        %v3006 = vadd.f32 %v2149, %v2951
        %v3007 = vadd.f32 %v2150, %v2953
        %v3008 = vadd.f32 %v2151, %v2955
        %v3009 = vadd.f32 %v2152, %v2957
        %v3010 = vadd.f32 %v2153, %v2959
        %v3011 = vadd.f32 %v2154, %v2961
        %v3012 = vadd.f32 %v2155, %v2963
        %v3013 = vadd.f32 %v2156, %v2965
        %v3014 = vadd.f32 %v2157, %v2967
        %v3015 = vadd.f32 %v2158, %v2969
        %v3016 = vadd.f32 %v2159, %v2971
        %v3017 = vadd.f32 %v2160, %v2973
        %v3018 = vadd.f32 %v2161, %v2975
        %v3019 = vadd.f32 %v2162, %v2977
        %v3020 = vadd.f32 %v2163, %v2979
        %v3021 = vadd.f32 %v2164, %v2981
        %v3022 = vadd.f32 %v2165, %v2983
        %v3023 = vadd.f32 %v2166, %v2985
        %v3024 = vadd.f32 %v2167, %v2987
        %v3025 = vadd.f32 %v2168, %v2989
        %v3026 = vadd.f32 %v2169, %v2991
        %v3027 = vadd.f32 %v2170, %v2993
        %v3028 = vadd.f32 %v2171, %v2995
        %v3029 = vadd.f32 %v2172, %v2997
        %v3030 = vpack.c.bf16 %v2903, %v2902
        %v3031 = vpack.c.bf16 %v2905, %v2904
        %v3032 = vpack.c.bf16 %v2907, %v2906
        %v3033 = vpack.c.bf16 %v2909, %v2908
        %v3034 = vpack.c.bf16 %v2911, %v2910
        %v3035 = vpack.c.bf16 %v2913, %v2912
        %v3036 = vpack.c.bf16 %v2915, %v2914
        %v3037 = vpack.c.bf16 %v2917, %v2916
        %v3038 = vpack.c.bf16 %v2919, %v2918
        %v3039 = vpack.c.bf16 %v2921, %v2920
        %v3040 = vpack.c.bf16 %v2923, %v2922
        %v3041 = vpack.c.bf16 %v2925, %v2924
        %v3042 = vpack.c.bf16 %v2927, %v2926
        %v3043 = vpack.c.bf16 %v2929, %v2928
        %v3044 = vpack.c.bf16 %v2931, %v2930
        %v3045 = vpack.c.bf16 %v2933, %v2932
        %s3046 = scalar_lea.vmem %s1, 192
        %v3047 = vld [vmem:[%s3046] sm:$0xf]
        %v3048 = vld [vmem:[%s3046 + $0x4] sm:$0xf]
        %v3049 = vld [vmem:[%s3046 + $0x8] sm:$0xf]
        %v3050 = vld [vmem:[%s3046 + $0xc] sm:$0xf]
        %v3051 = vld [vmem:[%s3046 + $0x10] sm:$0xf]
        %v3052 = vld [vmem:[%s3046 + $0x14] sm:$0xf]
        %v3053 = vld [vmem:[%s3046 + $0x18] sm:$0xf]
        %v3054 = vld [vmem:[%s3046 + $0x1c] sm:$0xf]
        %v3055 = vld [vmem:[%s3046 + $0x20] sm:$0xf]
        %v3056 = vld [vmem:[%s3046 + $0x24] sm:$0xf]
        %v3057 = vld [vmem:[%s3046 + $0x28] sm:$0xf]
        %v3058 = vld [vmem:[%s3046 + $0x2c] sm:$0xf]
        %v3059 = vld [vmem:[%s3046 + $0x30] sm:$0xf]
        %v3060 = vld [vmem:[%s3046 + $0x34] sm:$0xf]
        %v3061 = vld [vmem:[%s3046 + $0x38] sm:$0xf]
        %v3062 = vld [vmem:[%s3046 + $0x3c] sm:$0xf]
        %s3063 = scalar_lea.vmem %s2, 3
        %v3064 = vld [vmem:[%s3063] sm:$0x1]
        %v3066 = vlaneseq
        %v3067 = vshrl.u32 %v3066, 7
        %v3068 = vsub.s32 0, %v3067
        %v3069 = vrot.slane %v3064, %v3068
        %v3087 = vunpack.c.l.b16 %v3047
        %v3088 = vunpack.c.l.b16 %v3048
        %v3089 = vunpack.c.l.b16 %v3049
        %v3090 = vunpack.c.l.b16 %v3050
        %v3091 = vunpack.c.l.b16 %v3051
        %v3092 = vunpack.c.l.b16 %v3052
        %v3093 = vunpack.c.l.b16 %v3053
        %v3094 = vunpack.c.l.b16 %v3054
        %v3095 = vunpack.c.l.b16 %v3055
        %v3096 = vunpack.c.l.b16 %v3056
        %v3097 = vunpack.c.l.b16 %v3057
        %v3098 = vunpack.c.l.b16 %v3058
        %v3099 = vunpack.c.l.b16 %v3059
        %v3100 = vunpack.c.l.b16 %v3060
        %v3101 = vunpack.c.l.b16 %v3061
        %v3102 = vunpack.c.l.b16 %v3062
        %v3103 = vpack.c.b16 %v3088, %v3087
        %v3104 = vpack.c.b16 %v3090, %v3089
        %v3105 = vpack.c.b16 %v3092, %v3091
        %v3106 = vpack.c.b16 %v3094, %v3093
        %v3107 = vpack.c.b16 %v3096, %v3095
        %v3108 = vpack.c.b16 %v3098, %v3097
        %v3109 = vpack.c.b16 %v3100, %v3099
        %v3110 = vpack.c.b16 %v3102, %v3101
        %3119 = vmatprep.subr.bf16.mxu0 0
        %3120 = vmatpush1.bf16.msra.mxu0 %v3103
        %3121 = vmatprep.subr.bf16.mxu0 0
        %3122 = vmatpush1.bf16.msra.mxu0 %v3104
        %3123 = vmatprep.subr.bf16.mxu0 0
        %3124 = vmatpush1.bf16.msra.mxu0 %v3105
        %3125 = vmatprep.subr.bf16.mxu0 0
        %3126 = vmatpush1.bf16.msra.mxu0 %v3106
        %3127 = vmatprep.subr.bf16.mxu0 0
        %3128 = vmatpush1.bf16.msra.mxu0 %v3107
        %3129 = vmatprep.subr.bf16.mxu0 0
        %3130 = vmatpush1.bf16.msra.mxu0 %v3108
        %3131 = vmatprep.subr.bf16.mxu0 0
        %3132 = vmatpush1.bf16.msra.mxu0 %v3109
        %3133 = vmatprep.subr.bf16.mxu0 0
        %3134 = vmatpush1.bf16.msra.mxu0 %v3110
        %3135 = vmatprep.subr.bf16.mxu0 0
        %3136 = vmatpush1.bf16.msra.mxu0 0
        %3137 = vmatprep.subr.bf16.mxu0 0
        %3138 = vmatpush1.bf16.msra.mxu0 0
        %3139 = vmatprep.subr.bf16.mxu0 0
        %3140 = vmatpush1.bf16.msra.mxu0 0
        %3141 = vmatprep.subr.bf16.mxu0 0
        %3142 = vmatpush1.bf16.msra.mxu0 0
        %3143 = vmatprep.subr.bf16.mxu0 0
        %3144 = vmatpush1.bf16.msra.mxu0 0
        %3145 = vmatprep.subr.bf16.mxu0 0
        %3146 = vmatpush1.bf16.msra.mxu0 0
        %3147 = vmatprep.subr.bf16.mxu0 0
        %3148 = vmatpush1.bf16.msra.mxu0 0
        %3149 = vmatprep.subr.bf16.mxu0 0
        %3150 = vmatpush1.bf16.msra.mxu0 0
        %3151 = vmatprep.mubr.bf16.mxu0 0
        %3152 = vmatmul.mubr.bf16.gmra.mrb[0].mxu0 %v3030
        %v3153 = vpop.f32.mrb[0].mxu0
        %v3154 = vadd.f32 %v3069, %v3153
        %v3155 = vpop.f32.mrb[0].mxu0
        %v3156 = vpop.f32.mrb[0].mxu0
        %v3157 = vadd.f32 %v3069, %v3156
        %v3158 = vpop.f32.mrb[0].mxu0
        %3159 = vmatprep.mubr.bf16.mxu0 0
        %3160 = vmatmul.mubr.bf16.gmra.mrb[0].mxu0 %v3031
        %v3161 = vpop.f32.mrb[0].mxu0
        %v3162 = vadd.f32 %v3069, %v3161
        %v3163 = vpop.f32.mrb[0].mxu0
        %v3164 = vpop.f32.mrb[0].mxu0
        %v3165 = vadd.f32 %v3069, %v3164
        %v3166 = vpop.f32.mrb[0].mxu0
        %3167 = vmatprep.mubr.bf16.mxu0 0
        %3168 = vmatmul.mubr.bf16.gmra.mrb[0].mxu0 %v3032
        %v3169 = vpop.f32.mrb[0].mxu0
        %v3170 = vadd.f32 %v3069, %v3169
        %v3171 = vpop.f32.mrb[0].mxu0
        %v3172 = vpop.f32.mrb[0].mxu0
        %v3173 = vadd.f32 %v3069, %v3172
        %v3174 = vpop.f32.mrb[0].mxu0
        %3175 = vmatprep.mubr.bf16.mxu0 0
        %3176 = vmatmul.mubr.bf16.gmra.mrb[0].mxu0 %v3033
        %v3177 = vpop.f32.mrb[0].mxu0
        %v3178 = vadd.f32 %v3069, %v3177
        %v3179 = vpop.f32.mrb[0].mxu0
        %v3180 = vpop.f32.mrb[0].mxu0
        %v3181 = vadd.f32 %v3069, %v3180
        %v3182 = vpop.f32.mrb[0].mxu0
        %3183 = vmatprep.mubr.bf16.mxu0 0
        %3184 = vmatmul.mubr.bf16.gmra.mrb[0].mxu0 %v3034
        %v3185 = vpop.f32.mrb[0].mxu0
        %v3186 = vadd.f32 %v3069, %v3185
        %v3187 = vpop.f32.mrb[0].mxu0
        %v3188 = vpop.f32.mrb[0].mxu0
        %v3189 = vadd.f32 %v3069, %v3188
        %v3190 = vpop.f32.mrb[0].mxu0
        %3191 = vmatprep.mubr.bf16.mxu0 0
        %3192 = vmatmul.mubr.bf16.gmra.mrb[0].mxu0 %v3035
        %v3193 = vpop.f32.mrb[0].mxu0
        %v3194 = vadd.f32 %v3069, %v3193
        %v3195 = vpop.f32.mrb[0].mxu0
        %v3196 = vpop.f32.mrb[0].mxu0
        %v3197 = vadd.f32 %v3069, %v3196
        %v3198 = vpop.f32.mrb[0].mxu0
        %3199 = vmatprep.mubr.bf16.mxu0 0
        %3200 = vmatmul.mubr.bf16.gmra.mrb[0].mxu0 %v3036
        %v3201 = vpop.f32.mrb[0].mxu0
        %v3202 = vadd.f32 %v3069, %v3201
        %v3203 = vpop.f32.mrb[0].mxu0
        %v3204 = vpop.f32.mrb[0].mxu0
        %v3205 = vadd.f32 %v3069, %v3204
        %v3206 = vpop.f32.mrb[0].mxu0
        %3207 = vmatprep.mubr.bf16.mxu0 0
        %3208 = vmatmul.mubr.bf16.gmra.mrb[0].mxu0 %v3037
        %v3209 = vpop.f32.mrb[0].mxu0
        %v3210 = vadd.f32 %v3069, %v3209
        %v3211 = vpop.f32.mrb[0].mxu0
        %v3212 = vpop.f32.mrb[0].mxu0
        %v3213 = vadd.f32 %v3069, %v3212
        %v3214 = vpop.f32.mrb[0].mxu0
        %3215 = vmatprep.mubr.bf16.mxu0 0
        %3216 = vmatmul.mubr.bf16.gmra.mrb[0].mxu0 %v3038
        %v3217 = vpop.f32.mrb[0].mxu0
        %v3218 = vadd.f32 %v3069, %v3217
        %v3219 = vpop.f32.mrb[0].mxu0
        %v3220 = vpop.f32.mrb[0].mxu0
        %v3221 = vadd.f32 %v3069, %v3220
        %v3222 = vpop.f32.mrb[0].mxu0
        %3223 = vmatprep.mubr.bf16.mxu0 0
        %3224 = vmatmul.mubr.bf16.gmra.mrb[0].mxu0 %v3039
        %v3225 = vpop.f32.mrb[0].mxu0
        %v3226 = vadd.f32 %v3069, %v3225
        %v3227 = vpop.f32.mrb[0].mxu0
        %v3228 = vpop.f32.mrb[0].mxu0
        %v3229 = vadd.f32 %v3069, %v3228
        %v3230 = vpop.f32.mrb[0].mxu0
        %3231 = vmatprep.mubr.bf16.mxu0 0
        %3232 = vmatmul.mubr.bf16.gmra.mrb[0].mxu0 %v3040
        %v3233 = vpop.f32.mrb[0].mxu0
        %v3234 = vadd.f32 %v3069, %v3233
        %v3235 = vpop.f32.mrb[0].mxu0
        %v3236 = vpop.f32.mrb[0].mxu0
        %v3237 = vadd.f32 %v3069, %v3236
        %v3238 = vpop.f32.mrb[0].mxu0
        %3239 = vmatprep.mubr.bf16.mxu0 0
        %3240 = vmatmul.mubr.bf16.gmra.mrb[0].mxu0 %v3041
        %v3241 = vpop.f32.mrb[0].mxu0
        %v3242 = vadd.f32 %v3069, %v3241
        %v3243 = vpop.f32.mrb[0].mxu0
        %v3244 = vpop.f32.mrb[0].mxu0
        %v3245 = vadd.f32 %v3069, %v3244
        %v3246 = vpop.f32.mrb[0].mxu0
        %3247 = vmatprep.mubr.bf16.mxu0 0
        %3248 = vmatmul.mubr.bf16.gmra.mrb[0].mxu0 %v3042
        %v3249 = vpop.f32.mrb[0].mxu0
        %v3250 = vadd.f32 %v3069, %v3249
        %v3251 = vpop.f32.mrb[0].mxu0
        %v3252 = vpop.f32.mrb[0].mxu0
        %v3253 = vadd.f32 %v3069, %v3252
        %v3254 = vpop.f32.mrb[0].mxu0
        %3255 = vmatprep.mubr.bf16.mxu0 0
        %3256 = vmatmul.mubr.bf16.gmra.mrb[0].mxu0 %v3043
        %v3257 = vpop.f32.mrb[0].mxu0
        %v3258 = vadd.f32 %v3069, %v3257
        %v3259 = vpop.f32.mrb[0].mxu0
        %v3260 = vpop.f32.mrb[0].mxu0
        %v3261 = vadd.f32 %v3069, %v3260
        %v3262 = vpop.f32.mrb[0].mxu0
        %3263 = vmatprep.mubr.bf16.mxu0 0
        %3264 = vmatmul.mubr.bf16.gmra.mrb[0].mxu0 %v3044
        %v3265 = vpop.f32.mrb[0].mxu0
        %v3266 = vadd.f32 %v3069, %v3265
        %v3267 = vpop.f32.mrb[0].mxu0
        %v3268 = vpop.f32.mrb[0].mxu0
        %v3269 = vadd.f32 %v3069, %v3268
        %v3270 = vpop.f32.mrb[0].mxu0
        %3271 = vmatprep.mubr.bf16.mxu0 0
        %3272 = vmatmul.mubr.bf16.gmra.mrb[0].mxu0 %v3045
        %v3273 = vpop.f32.mrb[0].mxu0
        %v3274 = vadd.f32 %v3069, %v3273
        %v3275 = vpop.f32.mrb[0].mxu0
        %v3276 = vpop.f32.mrb[0].mxu0
        %v3277 = vadd.f32 %v3069, %v3276
        %v3278 = vpop.f32.mrb[0].mxu0
        %3279 = vdwg.mxu0
        %v3280 = vtanh.pop %v3154
        %v3281 = vtanh.pop %v3157
        %v3282 = vtanh.pop %v3162
        %v3283 = vtanh.pop %v3165
        %v3284 = vtanh.pop %v3170
        %v3285 = vtanh.pop %v3173
        %v3286 = vtanh.pop %v3178
        %v3287 = vtanh.pop %v3181
        %v3288 = vtanh.pop %v3186
        %v3289 = vtanh.pop %v3189
        %v3290 = vtanh.pop %v3194
        %v3291 = vtanh.pop %v3197
        %v3292 = vtanh.pop %v3202
        %v3293 = vtanh.pop %v3205
        %v3294 = vtanh.pop %v3210
        %v3295 = vtanh.pop %v3213
        %v3296 = vtanh.pop %v3218
        %v3297 = vtanh.pop %v3221
        %v3298 = vtanh.pop %v3226
        %v3299 = vtanh.pop %v3229
        %v3300 = vtanh.pop %v3234
        %v3301 = vtanh.pop %v3237
        %v3302 = vtanh.pop %v3242
        %v3303 = vtanh.pop %v3245
        %v3304 = vtanh.pop %v3250
        %v3305 = vtanh.pop %v3253
        %v3306 = vtanh.pop %v3258
        %v3307 = vtanh.pop %v3261
        %v3308 = vtanh.pop %v3266
        %v3309 = vtanh.pop %v3269
        %v3310 = vtanh.pop %v3274
        %v3311 = vtanh.pop %v3277
        %v3312 = vpack.c.bf16 %v3281, %v3280
        %v3313 = vpack.c.bf16 %v3283, %v3282
        %v3314 = vpack.c.bf16 %v3285, %v3284
        %v3315 = vpack.c.bf16 %v3287, %v3286
        %v3316 = vpack.c.bf16 %v3289, %v3288
        %v3317 = vpack.c.bf16 %v3291, %v3290
        %v3318 = vpack.c.bf16 %v3293, %v3292
        %v3319 = vpack.c.bf16 %v3295, %v3294
        %v3320 = vpack.c.bf16 %v3297, %v3296
        %v3321 = vpack.c.bf16 %v3299, %v3298
        %v3322 = vpack.c.bf16 %v3301, %v3300
        %v3323 = vpack.c.bf16 %v3303, %v3302
        %v3324 = vpack.c.bf16 %v3305, %v3304
        %v3325 = vpack.c.bf16 %v3307, %v3306
        %v3326 = vpack.c.bf16 %v3309, %v3308
        %v3327 = vpack.c.bf16 %v3311, %v3310
        %s3328 = scalar_lea.vmem %s3, 384
        %v3329 = vld [vmem:[%s3328] sm:$0xff]
        %v3330 = vld [vmem:[%s3328 + $0x8] sm:$0xff]
        %v3331 = vld [vmem:[%s3328 + $0x10] sm:$0xff]
        %v3332 = vld [vmem:[%s3328 + $0x18] sm:$0xff]
        %v3333 = vld [vmem:[%s3328 + $0x20] sm:$0xff]
        %v3334 = vld [vmem:[%s3328 + $0x28] sm:$0xff]
        %v3335 = vld [vmem:[%s3328 + $0x30] sm:$0xff]
        %v3336 = vld [vmem:[%s3328 + $0x38] sm:$0xff]
        %v3337 = vld [vmem:[%s3328 + $0x40] sm:$0xff]
        %v3338 = vld [vmem:[%s3328 + $0x48] sm:$0xff]
        %v3339 = vld [vmem:[%s3328 + $0x50] sm:$0xff]
        %v3340 = vld [vmem:[%s3328 + $0x58] sm:$0xff]
        %v3341 = vld [vmem:[%s3328 + $0x60] sm:$0xff]
        %v3342 = vld [vmem:[%s3328 + $0x68] sm:$0xff]
        %v3343 = vld [vmem:[%s3328 + $0x70] sm:$0xff]
        %v3344 = vld [vmem:[%s3328 + $0x78] sm:$0xff]
        %s3345 = scalar_lea.vmem %s4, 6
        %v3346 = vld [vmem:[%s3345] sm:$0x3]
        %v3348 = vlaneseq
        %v3349 = vshrl.u32 %v3348, 7
        %v3350 = vsub.s32 0, %v3349
        %v3351 = vrot.slane %v3346, %v3350
        %v3352 = vlaneseq
        %v3353 = vshrl.u32 %v3352, 7
        %v3354 = vsub.s32 1, %v3353
        %v3355 = vrot.slane %v3346, %v3354
        %v3374 = vunpack.c.l.b16 %v3329
        %v3375 = vunpack.c.h.b16 %v3329
        %v3376 = vunpack.c.l.b16 %v3330
        %v3377 = vunpack.c.h.b16 %v3330
        %v3378 = vunpack.c.l.b16 %v3331
        %v3379 = vunpack.c.h.b16 %v3331
        %v3380 = vunpack.c.l.b16 %v3332
        %v3381 = vunpack.c.h.b16 %v3332
        %v3382 = vunpack.c.l.b16 %v3333
        %v3383 = vunpack.c.h.b16 %v3333
        %v3384 = vunpack.c.l.b16 %v3334
        %v3385 = vunpack.c.h.b16 %v3334
        %v3386 = vunpack.c.l.b16 %v3335
        %v3387 = vunpack.c.h.b16 %v3335
        %v3388 = vunpack.c.l.b16 %v3336
        %v3389 = vunpack.c.h.b16 %v3336
        %v3390 = vunpack.c.l.b16 %v3337
        %v3391 = vunpack.c.h.b16 %v3337
        %v3392 = vunpack.c.l.b16 %v3338
        %v3393 = vunpack.c.h.b16 %v3338
        %v3394 = vunpack.c.l.b16 %v3339
        %v3395 = vunpack.c.h.b16 %v3339
        %v3396 = vunpack.c.l.b16 %v3340
        %v3397 = vunpack.c.h.b16 %v3340
        %v3398 = vunpack.c.l.b16 %v3341
        %v3399 = vunpack.c.h.b16 %v3341
        %v3400 = vunpack.c.l.b16 %v3342
        %v3401 = vunpack.c.h.b16 %v3342
        %v3402 = vunpack.c.l.b16 %v3343
        %v3403 = vunpack.c.h.b16 %v3343
        %v3404 = vunpack.c.l.b16 %v3344
        %v3405 = vunpack.c.h.b16 %v3344
        %v3406 = vpack.c.b16 %v3376, %v3374
        %v3407 = vpack.c.b16 %v3377, %v3375
        %v3408 = vpack.c.b16 %v3380, %v3378
        %v3409 = vpack.c.b16 %v3381, %v3379
        %v3410 = vpack.c.b16 %v3384, %v3382
        %v3411 = vpack.c.b16 %v3385, %v3383
        %v3412 = vpack.c.b16 %v3388, %v3386
        %v3413 = vpack.c.b16 %v3389, %v3387
        %v3414 = vpack.c.b16 %v3392, %v3390
        %v3415 = vpack.c.b16 %v3393, %v3391
        %v3416 = vpack.c.b16 %v3396, %v3394
        %v3417 = vpack.c.b16 %v3397, %v3395
        %v3418 = vpack.c.b16 %v3400, %v3398
        %v3419 = vpack.c.b16 %v3401, %v3399
        %v3420 = vpack.c.b16 %v3404, %v3402
        %v3421 = vpack.c.b16 %v3405, %v3403
        %3438 = vmatprep.subr.bf16.mxu0 %v3407
        %3439 = vmatpush1.bf16.msra.mxu0 %v3406
        %3440 = vmatprep.subr.bf16.mxu0 %v3409
        %3441 = vmatpush1.bf16.msra.mxu0 %v3408
        %3442 = vmatprep.subr.bf16.mxu0 %v3411
        %3443 = vmatpush1.bf16.msra.mxu0 %v3410
        %3444 = vmatprep.subr.bf16.mxu0 %v3413
        %3445 = vmatpush1.bf16.msra.mxu0 %v3412
        %3446 = vmatprep.subr.bf16.mxu0 %v3415
        %3447 = vmatpush1.bf16.msra.mxu0 %v3414
        %3448 = vmatprep.subr.bf16.mxu0 %v3417
        %3449 = vmatpush1.bf16.msra.mxu0 %v3416
        %3450 = vmatprep.subr.bf16.mxu0 %v3419
        %3451 = vmatpush1.bf16.msra.mxu0 %v3418
        %3452 = vmatprep.subr.bf16.mxu0 %v3421
        %3453 = vmatpush1.bf16.msra.mxu0 %v3420
        %3454 = vmatprep.subr.bf16.mxu0 0
        %3455 = vmatpush1.bf16.msra.mxu0 0
        %3456 = vmatprep.subr.bf16.mxu0 0
        %3457 = vmatpush1.bf16.msra.mxu0 0
        %3458 = vmatprep.subr.bf16.mxu0 0
        %3459 = vmatpush1.bf16.msra.mxu0 0
        %3460 = vmatprep.subr.bf16.mxu0 0
        %3461 = vmatpush1.bf16.msra.mxu0 0
        %3462 = vmatprep.subr.bf16.mxu0 0
        %3463 = vmatpush1.bf16.msra.mxu0 0
        %3464 = vmatprep.subr.bf16.mxu0 0
        %3465 = vmatpush1.bf16.msra.mxu0 0
        %3466 = vmatprep.subr.bf16.mxu0 0
        %3467 = vmatpush1.bf16.msra.mxu0 0
        %3468 = vmatprep.subr.bf16.mxu0 0
        %3469 = vmatpush1.bf16.msra.mxu0 0
        %3470 = vmatprep.mubr.bf16.mxu0 0
        %3471 = vmatmul.mubr.bf16.gmra.mrb[0].mxu0 %v3312
        %v3472 = vpop.f32.mrb[0].mxu0
        %v3473 = vadd.f32 %v3351, %v3472
        %v3474 = vpop.f32.mrb[0].mxu0
        %v3475 = vadd.f32 %v3355, %v3474
        %v3476 = vpop.f32.mrb[0].mxu0
        %v3477 = vadd.f32 %v3351, %v3476
        %v3478 = vpop.f32.mrb[0].mxu0
        %v3479 = vadd.f32 %v3355, %v3478
        %3480 = vmatprep.mubr.bf16.mxu0 0
        %3481 = vmatmul.mubr.bf16.gmra.mrb[0].mxu0 %v3313
        %v3482 = vpop.f32.mrb[0].mxu0
        %v3483 = vadd.f32 %v3351, %v3482
        %v3484 = vpop.f32.mrb[0].mxu0
        %v3485 = vadd.f32 %v3355, %v3484
        %v3486 = vpop.f32.mrb[0].mxu0
        %v3487 = vadd.f32 %v3351, %v3486
        %v3488 = vpop.f32.mrb[0].mxu0
        %v3489 = vadd.f32 %v3355, %v3488
        %3490 = vmatprep.mubr.bf16.mxu0 0
        %3491 = vmatmul.mubr.bf16.gmra.mrb[0].mxu0 %v3314
        %v3492 = vpop.f32.mrb[0].mxu0
        %v3493 = vadd.f32 %v3351, %v3492
        %v3494 = vpop.f32.mrb[0].mxu0
        %v3495 = vadd.f32 %v3355, %v3494
        %v3496 = vpop.f32.mrb[0].mxu0
        %v3497 = vadd.f32 %v3351, %v3496
        %v3498 = vpop.f32.mrb[0].mxu0
        %v3499 = vadd.f32 %v3355, %v3498
        %3500 = vmatprep.mubr.bf16.mxu0 0
        %3501 = vmatmul.mubr.bf16.gmra.mrb[0].mxu0 %v3315
        %v3502 = vpop.f32.mrb[0].mxu0
        %v3503 = vadd.f32 %v3351, %v3502
        %v3504 = vpop.f32.mrb[0].mxu0
        %v3505 = vadd.f32 %v3355, %v3504
        %v3506 = vpop.f32.mrb[0].mxu0
        %v3507 = vadd.f32 %v3351, %v3506
        %v3508 = vpop.f32.mrb[0].mxu0
        %v3509 = vadd.f32 %v3355, %v3508
        %3510 = vmatprep.mubr.bf16.mxu0 0
        %3511 = vmatmul.mubr.bf16.gmra.mrb[0].mxu0 %v3316
        %v3512 = vpop.f32.mrb[0].mxu0
        %v3513 = vadd.f32 %v3351, %v3512
        %v3514 = vpop.f32.mrb[0].mxu0
        %v3515 = vadd.f32 %v3355, %v3514
        %v3516 = vpop.f32.mrb[0].mxu0
        %v3517 = vadd.f32 %v3351, %v3516
        %v3518 = vpop.f32.mrb[0].mxu0
        %v3519 = vadd.f32 %v3355, %v3518
        %3520 = vmatprep.mubr.bf16.mxu0 0
        %3521 = vmatmul.mubr.bf16.gmra.mrb[0].mxu0 %v3317
        %v3522 = vpop.f32.mrb[0].mxu0
        %v3523 = vadd.f32 %v3351, %v3522
        %v3524 = vpop.f32.mrb[0].mxu0
        %v3525 = vadd.f32 %v3355, %v3524
        %v3526 = vpop.f32.mrb[0].mxu0
        %v3527 = vadd.f32 %v3351, %v3526
        %v3528 = vpop.f32.mrb[0].mxu0
        %v3529 = vadd.f32 %v3355, %v3528
        %3530 = vmatprep.mubr.bf16.mxu0 0
        %3531 = vmatmul.mubr.bf16.gmra.mrb[0].mxu0 %v3318
        %v3532 = vpop.f32.mrb[0].mxu0
        %v3533 = vadd.f32 %v3351, %v3532
        %v3534 = vpop.f32.mrb[0].mxu0
        %v3535 = vadd.f32 %v3355, %v3534
        %v3536 = vpop.f32.mrb[0].mxu0
        %v3537 = vadd.f32 %v3351, %v3536
        %v3538 = vpop.f32.mrb[0].mxu0
        %v3539 = vadd.f32 %v3355, %v3538
        %3540 = vmatprep.mubr.bf16.mxu0 0
        %3541 = vmatmul.mubr.bf16.gmra.mrb[0].mxu0 %v3319
        %v3542 = vpop.f32.mrb[0].mxu0
        %v3543 = vadd.f32 %v3351, %v3542
        %v3544 = vpop.f32.mrb[0].mxu0
        %v3545 = vadd.f32 %v3355, %v3544
        %v3546 = vpop.f32.mrb[0].mxu0
        %v3547 = vadd.f32 %v3351, %v3546
        %v3548 = vpop.f32.mrb[0].mxu0
        %v3549 = vadd.f32 %v3355, %v3548
        %3550 = vmatprep.mubr.bf16.mxu0 0
        %3551 = vmatmul.mubr.bf16.gmra.mrb[0].mxu0 %v3320
        %v3552 = vpop.f32.mrb[0].mxu0
        %v3553 = vadd.f32 %v3351, %v3552
        %v3554 = vpop.f32.mrb[0].mxu0
        %v3555 = vadd.f32 %v3355, %v3554
        %v3556 = vpop.f32.mrb[0].mxu0
        %v3557 = vadd.f32 %v3351, %v3556
        %v3558 = vpop.f32.mrb[0].mxu0
        %v3559 = vadd.f32 %v3355, %v3558
        %3560 = vmatprep.mubr.bf16.mxu0 0
        %3561 = vmatmul.mubr.bf16.gmra.mrb[0].mxu0 %v3321
        %v3562 = vpop.f32.mrb[0].mxu0
        %v3563 = vadd.f32 %v3351, %v3562
        %v3564 = vpop.f32.mrb[0].mxu0
        %v3565 = vadd.f32 %v3355, %v3564
        %v3566 = vpop.f32.mrb[0].mxu0
        %v3567 = vadd.f32 %v3351, %v3566
        %v3568 = vpop.f32.mrb[0].mxu0
        %v3569 = vadd.f32 %v3355, %v3568
        %3570 = vmatprep.mubr.bf16.mxu0 0
        %3571 = vmatmul.mubr.bf16.gmra.mrb[0].mxu0 %v3322
        %v3572 = vpop.f32.mrb[0].mxu0
        %v3573 = vadd.f32 %v3351, %v3572
        %v3574 = vpop.f32.mrb[0].mxu0
        %v3575 = vadd.f32 %v3355, %v3574
        %v3576 = vpop.f32.mrb[0].mxu0
        %v3577 = vadd.f32 %v3351, %v3576
        %v3578 = vpop.f32.mrb[0].mxu0
        %v3579 = vadd.f32 %v3355, %v3578
        %3580 = vmatprep.mubr.bf16.mxu0 0
        %3581 = vmatmul.mubr.bf16.gmra.mrb[0].mxu0 %v3323
        %v3582 = vpop.f32.mrb[0].mxu0
        %v3583 = vadd.f32 %v3351, %v3582
        %v3584 = vpop.f32.mrb[0].mxu0
        %v3585 = vadd.f32 %v3355, %v3584
        %v3586 = vpop.f32.mrb[0].mxu0
        %v3587 = vadd.f32 %v3351, %v3586
        %v3588 = vpop.f32.mrb[0].mxu0
        %v3589 = vadd.f32 %v3355, %v3588
        %3590 = vmatprep.mubr.bf16.mxu0 0
        %3591 = vmatmul.mubr.bf16.gmra.mrb[0].mxu0 %v3324
        %v3592 = vpop.f32.mrb[0].mxu0
        %v3593 = vadd.f32 %v3351, %v3592
        %v3594 = vpop.f32.mrb[0].mxu0
        %v3595 = vadd.f32 %v3355, %v3594
        %v3596 = vpop.f32.mrb[0].mxu0
        %v3597 = vadd.f32 %v3351, %v3596
        %v3598 = vpop.f32.mrb[0].mxu0
        %v3599 = vadd.f32 %v3355, %v3598
        %3600 = vmatprep.mubr.bf16.mxu0 0
        %3601 = vmatmul.mubr.bf16.gmra.mrb[0].mxu0 %v3325
        %v3602 = vpop.f32.mrb[0].mxu0
        %v3603 = vadd.f32 %v3351, %v3602
        %v3604 = vpop.f32.mrb[0].mxu0
        %v3605 = vadd.f32 %v3355, %v3604
        %v3606 = vpop.f32.mrb[0].mxu0
        %v3607 = vadd.f32 %v3351, %v3606
        %v3608 = vpop.f32.mrb[0].mxu0
        %v3609 = vadd.f32 %v3355, %v3608
        %3610 = vmatprep.mubr.bf16.mxu0 0
        %3611 = vmatmul.mubr.bf16.gmra.mrb[0].mxu0 %v3326
        %v3612 = vpop.f32.mrb[0].mxu0
        %v3613 = vadd.f32 %v3351, %v3612
        %v3614 = vpop.f32.mrb[0].mxu0
        %v3615 = vadd.f32 %v3355, %v3614
        %v3616 = vpop.f32.mrb[0].mxu0
        %v3617 = vadd.f32 %v3351, %v3616
        %v3618 = vpop.f32.mrb[0].mxu0
        %v3619 = vadd.f32 %v3355, %v3618
        %3620 = vmatprep.mubr.bf16.mxu0 0
        %3621 = vmatmul.mubr.bf16.gmra.mrb[0].mxu0 %v3327
        %v3622 = vpop.f32.mrb[0].mxu0
        %v3623 = vadd.f32 %v3351, %v3622
        %v3624 = vpop.f32.mrb[0].mxu0
        %v3625 = vadd.f32 %v3355, %v3624
        %v3626 = vpop.f32.mrb[0].mxu0
        %v3627 = vadd.f32 %v3351, %v3626
        %v3628 = vpop.f32.mrb[0].mxu0
        %v3629 = vadd.f32 %v3355, %v3628
        %3630 = vdwg.mxu0
        %v3631 = vtanh.pop %v3473
        %v3632 = vtanh.pop %v3477
        %v3633 = vtanh.pop %v3483
        %v3634 = vtanh.pop %v3487
        %v3635 = vtanh.pop %v3493
        %v3636 = vtanh.pop %v3497
        %v3637 = vtanh.pop %v3503
        %v3638 = vtanh.pop %v3507
        %v3639 = vtanh.pop %v3513
        %v3640 = vtanh.pop %v3517
        %v3641 = vtanh.pop %v3523
        %v3642 = vtanh.pop %v3527
        %v3643 = vtanh.pop %v3533
        %v3644 = vtanh.pop %v3537
        %v3645 = vtanh.pop %v3543
        %v3646 = vtanh.pop %v3547
        %v3647 = vtanh.pop %v3553
        %v3648 = vtanh.pop %v3557
        %v3649 = vtanh.pop %v3563
        %v3650 = vtanh.pop %v3567
        %v3651 = vtanh.pop %v3573
        %v3652 = vtanh.pop %v3577
        %v3653 = vtanh.pop %v3583
        %v3654 = vtanh.pop %v3587
        %v3655 = vtanh.pop %v3593
        %v3656 = vtanh.pop %v3597
        %v3657 = vtanh.pop %v3603
        %v3658 = vtanh.pop %v3607
        %v3659 = vtanh.pop %v3613
        %v3660 = vtanh.pop %v3617
        %v3661 = vtanh.pop %v3623
        %v3662 = vtanh.pop %v3627
        %v3663 = vmul.f32 %v3631, 1.442695
        %v3664 = vpow.pop %v3663
        %v3665 = vmul.f32 %v3632, 1.442695
        %v3666 = vpow.pop %v3665
        %v3667 = vmul.f32 %v3633, 1.442695
        %v3668 = vpow.pop %v3667
        %v3669 = vmul.f32 %v3634, 1.442695
        %v3670 = vpow.pop %v3669
        %v3671 = vmul.f32 %v3635, 1.442695
        %v3672 = vpow.pop %v3671
        %v3673 = vmul.f32 %v3636, 1.442695
        %v3674 = vpow.pop %v3673
        %v3675 = vmul.f32 %v3637, 1.442695
        %v3676 = vpow.pop %v3675
        %v3677 = vmul.f32 %v3638, 1.442695
        %v3678 = vpow.pop %v3677
        %v3679 = vmul.f32 %v3639, 1.442695
        %v3680 = vpow.pop %v3679
        %v3681 = vmul.f32 %v3640, 1.442695
        %v3682 = vpow.pop %v3681
        %v3683 = vmul.f32 %v3641, 1.442695
        %v3684 = vpow.pop %v3683
        %v3685 = vmul.f32 %v3642, 1.442695
        %v3686 = vpow.pop %v3685
        %v3687 = vmul.f32 %v3643, 1.442695
        %v3688 = vpow.pop %v3687
        %v3689 = vmul.f32 %v3644, 1.442695
        %v3690 = vpow.pop %v3689
        %v3691 = vmul.f32 %v3645, 1.442695
        %v3692 = vpow.pop %v3691
        %v3693 = vmul.f32 %v3646, 1.442695
        %v3694 = vpow.pop %v3693
        %v3695 = vmul.f32 %v3647, 1.442695
        %v3696 = vpow.pop %v3695
        %v3697 = vmul.f32 %v3648, 1.442695
        %v3698 = vpow.pop %v3697
        %v3699 = vmul.f32 %v3649, 1.442695
        %v3700 = vpow.pop %v3699
        %v3701 = vmul.f32 %v3650, 1.442695
        %v3702 = vpow.pop %v3701
        %v3703 = vmul.f32 %v3651, 1.442695
        %v3704 = vpow.pop %v3703
        %v3705 = vmul.f32 %v3652, 1.442695
        %v3706 = vpow.pop %v3705
        %v3707 = vmul.f32 %v3653, 1.442695
        %v3708 = vpow.pop %v3707
        %v3709 = vmul.f32 %v3654, 1.442695
        %v3710 = vpow.pop %v3709
        %v3711 = vmul.f32 %v3655, 1.442695
        %v3712 = vpow.pop %v3711
        %v3713 = vmul.f32 %v3656, 1.442695
        %v3714 = vpow.pop %v3713
        %v3715 = vmul.f32 %v3657, 1.442695
        %v3716 = vpow.pop %v3715
        %v3717 = vmul.f32 %v3658, 1.442695
        %v3718 = vpow.pop %v3717
        %v3719 = vmul.f32 %v3659, 1.442695
        %v3720 = vpow.pop %v3719
        %v3721 = vmul.f32 %v3660, 1.442695
        %v3722 = vpow.pop %v3721
        %v3723 = vmul.f32 %v3661, 1.442695
        %v3724 = vpow.pop %v3723
        %v3725 = vmul.f32 %v3662, 1.442695
        %v3726 = vpow.pop %v3725
        %v3727 = vmul.f32 %v2045, %v3664
        %v3728 = vmul.f32 %v2046, %v3666
        %v3729 = vmul.f32 %v2047, %v3668
        %v3730 = vmul.f32 %v2048, %v3670
        %v3731 = vmul.f32 %v2049, %v3672
        %v3732 = vmul.f32 %v2050, %v3674
        %v3733 = vmul.f32 %v2051, %v3676
        %v3734 = vmul.f32 %v2052, %v3678
        %v3735 = vmul.f32 %v2053, %v3680
        %v3736 = vmul.f32 %v2054, %v3682
        %v3737 = vmul.f32 %v2055, %v3684
        %v3738 = vmul.f32 %v2056, %v3686
        %v3739 = vmul.f32 %v2057, %v3688
        %v3740 = vmul.f32 %v2058, %v3690
        %v3741 = vmul.f32 %v2059, %v3692
        %v3742 = vmul.f32 %v2060, %v3694
        %v3743 = vmul.f32 %v2061, %v3696
        %v3744 = vmul.f32 %v2062, %v3698
        %v3745 = vmul.f32 %v2063, %v3700
        %v3746 = vmul.f32 %v2064, %v3702
        %v3747 = vmul.f32 %v2065, %v3704
        %v3748 = vmul.f32 %v2066, %v3706
        %v3749 = vmul.f32 %v2067, %v3708
        %v3750 = vmul.f32 %v2068, %v3710
        %v3751 = vmul.f32 %v2069, %v3712
        %v3752 = vmul.f32 %v2070, %v3714
        %v3753 = vmul.f32 %v2071, %v3716
        %v3754 = vmul.f32 %v2072, %v3718
        %v3755 = vmul.f32 %v2073, %v3720
        %v3756 = vmul.f32 %v2074, %v3722
        %v3757 = vmul.f32 %v2075, %v3724
        %v3758 = vmul.f32 %v2076, %v3726
        %v3759 = vadd.f32 %v3727, %v3475
        %v3760 = vadd.f32 %v3728, %v3479
        %v3761 = vadd.f32 %v3729, %v3485
        %v3762 = vadd.f32 %v3730, %v3489
        %v3763 = vadd.f32 %v3731, %v3495
        %v3764 = vadd.f32 %v3732, %v3499
        %v3765 = vadd.f32 %v3733, %v3505
        %v3766 = vadd.f32 %v3734, %v3509
        %v3767 = vadd.f32 %v3735, %v3515
        %v3768 = vadd.f32 %v3736, %v3519
        %v3769 = vadd.f32 %v3737, %v3525
        %v3770 = vadd.f32 %v3738, %v3529
        %v3771 = vadd.f32 %v3739, %v3535
        %v3772 = vadd.f32 %v3740, %v3539
        %v3773 = vadd.f32 %v3741, %v3545
        %v3774 = vadd.f32 %v3742, %v3549
        %v3775 = vadd.f32 %v3743, %v3555
        %v3776 = vadd.f32 %v3744, %v3559
        %v3777 = vadd.f32 %v3745, %v3565
        %v3778 = vadd.f32 %v3746, %v3569
        %v3779 = vadd.f32 %v3747, %v3575
        %v3780 = vadd.f32 %v3748, %v3579
        %v3781 = vadd.f32 %v3749, %v3585
        %v3782 = vadd.f32 %v3750, %v3589
        %v3783 = vadd.f32 %v3751, %v3595
        %v3784 = vadd.f32 %v3752, %v3599
        %v3785 = vadd.f32 %v3753, %v3605
        %v3786 = vadd.f32 %v3754, %v3609
        %v3787 = vadd.f32 %v3755, %v3615
        %v3788 = vadd.f32 %v3756, %v3619
        %v3789 = vadd.f32 %v3757, %v3625
        %v3790 = vadd.f32 %v3758, %v3629
        %3791 = vadd.xlane.f32.xlu0 %v3631
        %v3792 = vpop.xlane.xlu0 %3791
        %3793 = vadd.xlane.f32.xlu0 %v3632
        %v3794 = vpop.xlane.xlu0 %3793
        %3795 = vadd.xlane.f32.xlu0 %v3633
        %v3796 = vpop.xlane.xlu0 %3795
        %3797 = vadd.xlane.f32.xlu0 %v3634
        %v3798 = vpop.xlane.xlu0 %3797
        %3799 = vadd.xlane.f32.xlu0 %v3635
        %v3800 = vpop.xlane.xlu0 %3799
        %3801 = vadd.xlane.f32.xlu0 %v3636
        %v3802 = vpop.xlane.xlu0 %3801
        %3803 = vadd.xlane.f32.xlu0 %v3637
        %v3804 = vpop.xlane.xlu0 %3803
        %3805 = vadd.xlane.f32.xlu0 %v3638
        %v3806 = vpop.xlane.xlu0 %3805
        %3807 = vadd.xlane.f32.xlu0 %v3639
        %v3808 = vpop.xlane.xlu0 %3807
        %3809 = vadd.xlane.f32.xlu0 %v3640
        %v3810 = vpop.xlane.xlu0 %3809
        %3811 = vadd.xlane.f32.xlu0 %v3641
        %v3812 = vpop.xlane.xlu0 %3811
        %3813 = vadd.xlane.f32.xlu0 %v3642
        %v3814 = vpop.xlane.xlu0 %3813
        %3815 = vadd.xlane.f32.xlu0 %v3643
        %v3816 = vpop.xlane.xlu0 %3815
        %3817 = vadd.xlane.f32.xlu0 %v3644
        %v3818 = vpop.xlane.xlu0 %3817
        %3819 = vadd.xlane.f32.xlu0 %v3645
        %v3820 = vpop.xlane.xlu0 %3819
        %3821 = vadd.xlane.f32.xlu0 %v3646
        %v3822 = vpop.xlane.xlu0 %3821
        %3823 = vadd.xlane.f32.xlu0 %v3647
        %v3824 = vpop.xlane.xlu0 %3823
        %3825 = vadd.xlane.f32.xlu0 %v3648
        %v3826 = vpop.xlane.xlu0 %3825
        %3827 = vadd.xlane.f32.xlu0 %v3649
        %v3828 = vpop.xlane.xlu0 %3827
        %3829 = vadd.xlane.f32.xlu0 %v3650
        %v3830 = vpop.xlane.xlu0 %3829
        %3831 = vadd.xlane.f32.xlu0 %v3651
        %v3832 = vpop.xlane.xlu0 %3831
        %3833 = vadd.xlane.f32.xlu0 %v3652
        %v3834 = vpop.xlane.xlu0 %3833
        %3835 = vadd.xlane.f32.xlu0 %v3653
        %v3836 = vpop.xlane.xlu0 %3835
        %3837 = vadd.xlane.f32.xlu0 %v3654
        %v3838 = vpop.xlane.xlu0 %3837
        %3839 = vadd.xlane.f32.xlu0 %v3655
        %v3840 = vpop.xlane.xlu0 %3839
        %3841 = vadd.xlane.f32.xlu0 %v3656
        %v3842 = vpop.xlane.xlu0 %3841
        %3843 = vadd.xlane.f32.xlu0 %v3657
        %v3844 = vpop.xlane.xlu0 %3843
        %3845 = vadd.xlane.f32.xlu0 %v3658
        %v3846 = vpop.xlane.xlu0 %3845
        %3847 = vadd.xlane.f32.xlu0 %v3659
        %v3848 = vpop.xlane.xlu0 %3847
        %3849 = vadd.xlane.f32.xlu0 %v3660
        %v3850 = vpop.xlane.xlu0 %3849
        %3851 = vadd.xlane.f32.xlu0 %v3661
        %v3852 = vpop.xlane.xlu0 %3851
        %3853 = vadd.xlane.f32.xlu0 %v3662
        %v3854 = vpop.xlane.xlu0 %3853
        %v3855 = vadd.f32 %v2998, %v3792
        %v3856 = vadd.f32 %v2999, %v3794
        %v3857 = vadd.f32 %v3000, %v3796
        %v3858 = vadd.f32 %v3001, %v3798
        %v3859 = vadd.f32 %v3002, %v3800
        %v3860 = vadd.f32 %v3003, %v3802
        %v3861 = vadd.f32 %v3004, %v3804
        %v3862 = vadd.f32 %v3005, %v3806
        %v3863 = vadd.f32 %v3006, %v3808
        %v3864 = vadd.f32 %v3007, %v3810
        %v3865 = vadd.f32 %v3008, %v3812
        %v3866 = vadd.f32 %v3009, %v3814
        %v3867 = vadd.f32 %v3010, %v3816
        %v3868 = vadd.f32 %v3011, %v3818
        %v3869 = vadd.f32 %v3012, %v3820
        %v3870 = vadd.f32 %v3013, %v3822
        %v3871 = vadd.f32 %v3014, %v3824
        %v3872 = vadd.f32 %v3015, %v3826
        %v3873 = vadd.f32 %v3016, %v3828
        %v3874 = vadd.f32 %v3017, %v3830
        %v3875 = vadd.f32 %v3018, %v3832
        %v3876 = vadd.f32 %v3019, %v3834
        %v3877 = vadd.f32 %v3020, %v3836
        %v3878 = vadd.f32 %v3021, %v3838
        %v3879 = vadd.f32 %v3022, %v3840
        %v3880 = vadd.f32 %v3023, %v3842
        %v3881 = vadd.f32 %v3024, %v3844
        %v3882 = vadd.f32 %v3025, %v3846
        %v3883 = vadd.f32 %v3026, %v3848
        %v3884 = vadd.f32 %v3027, %v3850
        %v3885 = vadd.f32 %v3028, %v3852
        %v3886 = vadd.f32 %v3029, %v3854
        %3887 = vst [vmem:[%s248] sm:$0xff] %v3759
        %3888 = vst [vmem:[%s248 + $0x10] sm:$0xff] %v3760
        %3889 = vst [vmem:[%s248 + $0x20] sm:$0xff] %v3761
        %3890 = vst [vmem:[%s248 + $0x30] sm:$0xff] %v3762
        %3891 = vst [vmem:[%s248 + $0x40] sm:$0xff] %v3763
        %3892 = vst [vmem:[%s248 + $0x50] sm:$0xff] %v3764
        %3893 = vst [vmem:[%s248 + $0x60] sm:$0xff] %v3765
        %3894 = vst [vmem:[%s248 + $0x70] sm:$0xff] %v3766
        %3895 = vst [vmem:[%s248 + $0x80] sm:$0xff] %v3767
        %3896 = vst [vmem:[%s248 + $0x90] sm:$0xff] %v3768
        %3897 = vst [vmem:[%s248 + $0xa0] sm:$0xff] %v3769
        %3898 = vst [vmem:[%s248 + $0xb0] sm:$0xff] %v3770
        %3899 = vst [vmem:[%s248 + $0xc0] sm:$0xff] %v3771
        %3900 = vst [vmem:[%s248 + $0xd0] sm:$0xff] %v3772
        %3901 = vst [vmem:[%s248 + $0xe0] sm:$0xff] %v3773
        %3902 = vst [vmem:[%s248 + $0xf0] sm:$0xff] %v3774
        %3903 = vst [vmem:[%s248 + $0x100] sm:$0xff] %v3775
        %3904 = vst [vmem:[%s248 + $0x110] sm:$0xff] %v3776
        %3905 = vst [vmem:[%s248 + $0x120] sm:$0xff] %v3777
        %3906 = vst [vmem:[%s248 + $0x130] sm:$0xff] %v3778
        %3907 = vst [vmem:[%s248 + $0x140] sm:$0xff] %v3779
        %3908 = vst [vmem:[%s248 + $0x150] sm:$0xff] %v3780
        %3909 = vst [vmem:[%s248 + $0x160] sm:$0xff] %v3781
        %3910 = vst [vmem:[%s248 + $0x170] sm:$0xff] %v3782
        %3911 = vst [vmem:[%s248 + $0x180] sm:$0xff] %v3783
        %3912 = vst [vmem:[%s248 + $0x190] sm:$0xff] %v3784
        %3913 = vst [vmem:[%s248 + $0x1a0] sm:$0xff] %v3785
        %3914 = vst [vmem:[%s248 + $0x1b0] sm:$0xff] %v3786
        %3915 = vst [vmem:[%s248 + $0x1c0] sm:$0xff] %v3787
        %3916 = vst [vmem:[%s248 + $0x1d0] sm:$0xff] %v3788
        %3917 = vst [vmem:[%s248 + $0x1e0] sm:$0xff] %v3789
        %3918 = vst [vmem:[%s248 + $0x1f0] sm:$0xff] %v3790
        %3919 = vst [vmem:[%s248 + $0x8] sm:$0xff] %v2902
        %3920 = vst [vmem:[%s248 + $0x18] sm:$0xff] %v2903
        %3921 = vst [vmem:[%s248 + $0x28] sm:$0xff] %v2904
        %3922 = vst [vmem:[%s248 + $0x38] sm:$0xff] %v2905
        %3923 = vst [vmem:[%s248 + $0x48] sm:$0xff] %v2906
        %3924 = vst [vmem:[%s248 + $0x58] sm:$0xff] %v2907
        %3925 = vst [vmem:[%s248 + $0x68] sm:$0xff] %v2908
        %3926 = vst [vmem:[%s248 + $0x78] sm:$0xff] %v2909
        %3927 = vst [vmem:[%s248 + $0x88] sm:$0xff] %v2910
        %3928 = vst [vmem:[%s248 + $0x98] sm:$0xff] %v2911
        %3929 = vst [vmem:[%s248 + $0xa8] sm:$0xff] %v2912
        %3930 = vst [vmem:[%s248 + $0xb8] sm:$0xff] %v2913
        %3931 = vst [vmem:[%s248 + $0xc8] sm:$0xff] %v2914
        %3932 = vst [vmem:[%s248 + $0xd8] sm:$0xff] %v2915
        %3933 = vst [vmem:[%s248 + $0xe8] sm:$0xff] %v2916
        %3934 = vst [vmem:[%s248 + $0xf8] sm:$0xff] %v2917
        %3935 = vst [vmem:[%s248 + $0x108] sm:$0xff] %v2918
        %3936 = vst [vmem:[%s248 + $0x118] sm:$0xff] %v2919
        %3937 = vst [vmem:[%s248 + $0x128] sm:$0xff] %v2920
        %3938 = vst [vmem:[%s248 + $0x138] sm:$0xff] %v2921
        %3939 = vst [vmem:[%s248 + $0x148] sm:$0xff] %v2922
        %3940 = vst [vmem:[%s248 + $0x158] sm:$0xff] %v2923
        %3941 = vst [vmem:[%s248 + $0x168] sm:$0xff] %v2924
        %3942 = vst [vmem:[%s248 + $0x178] sm:$0xff] %v2925
        %3943 = vst [vmem:[%s248 + $0x188] sm:$0xff] %v2926
        %3944 = vst [vmem:[%s248 + $0x198] sm:$0xff] %v2927
        %3945 = vst [vmem:[%s248 + $0x1a8] sm:$0xff] %v2928
        %3946 = vst [vmem:[%s248 + $0x1b8] sm:$0xff] %v2929
        %3947 = vst [vmem:[%s248 + $0x1c8] sm:$0xff] %v2930
        %3948 = vst [vmem:[%s248 + $0x1d8] sm:$0xff] %v2931
        %3949 = vst [vmem:[%s248 + $0x1e8] sm:$0xff] %v2932
        %3950 = vst [vmem:[%s248 + $0x1f8] sm:$0xff] %v2933
        %v3951 = vmul.f32 %v3759, %v3759
        %v3952 = vmul.f32 %v3760, %v3760
        %v3953 = vmul.f32 %v3761, %v3761
        %v3954 = vmul.f32 %v3762, %v3762
        %v3955 = vmul.f32 %v3763, %v3763
        %v3956 = vmul.f32 %v3764, %v3764
        %v3957 = vmul.f32 %v3765, %v3765
        %v3958 = vmul.f32 %v3766, %v3766
        %v3959 = vmul.f32 %v3767, %v3767
        %v3960 = vmul.f32 %v3768, %v3768
        %v3961 = vmul.f32 %v3769, %v3769
        %v3962 = vmul.f32 %v3770, %v3770
        %v3963 = vmul.f32 %v3771, %v3771
        %v3964 = vmul.f32 %v3772, %v3772
        %v3965 = vmul.f32 %v3773, %v3773
        %v3966 = vmul.f32 %v3774, %v3774
        %v3967 = vmul.f32 %v3775, %v3775
        %v3968 = vmul.f32 %v3776, %v3776
        %v3969 = vmul.f32 %v3777, %v3777
        %v3970 = vmul.f32 %v3778, %v3778
        %v3971 = vmul.f32 %v3779, %v3779
        %v3972 = vmul.f32 %v3780, %v3780
        %v3973 = vmul.f32 %v3781, %v3781
        %v3974 = vmul.f32 %v3782, %v3782
        %v3975 = vmul.f32 %v3783, %v3783
        %v3976 = vmul.f32 %v3784, %v3784
        %v3977 = vmul.f32 %v3785, %v3785
        %v3978 = vmul.f32 %v3786, %v3786
        %v3979 = vmul.f32 %v3787, %v3787
        %v3980 = vmul.f32 %v3788, %v3788
        %v3981 = vmul.f32 %v3789, %v3789
        %v3982 = vmul.f32 %v3790, %v3790
        %3983 = vadd.xlane.f32.xlu0 %v3951
        %v3984 = vpop.xlane.xlu0 %3983
        %3985 = vadd.xlane.f32.xlu0 %v3952
        %v3986 = vpop.xlane.xlu0 %3985
        %3987 = vadd.xlane.f32.xlu0 %v3953
        %v3988 = vpop.xlane.xlu0 %3987
        %3989 = vadd.xlane.f32.xlu0 %v3954
        %v3990 = vpop.xlane.xlu0 %3989
        %3991 = vadd.xlane.f32.xlu0 %v3955
        %v3992 = vpop.xlane.xlu0 %3991
        %3993 = vadd.xlane.f32.xlu0 %v3956
        %v3994 = vpop.xlane.xlu0 %3993
        %3995 = vadd.xlane.f32.xlu0 %v3957
        %v3996 = vpop.xlane.xlu0 %3995
        %3997 = vadd.xlane.f32.xlu0 %v3958
        %v3998 = vpop.xlane.xlu0 %3997
        %3999 = vadd.xlane.f32.xlu0 %v3959
        %v4000 = vpop.xlane.xlu0 %3999
        %4001 = vadd.xlane.f32.xlu0 %v3960
        %v4002 = vpop.xlane.xlu0 %4001
        %4003 = vadd.xlane.f32.xlu0 %v3961
        %v4004 = vpop.xlane.xlu0 %4003
        %4005 = vadd.xlane.f32.xlu0 %v3962
        %v4006 = vpop.xlane.xlu0 %4005
        %4007 = vadd.xlane.f32.xlu0 %v3963
        %v4008 = vpop.xlane.xlu0 %4007
        %4009 = vadd.xlane.f32.xlu0 %v3964
        %v4010 = vpop.xlane.xlu0 %4009
        %4011 = vadd.xlane.f32.xlu0 %v3965
        %v4012 = vpop.xlane.xlu0 %4011
        %4013 = vadd.xlane.f32.xlu0 %v3966
        %v4014 = vpop.xlane.xlu0 %4013
        %4015 = vadd.xlane.f32.xlu0 %v3967
        %v4016 = vpop.xlane.xlu0 %4015
        %4017 = vadd.xlane.f32.xlu0 %v3968
        %v4018 = vpop.xlane.xlu0 %4017
        %4019 = vadd.xlane.f32.xlu0 %v3969
        %v4020 = vpop.xlane.xlu0 %4019
        %4021 = vadd.xlane.f32.xlu0 %v3970
        %v4022 = vpop.xlane.xlu0 %4021
        %4023 = vadd.xlane.f32.xlu0 %v3971
        %v4024 = vpop.xlane.xlu0 %4023
        %4025 = vadd.xlane.f32.xlu0 %v3972
        %v4026 = vpop.xlane.xlu0 %4025
        %4027 = vadd.xlane.f32.xlu0 %v3973
        %v4028 = vpop.xlane.xlu0 %4027
        %4029 = vadd.xlane.f32.xlu0 %v3974
        %v4030 = vpop.xlane.xlu0 %4029
        %4031 = vadd.xlane.f32.xlu0 %v3975
        %v4032 = vpop.xlane.xlu0 %4031
        %4033 = vadd.xlane.f32.xlu0 %v3976
        %v4034 = vpop.xlane.xlu0 %4033
        %4035 = vadd.xlane.f32.xlu0 %v3977
        %v4036 = vpop.xlane.xlu0 %4035
        %4037 = vadd.xlane.f32.xlu0 %v3978
        %v4038 = vpop.xlane.xlu0 %4037
        %4039 = vadd.xlane.f32.xlu0 %v3979
        %v4040 = vpop.xlane.xlu0 %4039
        %4041 = vadd.xlane.f32.xlu0 %v3980
        %v4042 = vpop.xlane.xlu0 %4041
        %4043 = vadd.xlane.f32.xlu0 %v3981
        %v4044 = vpop.xlane.xlu0 %4043
        %4045 = vadd.xlane.f32.xlu0 %v3982
        %v4046 = vpop.xlane.xlu0 %4045
        %v4047 = vmul.f32 %v2902, %v2902
        %v4048 = vmul.f32 %v2903, %v2903
        %v4049 = vmul.f32 %v2904, %v2904
        %v4050 = vmul.f32 %v2905, %v2905
        %v4051 = vmul.f32 %v2906, %v2906
        %v4052 = vmul.f32 %v2907, %v2907
        %v4053 = vmul.f32 %v2908, %v2908
        %v4054 = vmul.f32 %v2909, %v2909
        %v4055 = vmul.f32 %v2910, %v2910
        %v4056 = vmul.f32 %v2911, %v2911
        %v4057 = vmul.f32 %v2912, %v2912
        %v4058 = vmul.f32 %v2913, %v2913
        %v4059 = vmul.f32 %v2914, %v2914
        %v4060 = vmul.f32 %v2915, %v2915
        %v4061 = vmul.f32 %v2916, %v2916
        %v4062 = vmul.f32 %v2917, %v2917
        %v4063 = vmul.f32 %v2918, %v2918
        %v4064 = vmul.f32 %v2919, %v2919
        %v4065 = vmul.f32 %v2920, %v2920
        %v4066 = vmul.f32 %v2921, %v2921
        %v4067 = vmul.f32 %v2922, %v2922
        %v4068 = vmul.f32 %v2923, %v2923
        %v4069 = vmul.f32 %v2924, %v2924
        %v4070 = vmul.f32 %v2925, %v2925
        %v4071 = vmul.f32 %v2926, %v2926
        %v4072 = vmul.f32 %v2927, %v2927
        %v4073 = vmul.f32 %v2928, %v2928
        %v4074 = vmul.f32 %v2929, %v2929
        %v4075 = vmul.f32 %v2930, %v2930
        %v4076 = vmul.f32 %v2931, %v2931
        %v4077 = vmul.f32 %v2932, %v2932
        %v4078 = vmul.f32 %v2933, %v2933
        %4079 = vadd.xlane.f32.xlu0 %v4047
        %v4080 = vpop.xlane.xlu0 %4079
        %4081 = vadd.xlane.f32.xlu0 %v4048
        %v4082 = vpop.xlane.xlu0 %4081
        %4083 = vadd.xlane.f32.xlu0 %v4049
        %v4084 = vpop.xlane.xlu0 %4083
        %4085 = vadd.xlane.f32.xlu0 %v4050
        %v4086 = vpop.xlane.xlu0 %4085
        %4087 = vadd.xlane.f32.xlu0 %v4051
        %v4088 = vpop.xlane.xlu0 %4087
        %4089 = vadd.xlane.f32.xlu0 %v4052
        %v4090 = vpop.xlane.xlu0 %4089
        %4091 = vadd.xlane.f32.xlu0 %v4053
        %v4092 = vpop.xlane.xlu0 %4091
        %4093 = vadd.xlane.f32.xlu0 %v4054
        %v4094 = vpop.xlane.xlu0 %4093
        %4095 = vadd.xlane.f32.xlu0 %v4055
        %v4096 = vpop.xlane.xlu0 %4095
        %4097 = vadd.xlane.f32.xlu0 %v4056
        %v4098 = vpop.xlane.xlu0 %4097
        %4099 = vadd.xlane.f32.xlu0 %v4057
        %v4100 = vpop.xlane.xlu0 %4099
        %4101 = vadd.xlane.f32.xlu0 %v4058
        %v4102 = vpop.xlane.xlu0 %4101
        %4103 = vadd.xlane.f32.xlu0 %v4059
        %v4104 = vpop.xlane.xlu0 %4103
        %4105 = vadd.xlane.f32.xlu0 %v4060
        %v4106 = vpop.xlane.xlu0 %4105
        %4107 = vadd.xlane.f32.xlu0 %v4061
        %v4108 = vpop.xlane.xlu0 %4107
        %4109 = vadd.xlane.f32.xlu0 %v4062
        %v4110 = vpop.xlane.xlu0 %4109
        %4111 = vadd.xlane.f32.xlu0 %v4063
        %v4112 = vpop.xlane.xlu0 %4111
        %4113 = vadd.xlane.f32.xlu0 %v4064
        %v4114 = vpop.xlane.xlu0 %4113
        %4115 = vadd.xlane.f32.xlu0 %v4065
        %v4116 = vpop.xlane.xlu0 %4115
        %4117 = vadd.xlane.f32.xlu0 %v4066
        %v4118 = vpop.xlane.xlu0 %4117
        %4119 = vadd.xlane.f32.xlu0 %v4067
        %v4120 = vpop.xlane.xlu0 %4119
        %4121 = vadd.xlane.f32.xlu0 %v4068
        %v4122 = vpop.xlane.xlu0 %4121
        %4123 = vadd.xlane.f32.xlu0 %v4069
        %v4124 = vpop.xlane.xlu0 %4123
        %4125 = vadd.xlane.f32.xlu0 %v4070
        %v4126 = vpop.xlane.xlu0 %4125
        %4127 = vadd.xlane.f32.xlu0 %v4071
        %v4128 = vpop.xlane.xlu0 %4127
        %4129 = vadd.xlane.f32.xlu0 %v4072
        %v4130 = vpop.xlane.xlu0 %4129
        %4131 = vadd.xlane.f32.xlu0 %v4073
        %v4132 = vpop.xlane.xlu0 %4131
        %4133 = vadd.xlane.f32.xlu0 %v4074
        %v4134 = vpop.xlane.xlu0 %4133
        %4135 = vadd.xlane.f32.xlu0 %v4075
        %v4136 = vpop.xlane.xlu0 %4135
        %4137 = vadd.xlane.f32.xlu0 %v4076
        %v4138 = vpop.xlane.xlu0 %4137
        %4139 = vadd.xlane.f32.xlu0 %v4077
        %v4140 = vpop.xlane.xlu0 %4139
        %4141 = vadd.xlane.f32.xlu0 %v4078
        %v4142 = vpop.xlane.xlu0 %4141
        %v4143 = vadd.f32 %v3984, %v4080
        %v4144 = vadd.f32 %v3986, %v4082
        %v4145 = vadd.f32 %v3988, %v4084
        %v4146 = vadd.f32 %v3990, %v4086
        %v4147 = vadd.f32 %v3992, %v4088
        %v4148 = vadd.f32 %v3994, %v4090
        %v4149 = vadd.f32 %v3996, %v4092
        %v4150 = vadd.f32 %v3998, %v4094
        %v4151 = vadd.f32 %v4000, %v4096
        %v4152 = vadd.f32 %v4002, %v4098
        %v4153 = vadd.f32 %v4004, %v4100
        %v4154 = vadd.f32 %v4006, %v4102
        %v4155 = vadd.f32 %v4008, %v4104
        %v4156 = vadd.f32 %v4010, %v4106
        %v4157 = vadd.f32 %v4012, %v4108
        %v4158 = vadd.f32 %v4014, %v4110
        %v4159 = vadd.f32 %v4016, %v4112
        %v4160 = vadd.f32 %v4018, %v4114
        %v4161 = vadd.f32 %v4020, %v4116
        %v4162 = vadd.f32 %v4022, %v4118
        %v4163 = vadd.f32 %v4024, %v4120
        %v4164 = vadd.f32 %v4026, %v4122
        %v4165 = vadd.f32 %v4028, %v4124
        %v4166 = vadd.f32 %v4030, %v4126
        %v4167 = vadd.f32 %v4032, %v4128
        %v4168 = vadd.f32 %v4034, %v4130
        %v4169 = vadd.f32 %v4036, %v4132
        %v4170 = vadd.f32 %v4038, %v4134
        %v4171 = vadd.f32 %v4040, %v4136
        %v4172 = vadd.f32 %v4042, %v4138
        %v4173 = vadd.f32 %v4044, %v4140
        %v4174 = vadd.f32 %v4046, %v4142
        %v4175 = vmul.f32 %v4143, -0.5
        %v4176 = vmul.f32 %v4144, -0.5
        %v4177 = vmul.f32 %v4145, -0.5
        %v4178 = vmul.f32 %v4146, -0.5
        %v4179 = vmul.f32 %v4147, -0.5
        %v4180 = vmul.f32 %v4148, -0.5
        %v4181 = vmul.f32 %v4149, -0.5
        %v4182 = vmul.f32 %v4150, -0.5
        %v4183 = vmul.f32 %v4151, -0.5
        %v4184 = vmul.f32 %v4152, -0.5
        %v4185 = vmul.f32 %v4153, -0.5
        %v4186 = vmul.f32 %v4154, -0.5
        %v4187 = vmul.f32 %v4155, -0.5
        %v4188 = vmul.f32 %v4156, -0.5
        %v4189 = vmul.f32 %v4157, -0.5
        %v4190 = vmul.f32 %v4158, -0.5
        %v4191 = vmul.f32 %v4159, -0.5
        %v4192 = vmul.f32 %v4160, -0.5
        %v4193 = vmul.f32 %v4161, -0.5
        %v4194 = vmul.f32 %v4162, -0.5
        %v4195 = vmul.f32 %v4163, -0.5
        %v4196 = vmul.f32 %v4164, -0.5
        %v4197 = vmul.f32 %v4165, -0.5
        %v4198 = vmul.f32 %v4166, -0.5
        %v4199 = vmul.f32 %v4167, -0.5
        %v4200 = vmul.f32 %v4168, -0.5
        %v4201 = vmul.f32 %v4169, -0.5
        %v4202 = vmul.f32 %v4170, -0.5
        %v4203 = vmul.f32 %v4171, -0.5
        %v4204 = vmul.f32 %v4172, -0.5
        %v4205 = vmul.f32 %v4173, -0.5
        %v4206 = vmul.f32 %v4174, -0.5
        %v4207 = vadd.f32 %v4175, -235.24826
        %v4208 = vadd.f32 %v4176, -235.24826
        %v4209 = vadd.f32 %v4177, -235.24826
        %v4210 = vadd.f32 %v4178, -235.24826
        %v4211 = vadd.f32 %v4179, -235.24826
        %v4212 = vadd.f32 %v4180, -235.24826
        %v4213 = vadd.f32 %v4181, -235.24826
        %v4214 = vadd.f32 %v4182, -235.24826
        %v4215 = vadd.f32 %v4183, -235.24826
        %v4216 = vadd.f32 %v4184, -235.24826
        %v4217 = vadd.f32 %v4185, -235.24826
        %v4218 = vadd.f32 %v4186, -235.24826
        %v4219 = vadd.f32 %v4187, -235.24826
        %v4220 = vadd.f32 %v4188, -235.24826
        %v4221 = vadd.f32 %v4189, -235.24826
        %v4222 = vadd.f32 %v4190, -235.24826
        %v4223 = vadd.f32 %v4191, -235.24826
        %v4224 = vadd.f32 %v4192, -235.24826
        %v4225 = vadd.f32 %v4193, -235.24826
        %v4226 = vadd.f32 %v4194, -235.24826
        %v4227 = vadd.f32 %v4195, -235.24826
        %v4228 = vadd.f32 %v4196, -235.24826
        %v4229 = vadd.f32 %v4197, -235.24826
        %v4230 = vadd.f32 %v4198, -235.24826
        %v4231 = vadd.f32 %v4199, -235.24826
        %v4232 = vadd.f32 %v4200, -235.24826
        %v4233 = vadd.f32 %v4201, -235.24826
        %v4234 = vadd.f32 %v4202, -235.24826
        %v4235 = vadd.f32 %v4203, -235.24826
        %v4236 = vadd.f32 %v4204, -235.24826
        %v4237 = vadd.f32 %v4205, -235.24826
        %v4238 = vadd.f32 %v4206, -235.24826
        %v4239 = vadd.f32 %v4207, %v3855
        %v4240 = vadd.f32 %v4208, %v3856
        %v4241 = vadd.f32 %v4209, %v3857
        %v4242 = vadd.f32 %v4210, %v3858
        %v4243 = vadd.f32 %v4211, %v3859
        %v4244 = vadd.f32 %v4212, %v3860
        %v4245 = vadd.f32 %v4213, %v3861
        %v4246 = vadd.f32 %v4214, %v3862
        %v4247 = vadd.f32 %v4215, %v3863
        %v4248 = vadd.f32 %v4216, %v3864
        %v4249 = vadd.f32 %v4217, %v3865
        %v4250 = vadd.f32 %v4218, %v3866
        %v4251 = vadd.f32 %v4219, %v3867
        %v4252 = vadd.f32 %v4220, %v3868
        %v4253 = vadd.f32 %v4221, %v3869
        %v4254 = vadd.f32 %v4222, %v3870
        %v4255 = vadd.f32 %v4223, %v3871
        %v4256 = vadd.f32 %v4224, %v3872
        %v4257 = vadd.f32 %v4225, %v3873
        %v4258 = vadd.f32 %v4226, %v3874
        %v4259 = vadd.f32 %v4227, %v3875
        %v4260 = vadd.f32 %v4228, %v3876
        %v4261 = vadd.f32 %v4229, %v3877
        %v4262 = vadd.f32 %v4230, %v3878
        %v4263 = vadd.f32 %v4231, %v3879
        %v4264 = vadd.f32 %v4232, %v3880
        %v4265 = vadd.f32 %v4233, %v3881
        %v4266 = vadd.f32 %v4234, %v3882
        %v4267 = vadd.f32 %v4235, %v3883
        %v4268 = vadd.f32 %v4236, %v3884
        %v4269 = vadd.f32 %v4237, %v3885
        %v4270 = vadd.f32 %v4238, %v3886
        %4271 = vst [vmem:[%s268] sm:$0xff] %v4239
        %4272 = vst [vmem:[%s268 + $0x8] sm:$0xff] %v4240
        %4273 = vst [vmem:[%s268 + $0x10] sm:$0xff] %v4241
        %4274 = vst [vmem:[%s268 + $0x18] sm:$0xff] %v4242
        %4275 = vst [vmem:[%s268 + $0x20] sm:$0xff] %v4243
        %4276 = vst [vmem:[%s268 + $0x28] sm:$0xff] %v4244
        %4277 = vst [vmem:[%s268 + $0x30] sm:$0xff] %v4245
        %4278 = vst [vmem:[%s268 + $0x38] sm:$0xff] %v4246
        %4279 = vst [vmem:[%s268 + $0x40] sm:$0xff] %v4247
        %4280 = vst [vmem:[%s268 + $0x48] sm:$0xff] %v4248
        %4281 = vst [vmem:[%s268 + $0x50] sm:$0xff] %v4249
        %4282 = vst [vmem:[%s268 + $0x58] sm:$0xff] %v4250
        %4283 = vst [vmem:[%s268 + $0x60] sm:$0xff] %v4251
        %4284 = vst [vmem:[%s268 + $0x68] sm:$0xff] %v4252
        %4285 = vst [vmem:[%s268 + $0x70] sm:$0xff] %v4253
        %4286 = vst [vmem:[%s268 + $0x78] sm:$0xff] %v4254
        %4287 = vst [vmem:[%s268 + $0x80] sm:$0xff] %v4255
        %4288 = vst [vmem:[%s268 + $0x88] sm:$0xff] %v4256
        %4289 = vst [vmem:[%s268 + $0x90] sm:$0xff] %v4257
        %4290 = vst [vmem:[%s268 + $0x98] sm:$0xff] %v4258
        %4291 = vst [vmem:[%s268 + $0xa0] sm:$0xff] %v4259
        %4292 = vst [vmem:[%s268 + $0xa8] sm:$0xff] %v4260
        %4293 = vst [vmem:[%s268 + $0xb0] sm:$0xff] %v4261
        %4294 = vst [vmem:[%s268 + $0xb8] sm:$0xff] %v4262
        %4295 = vst [vmem:[%s268 + $0xc0] sm:$0xff] %v4263
        %4296 = vst [vmem:[%s268 + $0xc8] sm:$0xff] %v4264
        %4297 = vst [vmem:[%s268 + $0xd0] sm:$0xff] %v4265
        %4298 = vst [vmem:[%s268 + $0xd8] sm:$0xff] %v4266
        %4299 = vst [vmem:[%s268 + $0xe0] sm:$0xff] %v4267
        %4300 = vst [vmem:[%s268 + $0xe8] sm:$0xff] %v4268
        %4301 = vst [vmem:[%s268 + $0xf0] sm:$0xff] %v4269
        %4302 = vst [vmem:[%s268 + $0xf8] sm:$0xff] %v4270
        %s4303 = sand.u32 %s139, 1
        %s4304 = scalar_lea.sflag [#allocation3], %s4303
        %s4305 = sand.u32 %s139, 1
        %s4306 = smul.addr %s4305, 512
        %s4307 = scalar_lea.vmem [#allocation2], %s4306
        %s4308 = smul.u32 32, %s21
        %p4309 = scmp.lt.s32.totalorder %s4308, 127
        %s4310 = scalar_select %p4309, %s4308, 127
        %s4311 = smul.addr %s4310, 8
        %s4312 = scalar_lea.vmem %s6, %s4311
        // Predicated region
        $region41: #{mnist_flow_forward.1} parent=39 // pred_check
          %p4313 = pneg %p149
        $region42: #{mnist_flow_forward.1} parent=39 // pred_check_branch
          %4315 = sbr.rel (%p4313) target = $region44
        $region43: #{mnist_flow_forward.1} parent=39 // pred_region
          %s4316 = smul.u32 32, %s21
          %s4318 = ssub.s32 8192, 8192
          %4319 = vsyncadd %s4304, %s4318
          %s4320 = smul.addr %s4316, 2
          %s4321 = smul.addr %s4320, 128
          %s4322 = scalar_lea.hbm %s5, %s4321
          %s4323 = sshll.u32 %s4307, 4
          %s4324 = int_to_ptr.vmem [resolvable:$true] %s4323
          %4329 = dma.vmem_to_hbm [thread:$0]  %s4324, 8192, %s4322, %s4304, 256, 256, 16
        $region44: #{mnist_flow_forward.1} parent=39 // pred_fallthru
          _
        // Predicated region
        $region45: #{mnist_flow_forward.1} parent=39 // pred_check
          %p4330 = pneg %p175
        $region46: #{mnist_flow_forward.1} parent=39 // pred_check_branch
          %4332 = sbr.rel (%p4330) target = $region48
        $region47: #{mnist_flow_forward.1} parent=39 // pred_region
          %s4333 = smul.u32 32, %s21
        $region48: #{mnist_flow_forward.1} parent=39 // pred_fallthru
          _
      $region40: #{mnist_flow_forward.1} parent=5 // pred_fallthru
        _
      %p4334 = scmp.le.s32.totalorder 2, %s16
      // Predicated region
      $region49: #{mnist_flow_forward.1} parent=5 // pred_check
        %p4335 = pneg %p4334
      $region50: #{mnist_flow_forward.1} parent=5 // pred_check_branch
        %4337 = sbr.rel (%p4335) target = $region52
      $region51: #{mnist_flow_forward.1} parent=5 // pred_region
        %s4338 = ssub.s32 %s16, 2
        // Predicated region
        $region53: #{mnist_flow_forward.1} parent=51 // pred_check
          %p4339 = pneg %p155
        $region54: #{mnist_flow_forward.1} parent=51 // pred_check_branch
          %4341 = sbr.rel (%p4339) target = $region56
        $region55: #{mnist_flow_forward.1} parent=51 // pred_region
          %s4342 = sand.u32 %s140, 1
          %s4343 = scalar_lea.sflag [#allocation3], %s4342
          %s4344 = sand.u32 %s140, 1
          %s4345 = smul.addr %s4344, 512
          %s4346 = scalar_lea.vmem [#allocation2], %s4345
          %4347 = dma.done %s4343, 8192
        $region56: #{mnist_flow_forward.1} parent=51 // pred_fallthru
          _
        // Predicated region
        $region57: #{mnist_flow_forward.1} parent=51 // pred_check
          %p4348 = pneg %p181
        $region58: #{mnist_flow_forward.1} parent=51 // pred_check_branch
          %4350 = sbr.rel (%p4348) target = $region60
        $region59: #{mnist_flow_forward.1} parent=51 // pred_region
          %s4351 = smul.u32 32, %s22
          %p4352 = scmp.lt.s32.totalorder %s4351, 127
          %s4353 = scalar_select %p4352, %s4351, 127
          %s4354 = smul.addr %s4353, 8
          %s4355 = scalar_lea.vmem %s6, %s4354
        $region60: #{mnist_flow_forward.1} parent=51 // pred_fallthru
          _
      $region52: #{mnist_flow_forward.1} parent=5 // pred_fallthru
        _
    $region6: #{mnist_flow_forward.1} parent=1 // loop_footer
      %s20 = sadd.s32 1, %s16
    $region7: #{mnist_flow_forward.1} parent=1 // loop_footer_branch
      %15 = sbr.rel target = $region3
    $region8: #{mnist_flow_forward.1} parent=1 // loop_exit
      _
    %4356 = vsyncpa [#allocation3], 1
    %s4357 = scalar_lea.sflag [#allocation3], 1
    %4358 = vsyncpa %s4357, 1

</llo_original>
